<compile_context>
chip_gen: v5e
topology: v5e:2x2
jax: 0.10.0
libtpu: 0.0.40
codegen_flags: <defaults>
</compile_context>

<pallas_src>
import functools

import jax
import jax.numpy as jnp
from jax.experimental import pallas as pl
from jax.experimental.pallas import tpu as pltpu


def _round_up(x, m):
    return (x + m - 1) // m * m


def _default_vmem_limit():
    # Generation-aware scoped-VMEM budget: ~3/4 of physical VMEM (96 MiB on v5e/v6e's 128 MiB,
    # 48 MiB on v7x's 64 MiB).  Fall back to a safe 32 MiB if the query is unavailable.
    try:
        cap = int(pltpu.get_tpu_info().vmem_capacity_bytes)
        return int(min((cap * 3) // 4, 96 * 1024 * 1024))
    except Exception:
        return 32 * 1024 * 1024


VMEM_LIMIT = _default_vmem_limit()


# ----------------------------------------------------------------------------
# Kernel 1: tiled matmul + bias (+ ReLU6)  --  used for the stem conv (im2col)
# ----------------------------------------------------------------------------
def _mm_bias_direct_kernel(x_ref, w_ref, b_ref, o_ref, *, act):
    """No K reduction: write dot + bias (+ReLU6) straight to the output tile."""
    y = jnp.dot(x_ref[...], w_ref[...], preferred_element_type=jnp.float32) + b_ref[...]
    if act == "relu6":
        y = jnp.clip(y, 0.0, 6.0)
    o_ref[...] = y.astype(o_ref.dtype)


def _mm_bias_kernel(x_ref, w_ref, b_ref, o_ref, acc_ref, *, act):
    """acc += x @ w over the K grid axis; bias/activation applied once in the finalize."""
    k = pl.program_id(2)

    @pl.when(k == 0)
    def _init():
        acc_ref[...] = jnp.zeros_like(acc_ref)

    acc_ref[...] += jnp.dot(x_ref[...], w_ref[...], preferred_element_type=jnp.float32)

    @pl.when(k == pl.num_programs(2) - 1)
    def _finalize():
        y = acc_ref[...] + b_ref[...]
        if act == "relu6":
            y = jnp.clip(y, 0.0, 6.0)
        o_ref[...] = y.astype(o_ref.dtype)


def matmul_bias(x, w, b2, act=None, out_dtype=jnp.bfloat16, tm=1024):
    """x:(M,K) bf16, w:(K,N) bf16, b2:(1,N) f32 -> (M,N) out_dtype. Tiled + pipelined."""
    M, K = x.shape
    K2, N = w.shape
    assert K == K2
    tm = min(tm, _round_up(M, 8))
    Mp = _round_up(M, tm)
    if Mp != M:
        x = jnp.pad(x, ((0, Mp - M), (0, 0)))
    tn = 128 if (N > 128 and N % 128 == 0) else N
    tk = 512 if (K > 512 and K % 512 == 0) else K
    nk = K // tk

    if nk == 1:
        out = pl.pallas_call(
            functools.partial(_mm_bias_direct_kernel, act=act),
            out_shape=jax.ShapeDtypeStruct((Mp, N), out_dtype),
            grid_spec=pltpu.PrefetchScalarGridSpec(
                num_scalar_prefetch=0,
                grid=(Mp // tm, N // tn),
                in_specs=[
                    pl.BlockSpec((tm, K), lambda i, j: (i, 0)),
                    pl.BlockSpec((K, tn), lambda i, j: (0, j)),
                    pl.BlockSpec((1, tn), lambda i, j: (0, j)),
                ],
                out_specs=pl.BlockSpec((tm, tn), lambda i, j: (i, j)),
            ),
            compiler_params=pltpu.CompilerParams(
                dimension_semantics=("parallel", "parallel"),
                vmem_limit_bytes=VMEM_LIMIT,
            ),
        )(x, w, b2)
    else:
        out = pl.pallas_call(
            functools.partial(_mm_bias_kernel, act=act),
            out_shape=jax.ShapeDtypeStruct((Mp, N), out_dtype),
            grid_spec=pltpu.PrefetchScalarGridSpec(
                num_scalar_prefetch=0,
                grid=(Mp // tm, N // tn, nk),
                in_specs=[
                    pl.BlockSpec((tm, tk), lambda i, j, k: (i, k)),
                    pl.BlockSpec((tk, tn), lambda i, j, k: (k, j)),
                    pl.BlockSpec((1, tn), lambda i, j, k: (0, j)),
                ],
                out_specs=pl.BlockSpec((tm, tn), lambda i, j, k: (i, j)),
                scratch_shapes=[pltpu.VMEM((tm, tn), jnp.float32)],
            ),
            compiler_params=pltpu.CompilerParams(
                dimension_semantics=("parallel", "parallel", "arbitrary"),
                vmem_limit_bytes=VMEM_LIMIT,
            ),
        )(x, w, b2)
    return out[:M] if Mp != M else out


def stem_conv3x3_s2(x_nhwc, stem_wm, stem_b2):
    """3x3/s2/p1 conv + folded BN + ReLU6 via im2col (glue) + tiled Pallas matmul."""
    B, H, W, cin = x_nhwc.shape
    stride, pad = 2, 1
    Ho = (H + 2 * pad - 3) // stride + 1
    Wo = (W + 2 * pad - 3) // stride + 1
    xp = jnp.pad(x_nhwc, ((0, 0), (pad, pad), (pad, pad), (0, 0)))
    cols = [xp[:, i:i + stride * Ho:stride, j:j + stride * Wo:stride, :]
            for i in range(3) for j in range(3)]
    patches = jnp.concatenate(cols, axis=-1).reshape(B * Ho * Wo, 9 * cin)
    Kp = stem_wm.shape[0]                                   # K padded to a multiple of 8 at init
    patches = jnp.pad(patches, ((0, 0), (0, Kp - 9 * cin))).astype(jnp.bfloat16)
    y = matmul_bias(patches, stem_wm, stem_b2, act="relu6", out_dtype=jnp.bfloat16)
    return y.reshape(B, Ho, Wo, -1)


# ----------------------------------------------------------------------------
# Kernel 2: fused MBConv-lite block + head 1x1 conv, row-tiled grid, bf16 scratch
# ----------------------------------------------------------------------------
def _mbconv_head_kernel(x_ref, exp_w_ref, exp_b_ref, dw_w_ref, dw_b_ref,
                        res_w_ref, dwhead_w_ref, head_b_ref,
                        o_ref, exp_ref, *, tile_rows, w_pad):
    # x_ref   : (1, H, W, c0)   bf16 -- whole image, resident across the row-tile axis
    # o_ref   : (1, TR, W, feat) bf16 -- lane-dense (feat = 128), the only HBM write
    # exp_ref : (TR+2, w_pad, cexp) bf16 scratch: expanded act for this tile + 1-row halos,
    #           with >=1 zeroed pad column on the right so pltpu.roll wraps pick up zeros.
    t = pl.program_id(1)
    n_t = pl.num_programs(1)
    H, W, c0 = x_ref.shape[1], x_ref.shape[2], x_ref.shape[3]
    cexp = exp_w_ref.shape[1]
    feat = res_w_ref.shape[1]

    r0 = pl.multiple_of(t * tile_rows, tile_rows)

    def expand(rows2d):  # (n, c0) bf16 -> (n, cexp) f32, ReLU6
        e = jnp.dot(rows2d, exp_w_ref[...], preferred_element_type=jnp.float32)
        return jnp.clip(e + exp_b_ref[...], 0.0, 6.0)

    # ---- expand 1x1 + ReLU6 for the tile's rows + 2 halo rows (halos recomputed per tile) ----
    x_main = x_ref[0, pl.ds(r0, tile_rows)]                            # (TR, W, c0) bf16
    xm2 = x_main.reshape(tile_rows * W, c0)
    e_main = expand(xm2)
    exp_ref[1:tile_rows + 1, :W, :] = (
        e_main.reshape(tile_rows, W, cexp).astype(jnp.bfloat16))

    top_row = jnp.maximum(r0 - 1, 0)
    bot_row = jnp.minimum(r0 + tile_rows, H - 1)
    top_scale = jnp.where(t > 0, 1.0, 0.0).astype(jnp.float32)         # zero-pad above image
    bot_scale = jnp.where(t < n_t - 1, 1.0, 0.0).astype(jnp.float32)   # zero-pad below image
    e_top = expand(x_ref[0, pl.ds(top_row, 1)].reshape(W, c0)) * top_scale
    e_bot = expand(x_ref[0, pl.ds(bot_row, 1)].reshape(W, c0)) * bot_scale
    exp_ref[0:1, :W, :] = e_top.reshape(1, W, cexp).astype(jnp.bfloat16)
    exp_ref[tile_rows + 1:tile_rows + 2, :W, :] = (
        e_bot.reshape(1, W, cexp).astype(jnp.bfloat16))
    # zero only the thin right-pad strip (keeps the roll wrap equal to conv zero padding)
    exp_ref[:, W:, :] = jnp.zeros((tile_rows + 2, w_pad - W, cexp), jnp.bfloat16)

    # ---- depthwise 3x3 + ReLU6: aligned full-width band loads, kw shifts via XLU rolls ----
    w9 = dw_w_ref[...]                                                 # (9, cexp) f32
    acc = jnp.zeros((tile_rows, w_pad, cexp), jnp.float32)
    for kh in range(3):
        band = exp_ref[kh:kh + tile_rows, :, :].astype(jnp.float32)    # (TR, w_pad, cexp)
        acc = acc + band * w9[kh * 3 + 1]                                          # kw=1
        acc = acc + pltpu.roll(band, shift=1, axis=1) * w9[kh * 3 + 0]             # kw=0
        acc = acc + pltpu.roll(band, shift=w_pad - 1, axis=1) * w9[kh * 3 + 2]     # kw=2
    dw = jnp.clip(acc[:, :W, :] + dw_b_ref[...].reshape(1, 1, cexp), 0.0, 6.0)
    dw = dw.reshape(tile_rows * W, cexp).astype(jnp.bfloat16)

    # ---- project 1x1 + residual + head 1x1 + ReLU6, folded at init:
    #   head((dw@proj_w + proj_b) + x) = dw@(proj_w@head_w) + x@head_w + (proj_b@head_w + head_b)
    h = jnp.dot(dw, dwhead_w_ref[...], preferred_element_type=jnp.float32)
    h = h + jnp.dot(xm2, res_w_ref[...], preferred_element_type=jnp.float32)
    h = jnp.clip(h + head_b_ref[...], 0.0, 6.0)
    o_ref[0] = h.reshape(tile_rows, W, feat).astype(o_ref.dtype)


def mbconv_head(x, params):
    B, H, W, c0 = x.shape
    cexp = params["exp_w"].shape[1]
    feat = params["head_w"].shape[1]
    tile_rows = 1
    for cand in (8, 4, 2):
        if H % cand == 0:
            tile_rows = cand
            break
    n_tiles = H // tile_rows
    w_pad = _round_up(W + 1, 8)            # >= W+1 so the roll wrap lands on a zero column
    kernel = functools.partial(_mbconv_head_kernel, tile_rows=tile_rows, w_pad=w_pad)
    return pl.pallas_call(
        kernel,
        out_shape=jax.ShapeDtypeStruct((B, H, W, feat), jnp.bfloat16),
        grid_spec=pltpu.PrefetchScalarGridSpec(
            num_scalar_prefetch=0,
            grid=(B, n_tiles),
            in_specs=[
                pl.BlockSpec((1, H, W, c0), lambda b, t: (b, 0, 0, 0)),   # resident across t
                pl.BlockSpec((c0, cexp), lambda b, t: (0, 0)),
                pl.BlockSpec((1, cexp), lambda b, t: (0, 0)),
                pl.BlockSpec((9, cexp), lambda b, t: (0, 0)),
                pl.BlockSpec((1, cexp), lambda b, t: (0, 0)),
                pl.BlockSpec((c0, feat), lambda b, t: (0, 0)),
                pl.BlockSpec((cexp, feat), lambda b, t: (0, 0)),
                pl.BlockSpec((1, feat), lambda b, t: (0, 0)),
            ],
            out_specs=pl.BlockSpec((1, tile_rows, W, feat), lambda b, t: (b, t, 0, 0)),
            scratch_shapes=[pltpu.VMEM((tile_rows + 2, w_pad, cexp), jnp.bfloat16)],
        ),
        compiler_params=pltpu.CompilerParams(
            dimension_semantics=("parallel", "parallel"),   # row tiles shard megacore at B=1
            vmem_limit_bytes=VMEM_LIMIT,
        ),
    )(x, params["exp_w"], params["exp_b2"], params["dw_w9"], params["dw_b2"],
      params["head_w"], params["dwhead_w"], params["head_b2"])


# ----------------------------------------------------------------------------
# Kernel 3: fused global-average-pool + myfc Linear(in_ch, 24)
# ----------------------------------------------------------------------------
def _gap_fc_kernel(x_ref, w_ref, b_ref, o_ref, acc_ref, *, inv_hw):
    s = pl.program_id(0)

    @pl.when(s == 0)
    def _init():
        acc_ref[...] = jnp.zeros_like(acc_ref)

    acc_ref[...] += jnp.sum(x_ref[...].astype(jnp.float32), axis=1)

    @pl.when(s == pl.num_programs(0) - 1)
    def _finalize():
        feats = acc_ref[...] * inv_hw
        o_ref[...] = (jnp.dot(feats, w_ref[...], preferred_element_type=jnp.float32)
                      + b_ref[...]).astype(o_ref.dtype)


def gap_fc(x_bhwf, fc_w, fc_b2):
    B, H, W, F = x_bhwf.shape
    HW = H * W
    x2 = x_bhwf.reshape(B, HW, F)
    ts = min(512, _round_up(HW, 8))                   # fixed-size reduction tile
    HWp = _round_up(HW, ts)
    if HWp != HW:                                     # zero rows don't change the sum
        x2 = jnp.pad(x2, ((0, 0), (0, HWp - HW), (0, 0)))
    nc = fc_w.shape[1]
    return pl.pallas_call(
        functools.partial(_gap_fc_kernel, inv_hw=1.0 / HW),
        out_shape=jax.ShapeDtypeStruct((B, nc), jnp.float32),
        grid_spec=pltpu.PrefetchScalarGridSpec(
            num_scalar_prefetch=0,
            grid=(HWp // ts,),
            in_specs=[
                pl.BlockSpec((B, ts, F), lambda s: (0, s, 0)),
                pl.BlockSpec((F, nc), lambda s: (0, 0)),
                pl.BlockSpec((1, nc), lambda s: (0, 0)),
            ],
            out_specs=pl.BlockSpec((B, nc), lambda s: (0, 0)),
            scratch_shapes=[pltpu.VMEM((B, F), jnp.float32)],
        ),
        compiler_params=pltpu.CompilerParams(
            dimension_semantics=("arbitrary",),
            vmem_limit_bytes=VMEM_LIMIT,
        ),
    )(x2, fc_w, fc_b2)


# ----------------------------------------------------------------------------
# Parameters (deterministic, BN folded into conv scale/bias, all layout prep at init)
# ----------------------------------------------------------------------------
def init_params(key, cin=3, c0=32, expand=4, feat=128, num_classes=24):
    ks = jax.random.split(key, 12)
    cexp = c0 * expand

    def s(k, shape, fan_in):
        return jax.random.normal(k, shape, jnp.float32) * (1.0 / jnp.sqrt(fan_in))

    K = 9 * cin
    Kp = _round_up(K, 8)
    stem_wm = s(ks[0], (3, 3, cin, c0), 9 * cin).reshape(K, c0)     # (kh,kw,cin) row order
    stem_wm = jnp.pad(stem_wm, ((0, Kp - K), (0, 0)))               # pad K 27 -> 32

    proj_w = s(ks[6], (cexp, c0), cexp)                             # f32 for folding
    proj_b = s(ks[7], (c0,), c0) * 0.1
    head_w = s(ks[8], (c0, feat), c0)
    head_b = s(ks[9], (feat,), feat) * 0.1
    dwhead_w = (proj_w @ head_w).astype(jnp.bfloat16)               # (cexp, feat) folded weight
    head_b_fold = (proj_b @ head_w + head_b).reshape(1, feat)       # folded bias (f32)

    return {
        "stem_wm": stem_wm.astype(jnp.bfloat16),
        "stem_b2": (s(ks[1], (c0,), c0) * 0.1).reshape(1, c0),
        "exp_w": s(ks[2], (c0, cexp), c0).astype(jnp.bfloat16),
        "exp_b2": (s(ks[3], (cexp,), cexp) * 0.1).reshape(1, cexp),
        "dw_w9": s(ks[4], (3, 3, cexp), 9).reshape(9, cexp),
        "dw_b2": (s(ks[5], (cexp,), cexp) * 0.1).reshape(1, cexp),
        "head_w": head_w.astype(jnp.bfloat16),      # residual path x @ head_w
        "dwhead_w": dwhead_w,                       # dw @ (proj_w @ head_w)
        "head_b2": head_b_fold,
        # nn.Linear(in_ch, 24): weight (24, in_ch) stored pre-transposed (in_ch, 24) at init
        "fc_w": jnp.transpose(s(ks[10], (num_classes, feat), feat)),
        "fc_b2": (s(ks[11], (num_classes,), num_classes) * 0.1).reshape(1, num_classes),
    }


# ----------------------------------------------------------------------------
# Forward (mirrors EBlite4.forward)
# ----------------------------------------------------------------------------
def eblite4_forward(x_nchw, params):
    # if len(torch.squeeze(x).shape) == 4: x = torch.squeeze(x)
    xs = jnp.squeeze(x_nchw)
    x = xs if xs.ndim == 4 else x_nchw

    # NCHW -> NHWC for the TPU kernels.
    x = jnp.transpose(x, (0, 2, 3, 1)).astype(jnp.float32)

    # --- self.model(x): EfficientNet-Lite4 feature extractor (representative) ---
    # stem: 3x3/s2 conv + BN(folded) + ReLU6  (tiled, pipelined Pallas matmul)
    x = stem_conv3x3_s2(x, params["stem_wm"], params["stem_b2"])     # (B, H/2, W/2, 32) bf16
    # MBConv-lite block (expand->dw->project+skip) fused with the head 1x1 conv + ReLU6
    x = mbconv_head(x, params)                                        # (B, H/2, W/2, 128) bf16
    # global average pool fused with self.myfc: Linear(in_ch, 24)
    out = gap_fc(x, params["fc_w"], params["fc_b2"])                  # (B, 24) f32
    return out


if __name__ == "__main__":
    key = jax.random.PRNGKey(0)
    kx, kp = jax.random.split(key)
    x = jax.random.normal(kx, (2, 3, 32, 32), jnp.float32)            # NCHW like PyTorch
    params = init_params(kp)

    out = jax.jit(eblite4_forward)(x, params)
    out = jax.block_until_ready(out)
    assert out.shape == (2, 24), out.shape
    assert out.dtype == jnp.float32
    assert bool(jnp.all(jnp.isfinite(out)))
    print("KERNEL_OK")
</pallas_src>

<mosaic_0001>
module attributes {stable_mosaic.version = 11 : i64} {
  func.func @_mbconv_head_kernel(%arg0: i32, %arg1: i32, %arg2: memref<1x16x16x32xbf16, #tpu.memory_space<vmem>>, %arg3: memref<32x128xbf16, #tpu.memory_space<vmem>>, %arg4: memref<1x128xf32, #tpu.memory_space<vmem>>, %arg5: memref<9x128xf32, #tpu.memory_space<vmem>>, %arg6: memref<1x128xf32, #tpu.memory_space<vmem>>, %arg7: memref<32x128xbf16, #tpu.memory_space<vmem>>, %arg8: memref<128x128xbf16, #tpu.memory_space<vmem>>, %arg9: memref<1x128xf32, #tpu.memory_space<vmem>>, %arg10: memref<1x8x16x128xbf16, #tpu.memory_space<vmem>>, %arg11: memref<10x24x128xbf16, #tpu.memory_space<vmem>>) attributes {dimension_semantics = [#tpu.dimension_semantics<parallel>, #tpu.dimension_semantics<parallel>], iteration_bounds = array<i64: 2, 2>, scalar_prefetch = 0 : i64, scratch_operands = 1 : i64, tpu.core_type = #tpu.core_type<tc>, window_params = [{transform_indices = @transform_0, window_bounds = array<i64: 1, 16, 16, 32>}, {pipeline_mode = #tpu.pipeline_mode<synchronous>, transform_indices = @transform_1, window_bounds = array<i64: 32, 128>}, {pipeline_mode = #tpu.pipeline_mode<synchronous>, transform_indices = @transform_2, window_bounds = array<i64: 1, 128>}, {pipeline_mode = #tpu.pipeline_mode<synchronous>, transform_indices = @transform_3, window_bounds = array<i64: 9, 128>}, {pipeline_mode = #tpu.pipeline_mode<synchronous>, transform_indices = @transform_4, window_bounds = array<i64: 1, 128>}, {pipeline_mode = #tpu.pipeline_mode<synchronous>, transform_indices = @transform_5, window_bounds = array<i64: 32, 128>}, {pipeline_mode = #tpu.pipeline_mode<synchronous>, transform_indices = @transform_6, window_bounds = array<i64: 128, 128>}, {pipeline_mode = #tpu.pipeline_mode<synchronous>, transform_indices = @transform_7, window_bounds = array<i64: 1, 128>}, {transform_indices = @transform_8, window_bounds = array<i64: 1, 8, 16, 128>}]} {
    %c8_i32 = arith.constant 8 : i32
    %0 = arith.muli %arg1, %c8_i32 : i32
    %1 = tpu.assume_multiple %0, 8 : i32
    %c0 = arith.constant 0 : index
    %2 = arith.index_cast %1 : i32 to index
    %c0_0 = arith.constant 0 : index
    %c0_1 = arith.constant 0 : index
    %3 = vector.load %arg2[%c0, %2, %c0_0, %c0_1] : memref<1x16x16x32xbf16, #tpu.memory_space<vmem>>, vector<1x8x16x32xbf16>
    %4 = vector.shape_cast %3 : vector<1x8x16x32xbf16> to vector<8x16x32xbf16>
    %5 = vector.shape_cast %4 : vector<8x16x32xbf16> to vector<128x32xbf16>
    %c0_2 = arith.constant 0 : index
    %c0_3 = arith.constant 0 : index
    %6 = vector.load %arg3[%c0_2, %c0_3] : memref<32x128xbf16, #tpu.memory_space<vmem>>, vector<32x128xbf16>
    %cst = arith.constant dense<0.000000e+00> : vector<128x128xf32>
    %7 = tpu.matmul %5, %6, %cst {dimension_numbers = #tpu.dot_dimension_numbers<[1], [0], [0], [1], [0, 0, 1, 1], [], []>} : vector<128x32xbf16>, vector<32x128xbf16>, vector<128x128xf32> -> vector<128x128xf32>
    %c0_4 = arith.constant 0 : index
    %c0_5 = arith.constant 0 : index
    %8 = vector.load %arg4[%c0_4, %c0_5] : memref<1x128xf32, #tpu.memory_space<vmem>>, vector<1x128xf32>
    %9 = vector.broadcast %8 : vector<1x128xf32> to vector<128x128xf32>
    %10 = arith.addf %7, %9 : vector<128x128xf32>
    %cst_6 = arith.constant 0.000000e+00 : f32
    %cst_7 = arith.constant 6.000000e+00 : f32
    %11 = vector.broadcast %cst_6 : f32 to vector<128x128xf32>
    %12 = arith.maximumf %11, %10 : vector<128x128xf32>
    %13 = vector.broadcast %cst_7 : f32 to vector<128x128xf32>
    %14 = arith.minimumf %13, %12 : vector<128x128xf32>
    %15 = vector.shape_cast %14 : vector<128x128xf32> to vector<8x16x128xf32>
    %16 = arith.truncf %15 : vector<8x16x128xf32> to vector<8x16x128xbf16>
    %c1 = arith.constant 1 : index
    %c0_8 = arith.constant 0 : index
    %c0_9 = arith.constant 0 : index
    %17 = vector.load %arg11[%c1, %c0_8, %c0_9] : memref<10x24x128xbf16, #tpu.memory_space<vmem>>, vector<8x16x128xbf16>
    tpu.vector_store %arg11[%c1, %c0_8, %c0_9], %16 {strides = array<i32>} : memref<10x24x128xbf16, #tpu.memory_space<vmem>>, vector<8x16x128xbf16>,
    %c1_i32 = arith.constant 1 : i32
    %18 = arith.subi %1, %c1_i32 : i32
    %c0_i32 = arith.constant 0 : i32
    %19 = arith.maxsi %18, %c0_i32 : i32
    %c8_i32_10 = arith.constant 8 : i32
    %20 = arith.addi %1, %c8_i32_10 : i32
    %c15_i32 = arith.constant 15 : i32
    %21 = arith.minsi %20, %c15_i32 : i32
    %c0_i32_11 = arith.constant 0 : i32
    %22 = arith.cmpi sgt, %arg1, %c0_i32_11 : i32
    %cst_12 = arith.constant 1.000000e+00 : f32
    %cst_13 = arith.constant 0.000000e+00 : f32
    %23 = arith.select %22, %cst_12, %cst_13 : f32
    %c1_i32_14 = arith.constant 1 : i32
    %24 = arith.cmpi slt, %arg1, %c1_i32_14 : i32
    %cst_15 = arith.constant 1.000000e+00 : f32
    %cst_16 = arith.constant 0.000000e+00 : f32
    %25 = arith.select %24, %cst_15, %cst_16 : f32
    %c0_17 = arith.constant 0 : index
    %26 = arith.index_cast %19 : i32 to index
    %c0_18 = arith.constant 0 : index
    %c0_19 = arith.constant 0 : index
    %27 = vector.load %arg2[%c0_17, %26, %c0_18, %c0_19] : memref<1x16x16x32xbf16, #tpu.memory_space<vmem>>, vector<1x1x16x32xbf16>
    %28 = vector.shape_cast %27 : vector<1x1x16x32xbf16> to vector<1x16x32xbf16>
    %29 = vector.shape_cast %28 : vector<1x16x32xbf16> to vector<16x32xbf16>
    %c0_20 = arith.constant 0 : index
    %c0_21 = arith.constant 0 : index
    %30 = vector.load %arg3[%c0_20, %c0_21] : memref<32x128xbf16, #tpu.memory_space<vmem>>, vector<32x128xbf16>
    %cst_22 = arith.constant dense<0.000000e+00> : vector<16x128xf32>
    %31 = tpu.matmul %29, %30, %cst_22 {dimension_numbers = #tpu.dot_dimension_numbers<[1], [0], [0], [1], [0, 0, 1, 1], [], []>} : vector<16x32xbf16>, vector<32x128xbf16>, vector<16x128xf32> -> vector<16x128xf32>
    %c0_23 = arith.constant 0 : index
    %c0_24 = arith.constant 0 : index
    %32 = vector.load %arg4[%c0_23, %c0_24] : memref<1x128xf32, #tpu.memory_space<vmem>>, vector<1x128xf32>
    %33 = vector.broadcast %32 : vector<1x128xf32> to vector<16x128xf32>
    %34 = arith.addf %31, %33 : vector<16x128xf32>
    %cst_25 = arith.constant 0.000000e+00 : f32
    %cst_26 = arith.constant 6.000000e+00 : f32
    %35 = vector.broadcast %cst_25 : f32 to vector<16x128xf32>
    %36 = arith.maximumf %35, %34 : vector<16x128xf32>
    %37 = vector.broadcast %cst_26 : f32 to vector<16x128xf32>
    %38 = arith.minimumf %37, %36 : vector<16x128xf32>
    %39 = vector.broadcast %23 : f32 to vector<16x128xf32>
    %40 = arith.mulf %38, %39 : vector<16x128xf32>
    %c0_27 = arith.constant 0 : index
    %41 = arith.index_cast %21 : i32 to index
    %c0_28 = arith.constant 0 : index
    %c0_29 = arith.constant 0 : index
    %42 = vector.load %arg2[%c0_27, %41, %c0_28, %c0_29] : memref<1x16x16x32xbf16, #tpu.memory_space<vmem>>, vector<1x1x16x32xbf16>
    %43 = vector.shape_cast %42 : vector<1x1x16x32xbf16> to vector<1x16x32xbf16>
    %44 = vector.shape_cast %43 : vector<1x16x32xbf16> to vector<16x32xbf16>
    %c0_30 = arith.constant 0 : index
    %c0_31 = arith.constant 0 : index
    %45 = vector.load %arg3[%c0_30, %c0_31] : memref<32x128xbf16, #tpu.memory_space<vmem>>, vector<32x128xbf16>
    %cst_32 = arith.constant dense<0.000000e+00> : vector<16x128xf32>
    %46 = tpu.matmul %44, %45, %cst_32 {dimension_numbers = #tpu.dot_dimension_numbers<[1], [0], [0], [1], [0, 0, 1, 1], [], []>} : vector<16x32xbf16>, vector<32x128xbf16>, vector<16x128xf32> -> vector<16x128xf32>
    %c0_33 = arith.constant 0 : index
    %c0_34 = arith.constant 0 : index
    %47 = vector.load %arg4[%c0_33, %c0_34] : memref<1x128xf32, #tpu.memory_space<vmem>>, vector<1x128xf32>
    %48 = vector.broadcast %47 : vector<1x128xf32> to vector<16x128xf32>
    %49 = arith.addf %46, %48 : vector<16x128xf32>
    %cst_35 = arith.constant 0.000000e+00 : f32
    %cst_36 = arith.constant 6.000000e+00 : f32
    %50 = vector.broadcast %cst_35 : f32 to vector<16x128xf32>
    %51 = arith.maximumf %50, %49 : vector<16x128xf32>
    %52 = vector.broadcast %cst_36 : f32 to vector<16x128xf32>
    %53 = arith.minimumf %52, %51 : vector<16x128xf32>
    %54 = vector.broadcast %25 : f32 to vector<16x128xf32>
    %55 = arith.mulf %53, %54 : vector<16x128xf32>
    %56 = vector.shape_cast %40 : vector<16x128xf32> to vector<1x16x128xf32>
    %57 = arith.truncf %56 : vector<1x16x128xf32> to vector<1x16x128xbf16>
    %c0_37 = arith.constant 0 : index
    %c0_38 = arith.constant 0 : index
    %c0_39 = arith.constant 0 : index
    %58 = vector.load %arg11[%c0_37, %c0_38, %c0_39] : memref<10x24x128xbf16, #tpu.memory_space<vmem>>, vector<1x16x128xbf16>
    tpu.vector_store %arg11[%c0_37, %c0_38, %c0_39], %57 {strides = array<i32>} : memref<10x24x128xbf16, #tpu.memory_space<vmem>>, vector<1x16x128xbf16>,
    %59 = vector.shape_cast %55 : vector<16x128xf32> to vector<1x16x128xf32>
    %60 = arith.truncf %59 : vector<1x16x128xf32> to vector<1x16x128xbf16>
    %c9 = arith.constant 9 : index
    %c0_40 = arith.constant 0 : index
    %c0_41 = arith.constant 0 : index
    %61 = vector.load %arg11[%c9, %c0_40, %c0_41] : memref<10x24x128xbf16, #tpu.memory_space<vmem>>, vector<1x16x128xbf16>
    tpu.vector_store %arg11[%c9, %c0_40, %c0_41], %60 {strides = array<i32>} : memref<10x24x128xbf16, #tpu.memory_space<vmem>>, vector<1x16x128xbf16>,
    %cst_42 = arith.constant 0.000000e+00 : bf16
    %62 = vector.broadcast %cst_42 : bf16 to vector<10x8x128xbf16>
    %c0_43 = arith.constant 0 : index
    %c16 = arith.constant 16 : index
    %c0_44 = arith.constant 0 : index
    %63 = vector.load %arg11[%c0_43, %c16, %c0_44] : memref<10x24x128xbf16, #tpu.memory_space<vmem>>, vector<10x8x128xbf16>
    tpu.vector_store %arg11[%c0_43, %c16, %c0_44], %62 {strides = array<i32>} : memref<10x24x128xbf16, #tpu.memory_space<vmem>>, vector<10x8x128xbf16>,
    %c0_45 = arith.constant 0 : index
    %c0_46 = arith.constant 0 : index
    %64 = vector.load %arg5[%c0_45, %c0_46] : memref<9x128xf32, #tpu.memory_space<vmem>>, vector<9x128xf32>
    %cst_47 = arith.constant 0.000000e+00 : f32
    %65 = vector.broadcast %cst_47 : f32 to vector<8x24x128xf32>
    %c0_48 = arith.constant 0 : index
    %c0_49 = arith.constant 0 : index
    %c0_50 = arith.constant 0 : index
    %66 = vector.load %arg11[%c0_48, %c0_49, %c0_50] : memref<10x24x128xbf16, #tpu.memory_space<vmem>>, vector<8x24x128xbf16>
    %67 = arith.extf %66 : vector<8x24x128xbf16> to vector<8x24x128xf32>
    %68 = vector.extract_strided_slice %64 {offsets = [1, 0], sizes = [1, 128], strides = [1, 1]} : vector<9x128xf32> to vector<1x128xf32>
    %69 = vector.shape_cast %68 : vector<1x128xf32> to vector<128xf32>
    %70 = vector.shape_cast %69 : vector<128xf32> to vector<1x1x128xf32>
    %71 = vector.broadcast %70 : vector<1x1x128xf32> to vector<8x24x128xf32>
    %72 = arith.mulf %67, %71 : vector<8x24x128xf32>
    %73 = arith.addf %65, %72 : vector<8x24x128xf32>
    %c1_i32_51 = arith.constant 1 : i32
    %74 = tpu.dynamic_rotate %67 by %c1_i32_51 dim 1 : vector<8x24x128xf32>, i32 -> vector<8x24x128xf32>
    %75 = vector.extract_strided_slice %64 {offsets = [0, 0], sizes = [1, 128], strides = [1, 1]} : vector<9x128xf32> to vector<1x128xf32>
    %76 = vector.shape_cast %75 : vector<1x128xf32> to vector<128xf32>
    %77 = vector.shape_cast %76 : vector<128xf32> to vector<1x1x128xf32>
    %78 = vector.broadcast %77 : vector<1x1x128xf32> to vector<8x24x128xf32>
    %79 = arith.mulf %74, %78 : vector<8x24x128xf32>
    %80 = arith.addf %73, %79 : vector<8x24x128xf32>
    %c23_i32 = arith.constant 23 : i32
    %81 = tpu.dynamic_rotate %67 by %c23_i32 dim 1 : vector<8x24x128xf32>, i32 -> vector<8x24x128xf32>
    %82 = vector.extract_strided_slice %64 {offsets = [2, 0], sizes = [1, 128], strides = [1, 1]} : vector<9x128xf32> to vector<1x128xf32>
    %83 = vector.shape_cast %82 : vector<1x128xf32> to vector<128xf32>
    %84 = vector.shape_cast %83 : vector<128xf32> to vector<1x1x128xf32>
    %85 = vector.broadcast %84 : vector<1x1x128xf32> to vector<8x24x128xf32>
    %86 = arith.mulf %81, %85 : vector<8x24x128xf32>
    %87 = arith.addf %80, %86 : vector<8x24x128xf32>
    %c1_52 = arith.constant 1 : index
    %c0_53 = arith.constant 0 : index
    %c0_54 = arith.constant 0 : index
    %88 = vector.load %arg11[%c1_52, %c0_53, %c0_54] : memref<10x24x128xbf16, #tpu.memory_space<vmem>>, vector<8x24x128xbf16>
    %89 = arith.extf %88 : vector<8x24x128xbf16> to vector<8x24x128xf32>
    %90 = vector.extract_strided_slice %64 {offsets = [4, 0], sizes = [1, 128], strides = [1, 1]} : vector<9x128xf32> to vector<1x128xf32>
    %91 = vector.shape_cast %90 : vector<1x128xf32> to vector<128xf32>
    %92 = vector.shape_cast %91 : vector<128xf32> to vector<1x1x128xf32>
    %93 = vector.broadcast %92 : vector<1x1x128xf32> to vector<8x24x128xf32>
    %94 = arith.mulf %89, %93 : vector<8x24x128xf32>
    %95 = arith.addf %87, %94 : vector<8x24x128xf32>
    %c1_i32_55 = arith.constant 1 : i32
    %96 = tpu.dynamic_rotate %89 by %c1_i32_55 dim 1 : vector<8x24x128xf32>, i32 -> vector<8x24x128xf32>
    %97 = vector.extract_strided_slice %64 {offsets = [3, 0], sizes = [1, 128], strides = [1, 1]} : vector<9x128xf32> to vector<1x128xf32>
    %98 = vector.shape_cast %97 : vector<1x128xf32> to vector<128xf32>
    %99 = vector.shape_cast %98 : vector<128xf32> to vector<1x1x128xf32>
    %100 = vector.broadcast %99 : vector<1x1x128xf32> to vector<8x24x128xf32>
    %101 = arith.mulf %96, %100 : vector<8x24x128xf32>
    %102 = arith.addf %95, %101 : vector<8x24x128xf32>
    %c23_i32_56 = arith.constant 23 : i32
    %103 = tpu.dynamic_rotate %89 by %c23_i32_56 dim 1 : vector<8x24x128xf32>, i32 -> vector<8x24x128xf32>
    %104 = vector.extract_strided_slice %64 {offsets = [5, 0], sizes = [1, 128], strides = [1, 1]} : vector<9x128xf32> to vector<1x128xf32>
    %105 = vector.shape_cast %104 : vector<1x128xf32> to vector<128xf32>
    %106 = vector.shape_cast %105 : vector<128xf32> to vector<1x1x128xf32>
    %107 = vector.broadcast %106 : vector<1x1x128xf32> to vector<8x24x128xf32>
    %108 = arith.mulf %103, %107 : vector<8x24x128xf32>
    %109 = arith.addf %102, %108 : vector<8x24x128xf32>
    %c2 = arith.constant 2 : index
    %c0_57 = arith.constant 0 : index
    %c0_58 = arith.constant 0 : index
    %110 = vector.load %arg11[%c2, %c0_57, %c0_58] : memref<10x24x128xbf16, #tpu.memory_space<vmem>>, vector<8x24x128xbf16>
    %111 = arith.extf %110 : vector<8x24x128xbf16> to vector<8x24x128xf32>
    %112 = vector.extract_strided_slice %64 {offsets = [7, 0], sizes = [1, 128], strides = [1, 1]} : vector<9x128xf32> to vector<1x128xf32>
    %113 = vector.shape_cast %112 : vector<1x128xf32> to vector<128xf32>
    %114 = vector.shape_cast %113 : vector<128xf32> to vector<1x1x128xf32>
    %115 = vector.broadcast %114 : vector<1x1x128xf32> to vector<8x24x128xf32>
    %116 = arith.mulf %111, %115 : vector<8x24x128xf32>
    %117 = arith.addf %109, %116 : vector<8x24x128xf32>
    %c1_i32_59 = arith.constant 1 : i32
    %118 = tpu.dynamic_rotate %111 by %c1_i32_59 dim 1 : vector<8x24x128xf32>, i32 -> vector<8x24x128xf32>
    %119 = vector.extract_strided_slice %64 {offsets = [6, 0], sizes = [1, 128], strides = [1, 1]} : vector<9x128xf32> to vector<1x128xf32>
    %120 = vector.shape_cast %119 : vector<1x128xf32> to vector<128xf32>
    %121 = vector.shape_cast %120 : vector<128xf32> to vector<1x1x128xf32>
    %122 = vector.broadcast %121 : vector<1x1x128xf32> to vector<8x24x128xf32>
    %123 = arith.mulf %118, %122 : vector<8x24x128xf32>
    %124 = arith.addf %117, %123 : vector<8x24x128xf32>
    %c23_i32_60 = arith.constant 23 : i32
    %125 = tpu.dynamic_rotate %111 by %c23_i32_60 dim 1 : vector<8x24x128xf32>, i32 -> vector<8x24x128xf32>
    %126 = vector.extract_strided_slice %64 {offsets = [8, 0], sizes = [1, 128], strides = [1, 1]} : vector<9x128xf32> to vector<1x128xf32>
    %127 = vector.shape_cast %126 : vector<1x128xf32> to vector<128xf32>
    %128 = vector.shape_cast %127 : vector<128xf32> to vector<1x1x128xf32>
    %129 = vector.broadcast %128 : vector<1x1x128xf32> to vector<8x24x128xf32>
    %130 = arith.mulf %125, %129 : vector<8x24x128xf32>
    %131 = arith.addf %124, %130 : vector<8x24x128xf32>
    %132 = vector.extract_strided_slice %131 {offsets = [0, 0, 0], sizes = [8, 16, 128], strides = [1, 1, 1]} : vector<8x24x128xf32> to vector<8x16x128xf32>
    %c0_61 = arith.constant 0 : index
    %c0_62 = arith.constant 0 : index
    %133 = vector.load %arg6[%c0_61, %c0_62] : memref<1x128xf32, #tpu.memory_space<vmem>>, vector<1x128xf32>
    %134 = vector.shape_cast %133 : vector<1x128xf32> to vector<1x1x128xf32>
    %135 = vector.broadcast %134 : vector<1x1x128xf32> to vector<8x16x128xf32>
    %136 = arith.addf %132, %135 : vector<8x16x128xf32>
    %cst_63 = arith.constant 0.000000e+00 : f32
    %cst_64 = arith.constant 6.000000e+00 : f32
    %137 = vector.broadcast %cst_63 : f32 to vector<8x16x128xf32>
    %138 = arith.maximumf %137, %136 : vector<8x16x128xf32>
    %139 = vector.broadcast %cst_64 : f32 to vector<8x16x128xf32>
    %140 = arith.minimumf %139, %138 : vector<8x16x128xf32>
    %141 = vector.shape_cast %140 : vector<8x16x128xf32> to vector<128x128xf32>
    %142 = arith.truncf %141 : vector<128x128xf32> to vector<128x128xbf16>
    %c0_65 = arith.constant 0 : index
    %c0_66 = arith.constant 0 : index
    %143 = vector.load %arg8[%c0_65, %c0_66] : memref<128x128xbf16, #tpu.memory_space<vmem>>, vector<128x128xbf16>
    %cst_67 = arith.constant dense<0.000000e+00> : vector<128x128xf32>
    %144 = tpu.matmul %142, %143, %cst_67 {dimension_numbers = #tpu.dot_dimension_numbers<[1], [0], [0], [1], [0, 0, 1, 1], [], []>} : vector<128x128xbf16>, vector<128x128xbf16>, vector<128x128xf32> -> vector<128x128xf32>
    %c0_68 = arith.constant 0 : index
    %c0_69 = arith.constant 0 : index
    %145 = vector.load %arg7[%c0_68, %c0_69] : memref<32x128xbf16, #tpu.memory_space<vmem>>, vector<32x128xbf16>
    %cst_70 = arith.constant dense<0.000000e+00> : vector<128x128xf32>
    %146 = tpu.matmul %5, %145, %cst_70 {dimension_numbers = #tpu.dot_dimension_numbers<[1], [0], [0], [1], [0, 0, 1, 1], [], []>} : vector<128x32xbf16>, vector<32x128xbf16>, vector<128x128xf32> -> vector<128x128xf32>
    %147 = arith.addf %144, %146 : vector<128x128xf32>
    %c0_71 = arith.constant 0 : index
    %c0_72 = arith.constant 0 : index
    %148 = vector.load %arg9[%c0_71, %c0_72] : memref<1x128xf32, #tpu.memory_space<vmem>>, vector<1x128xf32>
    %149 = vector.broadcast %148 : vector<1x128xf32> to vector<128x128xf32>
    %150 = arith.addf %147, %149 : vector<128x128xf32>
    %cst_73 = arith.constant 0.000000e+00 : f32
    %cst_74 = arith.constant 6.000000e+00 : f32
    %151 = vector.broadcast %cst_73 : f32 to vector<128x128xf32>
    %152 = arith.maximumf %151, %150 : vector<128x128xf32>
    %153 = vector.broadcast %cst_74 : f32 to vector<128x128xf32>
    %154 = arith.minimumf %153, %152 : vector<128x128xf32>
    %155 = vector.shape_cast %154 : vector<128x128xf32> to vector<8x16x128xf32>
    %156 = arith.truncf %155 : vector<8x16x128xf32> to vector<8x16x128xbf16>
    %c0_75 = arith.constant 0 : index
    %c0_76 = arith.constant 0 : index
    %c0_77 = arith.constant 0 : index
    %c0_78 = arith.constant 0 : index
    %157 = vector.load %arg10[%c0_75, %c0_76, %c0_77, %c0_78] : memref<1x8x16x128xbf16, #tpu.memory_space<vmem>>, vector<1x8x16x128xbf16>
    %158 = vector.shape_cast %157 : vector<1x8x16x128xbf16> to vector<8x16x128xbf16>
    %159 = vector.shape_cast %156 : vector<8x16x128xbf16> to vector<1x8x16x128xbf16>
    tpu.vector_store %arg10[%c0_75, %c0_76, %c0_77, %c0_78], %159 {strides = array<i32>} : memref<1x8x16x128xbf16, #tpu.memory_space<vmem>>, vector<1x8x16x128xbf16>,
    return
  }
  func.func @transform_0(%arg0: i32, %arg1: i32) -> (i32, i32, i32, i32) {
    %c0_i32 = arith.constant 0 : i32
    %c0_i32_0 = arith.constant 0 : i32
    %c0_i32_1 = arith.constant 0 : i32
    %c0_i32_2 = arith.constant 0 : i32
    return %arg0, %c0_i32, %c0_i32_0, %c0_i32_1 : i32, i32, i32, i32
  }
  func.func @transform_1(%arg0: i32, %arg1: i32) -> (i32, i32) {
    %c0_i32 = arith.constant 0 : i32
    %c0_i32_0 = arith.constant 0 : i32
    %c0_i32_1 = arith.constant 0 : i32
    return %c0_i32, %c0_i32_0 : i32, i32
  }
  func.func @transform_2(%arg0: i32, %arg1: i32) -> (i32, i32) {
    %c0_i32 = arith.constant 0 : i32
    %c0_i32_0 = arith.constant 0 : i32
    %c0_i32_1 = arith.constant 0 : i32
    return %c0_i32, %c0_i32_0 : i32, i32
  }
  func.func @transform_3(%arg0: i32, %arg1: i32) -> (i32, i32) {
    %c0_i32 = arith.constant 0 : i32
    %c0_i32_0 = arith.constant 0 : i32
    %c0_i32_1 = arith.constant 0 : i32
    return %c0_i32, %c0_i32_0 : i32, i32
  }
  func.func @transform_4(%arg0: i32, %arg1: i32) -> (i32, i32) {
    %c0_i32 = arith.constant 0 : i32
    %c0_i32_0 = arith.constant 0 : i32
    %c0_i32_1 = arith.constant 0 : i32
    return %c0_i32, %c0_i32_0 : i32, i32
  }
  func.func @transform_5(%arg0: i32, %arg1: i32) -> (i32, i32) {
    %c0_i32 = arith.constant 0 : i32
    %c0_i32_0 = arith.constant 0 : i32
    %c0_i32_1 = arith.constant 0 : i32
    return %c0_i32, %c0_i32_0 : i32, i32
  }
  func.func @transform_6(%arg0: i32, %arg1: i32) -> (i32, i32) {
    %c0_i32 = arith.constant 0 : i32
    %c0_i32_0 = arith.constant 0 : i32
    %c0_i32_1 = arith.constant 0 : i32
    return %c0_i32, %c0_i32_0 : i32, i32
  }
  func.func @transform_7(%arg0: i32, %arg1: i32) -> (i32, i32) {
    %c0_i32 = arith.constant 0 : i32
    %c0_i32_0 = arith.constant 0 : i32
    %c0_i32_1 = arith.constant 0 : i32
    return %c0_i32, %c0_i32_0 : i32, i32
  }
  func.func @transform_8(%arg0: i32, %arg1: i32) -> (i32, i32, i32, i32) {
    %c0_i32 = arith.constant 0 : i32
    %c0_i32_0 = arith.constant 0 : i32
    %c0_i32_1 = arith.constant 0 : i32
    return %arg0, %arg1, %c0_i32, %c0_i32_0 : i32, i32, i32, i32
  }
}

module attributes {stable_mosaic.version = 11 : i64} {
  func.func @_gap_fc_kernel(%arg0: i32, %arg1: memref<2x256x128xbf16, #tpu.memory_space<vmem>>, %arg2: memref<128x24xf32, #tpu.memory_space<vmem>>, %arg3: memref<1x24xf32, #tpu.memory_space<vmem>>, %arg4: memref<2x24xf32, #tpu.memory_space<vmem>>, %arg5: memref<2x128xf32, #tpu.memory_space<vmem>>) attributes {dimension_semantics = [#tpu.dimension_semantics<arbitrary>], iteration_bounds = array<i64: 1>, scalar_prefetch = 0 : i64, scratch_operands = 1 : i64, tpu.core_type = #tpu.core_type<tc>, window_params = [{transform_indices = @transform_0, window_bounds = array<i64: 2, 256, 128>}, {pipeline_mode = #tpu.pipeline_mode<synchronous>, transform_indices = @transform_1, window_bounds = array<i64: 128, 24>}, {pipeline_mode = #tpu.pipeline_mode<synchronous>, transform_indices = @transform_2, window_bounds = array<i64: 1, 24>}, {pipeline_mode = #tpu.pipeline_mode<synchronous>, transform_indices = @transform_3, window_bounds = array<i64: 2, 24>}]} {
    %c0_i32 = arith.constant 0 : i32
    %0 = arith.cmpi eq, %arg0, %c0_i32 : i32
    %1 = arith.extui %0 : i1 to i32
    %c0_i32_0 = arith.constant 0 : i32
    %2 = arith.cmpi ne, %1, %c0_i32_0 : i32
    scf.if %2 {
      %cst_9 = arith.constant 0.000000e+00 : f32
      %12 = vector.broadcast %cst_9 : f32 to vector<2x128xf32>
      %c0_10 = arith.constant 0 : index
      %c0_11 = arith.constant 0 : index
      %13 = vector.load %arg5[%c0_10, %c0_11] : memref<2x128xf32, #tpu.memory_space<vmem>>, vector<2x128xf32>
      tpu.vector_store %arg5[%c0_10, %c0_11], %12 {strides = array<i32>} : memref<2x128xf32, #tpu.memory_space<vmem>>, vector<2x128xf32>,
    } else {
    }
    %c0 = arith.constant 0 : index
    %c0_1 = arith.constant 0 : index
    %3 = vector.load %arg5[%c0, %c0_1] : memref<2x128xf32, #tpu.memory_space<vmem>>, vector<2x128xf32>
    %c0_2 = arith.constant 0 : index
    %c0_3 = arith.constant 0 : index
    %c0_4 = arith.constant 0 : index
    %4 = vector.load %arg1[%c0_2, %c0_3, %c0_4] : memref<2x256x128xbf16, #tpu.memory_space<vmem>>, vector<2x256x128xbf16>
    %5 = arith.extf %4 : vector<2x256x128xbf16> to vector<2x256x128xf32>
    %cst = arith.constant dense<0.000000e+00> : vector<2x128xf32>
    %6 = vector.multi_reduction <add>, %5, %cst [1] : vector<2x256x128xf32> to vector<2x128xf32>
    %7 = arith.addf %3, %6 : vector<2x128xf32>
    %c0_5 = arith.constant 0 : index
    %c0_6 = arith.constant 0 : index
    %8 = vector.load %arg5[%c0_5, %c0_6] : memref<2x128xf32, #tpu.memory_space<vmem>>, vector<2x128xf32>
    tpu.vector_store %arg5[%c0_5, %c0_6], %7 {strides = array<i32>} : memref<2x128xf32, #tpu.memory_space<vmem>>, vector<2x128xf32>,
    %c0_i32_7 = arith.constant 0 : i32
    %9 = arith.cmpi eq, %arg0, %c0_i32_7 : i32
    %10 = arith.extui %9 : i1 to i32
    %c0_i32_8 = arith.constant 0 : i32
    %11 = arith.cmpi ne, %10, %c0_i32_8 : i32
    scf.if %11 {
      %c0_9 = arith.constant 0 : index
      %c0_10 = arith.constant 0 : index
      %12 = vector.load %arg5[%c0_9, %c0_10] : memref<2x128xf32, #tpu.memory_space<vmem>>, vector<2x128xf32>
      %cst_11 = arith.constant 3.906250e-03 : f32
      %13 = vector.broadcast %cst_11 : f32 to vector<2x128xf32>
      %14 = arith.mulf %12, %13 : vector<2x128xf32>
      %c0_12 = arith.constant 0 : index
      %c0_13 = arith.constant 0 : index
      %15 = vector.load %arg2[%c0_12, %c0_13] : memref<128x24xf32, #tpu.memory_space<vmem>>, vector<128x24xf32>
      %cst_14 = arith.constant dense<0.000000e+00> : vector<2x24xf32>
      %16 = tpu.matmul %14, %15, %cst_14 {dimension_numbers = #tpu.dot_dimension_numbers<[1], [0], [0], [1], [0, 0, 1, 1], [], []>} : vector<2x128xf32>, vector<128x24xf32>, vector<2x24xf32> -> vector<2x24xf32>
      %c0_15 = arith.constant 0 : index
      %c0_16 = arith.constant 0 : index
      %17 = vector.load %arg3[%c0_15, %c0_16] : memref<1x24xf32, #tpu.memory_space<vmem>>, vector<1x24xf32>
      %18 = vector.broadcast %17 : vector<1x24xf32> to vector<2x24xf32>
      %19 = arith.addf %16, %18 : vector<2x24xf32>
      %c0_17 = arith.constant 0 : index
      %c0_18 = arith.constant 0 : index
      %20 = vector.load %arg4[%c0_17, %c0_18] : memref<2x24xf32, #tpu.memory_space<vmem>>, vector<2x24xf32>
      tpu.vector_store %arg4[%c0_17, %c0_18], %19 {strides = array<i32>} : memref<2x24xf32, #tpu.memory_space<vmem>>, vector<2x24xf32>,
    } else {
    }
    return
  }
  func.func @transform_0(%arg0: i32) -> (i32, i32, i32) {
    %c0_i32 = arith.constant 0 : i32
    %c0_i32_0 = arith.constant 0 : i32
    %c0_i32_1 = arith.constant 0 : i32
    return %c0_i32, %arg0, %c0_i32_0 : i32, i32, i32
  }
  func.func @transform_1(%arg0: i32) -> (i32, i32) {
    %c0_i32 = arith.constant 0 : i32
    %c0_i32_0 = arith.constant 0 : i32
    %c0_i32_1 = arith.constant 0 : i32
    return %c0_i32, %c0_i32_0 : i32, i32
  }
  func.func @transform_2(%arg0: i32) -> (i32, i32) {
    %c0_i32 = arith.constant 0 : i32
    %c0_i32_0 = arith.constant 0 : i32
    %c0_i32_1 = arith.constant 0 : i32
    return %c0_i32, %c0_i32_0 : i32, i32
  }
  func.func @transform_3(%arg0: i32) -> (i32, i32) {
    %c0_i32 = arith.constant 0 : i32
    %c0_i32_0 = arith.constant 0 : i32
    %c0_i32_1 = arith.constant 0 : i32
    return %c0_i32, %c0_i32_0 : i32, i32
  }
}

module attributes {stable_mosaic.version = 11 : i64} {
  func.func @_mm_bias_direct_kernel(%arg0: i32, %arg1: i32, %arg2: memref<512x32xbf16, #tpu.memory_space<vmem>>, %arg3: memref<32x32xbf16, #tpu.memory_space<vmem>>, %arg4: memref<1x32xf32, #tpu.memory_space<vmem>>, %arg5: memref<512x32xbf16, #tpu.memory_space<vmem>>) attributes {dimension_semantics = [#tpu.dimension_semantics<parallel>, #tpu.dimension_semantics<parallel>], iteration_bounds = array<i64: 1, 1>, scalar_prefetch = 0 : i64, scratch_operands = 0 : i64, tpu.core_type = #tpu.core_type<tc>, window_params = [{transform_indices = @transform_0, window_bounds = array<i64: 512, 32>}, {transform_indices = @transform_1, window_bounds = array<i64: 32, 32>}, {transform_indices = @transform_2, window_bounds = array<i64: 1, 32>}, {transform_indices = @transform_3, window_bounds = array<i64: 512, 32>}]} {
    %c0 = arith.constant 0 : index
    %c0_0 = arith.constant 0 : index
    %0 = vector.load %arg2[%c0, %c0_0] : memref<512x32xbf16, #tpu.memory_space<vmem>>, vector<512x32xbf16>
    %c0_1 = arith.constant 0 : index
    %c0_2 = arith.constant 0 : index
    %1 = vector.load %arg3[%c0_1, %c0_2] : memref<32x32xbf16, #tpu.memory_space<vmem>>, vector<32x32xbf16>
    %cst = arith.constant dense<0.000000e+00> : vector<512x32xf32>
    %2 = tpu.matmul %0, %1, %cst {dimension_numbers = #tpu.dot_dimension_numbers<[1], [0], [0], [1], [0, 0, 1, 1], [], []>} : vector<512x32xbf16>, vector<32x32xbf16>, vector<512x32xf32> -> vector<512x32xf32>
    %c0_3 = arith.constant 0 : index
    %c0_4 = arith.constant 0 : index
    %3 = vector.load %arg4[%c0_3, %c0_4] : memref<1x32xf32, #tpu.memory_space<vmem>>, vector<1x32xf32>
    %4 = vector.broadcast %3 : vector<1x32xf32> to vector<512x32xf32>
    %5 = arith.addf %2, %4 : vector<512x32xf32>
    %cst_5 = arith.constant 0.000000e+00 : f32
    %cst_6 = arith.constant 6.000000e+00 : f32
    %6 = vector.broadcast %cst_5 : f32 to vector<512x32xf32>
    %7 = arith.maximumf %6, %5 : vector<512x32xf32>
    %8 = vector.broadcast %cst_6 : f32 to vector<512x32xf32>
    %9 = arith.minimumf %8, %7 : vector<512x32xf32>
    %10 = arith.truncf %9 : vector<512x32xf32> to vector<512x32xbf16>
    %c0_7 = arith.constant 0 : index
    %c0_8 = arith.constant 0 : index
    %11 = vector.load %arg5[%c0_7, %c0_8] : memref<512x32xbf16, #tpu.memory_space<vmem>>, vector<512x32xbf16>
    tpu.vector_store %arg5[%c0_7, %c0_8], %10 {strides = array<i32>} : memref<512x32xbf16, #tpu.memory_space<vmem>>, vector<512x32xbf16>,
    return
  }
  func.func @transform_0(%arg0: i32, %arg1: i32) -> (i32, i32) {
    %c0_i32 = arith.constant 0 : i32
    %c0_i32_0 = arith.constant 0 : i32
    return %arg0, %c0_i32 : i32, i32
  }
  func.func @transform_1(%arg0: i32, %arg1: i32) -> (i32, i32) {
    %c0_i32 = arith.constant 0 : i32
    %c0_i32_0 = arith.constant 0 : i32
    return %c0_i32, %arg1 : i32, i32
  }
  func.func @transform_2(%arg0: i32, %arg1: i32) -> (i32, i32) {
    %c0_i32 = arith.constant 0 : i32
    %c0_i32_0 = arith.constant 0 : i32
    return %c0_i32, %arg1 : i32, i32
  }
  func.func @transform_3(%arg0: i32, %arg1: i32) -> (i32, i32) {
    %c0_i32 = arith.constant 0 : i32
    return %arg0, %arg1 : i32, i32
  }
}

</mosaic_0001>

<llo_original>
// kernel: eblite4_forward.5
$region0: #{eblite4_forward.5}
  #allocation0 [shape = 'u32[]', space=smem, size = 0x4, offset = 0x4, fixed_abs, tag = 'smem constant byte address 0x4 - core index']
  #allocation1 [shape = 'u32[72,128]{1,0:T(1,128)}', space=vmem, size = 0x9000, scoped, tag = 'internal scratch']
  #allocation2 [shape = 'f32[2,128]{1,0:T(2,128)}', space=vmem, size = 0x400, scoped, tag = 'scratch operand']
  %s0 = inlined_call_operand.vmem [shape: bf16[2,256,128], index: 0, kind: input, shape index: {}]
  %s1 = inlined_call_operand.vmem [shape: f32[128,24], index: 1, kind: input, shape index: {}]
  %s2 = inlined_call_operand.vmem [shape: f32[1,24], index: 2, kind: input, shape index: {}]
  %s3 = inlined_call_operand.hbm [shape: f32[2,24], index: 3, kind: output, shape index: {}]
  %s4 = sld [smem:[#allocation0]]
  $region30: #{eblite4_forward.5} parent=0
    _
  %s6 = ssub.s32 1, %s4
  %s7 = scalar_select 0, %s6, %s4
  $region1: #{eblite4_forward.5} parent=0
    #allocation3 [shape = 'u8[1024]{0}', space=vmem, size = 0x400, scoped, tag = 'output window, operand 0, single buffered']
    #allocation4 [shape = 's32[1]{0}', space=sflag, size = 0x4, scoped, tag = 'scoped memory for eblite4_forward.5']
    %8 = vsyncpa [#allocation4], 0
    // Predicated region
    $region2: #{eblite4_forward.5} parent=1 // pred_check
      _
    $region3: #{eblite4_forward.5} parent=1 // pred_check_branch
      %10 = sbr.rel (0) target = $region5
    $region4: #{eblite4_forward.5} parent=1 // pred_region
      _
    $region5: #{eblite4_forward.5} parent=1 // pred_fallthru
      _
    // Predicated region
    $region6: #{eblite4_forward.5} parent=1 // pred_check
      _
    $region7: #{eblite4_forward.5} parent=1 // pred_check_branch
      %12 = sbr.rel (0) target = $region9
    $region8: #{eblite4_forward.5} parent=1 // pred_region
      _
    $region9: #{eblite4_forward.5} parent=1 // pred_fallthru
      _
    // Predicated region
    $region10: #{eblite4_forward.5} parent=1 // pred_check
      _
    $region11: #{eblite4_forward.5} parent=1 // pred_check_branch
      %14 = sbr.rel (0) target = $region13
    $region12: #{eblite4_forward.5} parent=1 // pred_region
      _
    $region13: #{eblite4_forward.5} parent=1 // pred_fallthru
      _
    %p15 = scmp.eq.s32.totalorder 0, 0
    // Predicated region
    $region14: #{eblite4_forward.5} parent=1 // pred_check
      %p16 = pneg %p15
    $region15: #{eblite4_forward.5} parent=1 // pred_check_branch
      %18 = sbr.rel (%p16) target = $region17
    $region16: #{eblite4_forward.5} parent=1 // pred_region
      %19 = vst [vmem:[#allocation2] sm:$0x3] 0.0
    $region17: #{eblite4_forward.5} parent=1 // pred_fallthru
      _
    %v20 = vld [vmem:[#allocation2] sm:$0x3]
    %v21 = vld [vmem:[%s0] sm:$0xf]
    %v22 = vld [vmem:[%s0 + $0x4] sm:$0xf]
    %v23 = vld [vmem:[%s0 + $0x8] sm:$0xf]
    %v24 = vld [vmem:[%s0 + $0xc] sm:$0xf]
    %v25 = vld [vmem:[%s0 + $0x10] sm:$0xf]
    %v26 = vld [vmem:[%s0 + $0x14] sm:$0xf]
    %v27 = vld [vmem:[%s0 + $0x18] sm:$0xf]
    %v28 = vld [vmem:[%s0 + $0x1c] sm:$0xf]
    %v29 = vld [vmem:[%s0 + $0x20] sm:$0xf]
    %v30 = vld [vmem:[%s0 + $0x24] sm:$0xf]
    %v31 = vld [vmem:[%s0 + $0x28] sm:$0xf]
    %v32 = vld [vmem:[%s0 + $0x2c] sm:$0xf]
    %v33 = vld [vmem:[%s0 + $0x30] sm:$0xf]
    %v34 = vld [vmem:[%s0 + $0x34] sm:$0xf]
    %v35 = vld [vmem:[%s0 + $0x38] sm:$0xf]
    %v36 = vld [vmem:[%s0 + $0x3c] sm:$0xf]
    %v37 = vld [vmem:[%s0 + $0x40] sm:$0xf]
    %v38 = vld [vmem:[%s0 + $0x44] sm:$0xf]
    %v39 = vld [vmem:[%s0 + $0x48] sm:$0xf]
    %v40 = vld [vmem:[%s0 + $0x4c] sm:$0xf]
    %v41 = vld [vmem:[%s0 + $0x50] sm:$0xf]
    %v42 = vld [vmem:[%s0 + $0x54] sm:$0xf]
    %v43 = vld [vmem:[%s0 + $0x58] sm:$0xf]
    %v44 = vld [vmem:[%s0 + $0x5c] sm:$0xf]
    %v45 = vld [vmem:[%s0 + $0x60] sm:$0xf]
    %v46 = vld [vmem:[%s0 + $0x64] sm:$0xf]
    %v47 = vld [vmem:[%s0 + $0x68] sm:$0xf]
    %v48 = vld [vmem:[%s0 + $0x6c] sm:$0xf]
    %v49 = vld [vmem:[%s0 + $0x70] sm:$0xf]
    %v50 = vld [vmem:[%s0 + $0x74] sm:$0xf]
    %v51 = vld [vmem:[%s0 + $0x78] sm:$0xf]
    %v52 = vld [vmem:[%s0 + $0x7c] sm:$0xf]
    %v53 = vld [vmem:[%s0 + $0x80] sm:$0xf]
    %v54 = vld [vmem:[%s0 + $0x84] sm:$0xf]
    %v55 = vld [vmem:[%s0 + $0x88] sm:$0xf]
    %v56 = vld [vmem:[%s0 + $0x8c] sm:$0xf]
    %v57 = vld [vmem:[%s0 + $0x90] sm:$0xf]
    %v58 = vld [vmem:[%s0 + $0x94] sm:$0xf]
    %v59 = vld [vmem:[%s0 + $0x98] sm:$0xf]
    %v60 = vld [vmem:[%s0 + $0x9c] sm:$0xf]
    %v61 = vld [vmem:[%s0 + $0xa0] sm:$0xf]
    %v62 = vld [vmem:[%s0 + $0xa4] sm:$0xf]
    %v63 = vld [vmem:[%s0 + $0xa8] sm:$0xf]
    %v64 = vld [vmem:[%s0 + $0xac] sm:$0xf]
    %v65 = vld [vmem:[%s0 + $0xb0] sm:$0xf]
    %v66 = vld [vmem:[%s0 + $0xb4] sm:$0xf]
    %v67 = vld [vmem:[%s0 + $0xb8] sm:$0xf]
    %v68 = vld [vmem:[%s0 + $0xbc] sm:$0xf]
    %v69 = vld [vmem:[%s0 + $0xc0] sm:$0xf]
    %v70 = vld [vmem:[%s0 + $0xc4] sm:$0xf]
    %v71 = vld [vmem:[%s0 + $0xc8] sm:$0xf]
    %v72 = vld [vmem:[%s0 + $0xcc] sm:$0xf]
    %v73 = vld [vmem:[%s0 + $0xd0] sm:$0xf]
    %v74 = vld [vmem:[%s0 + $0xd4] sm:$0xf]
    %v75 = vld [vmem:[%s0 + $0xd8] sm:$0xf]
    %v76 = vld [vmem:[%s0 + $0xdc] sm:$0xf]
    %v77 = vld [vmem:[%s0 + $0xe0] sm:$0xf]
    %v78 = vld [vmem:[%s0 + $0xe4] sm:$0xf]
    %v79 = vld [vmem:[%s0 + $0xe8] sm:$0xf]
    %v80 = vld [vmem:[%s0 + $0xec] sm:$0xf]
    %v81 = vld [vmem:[%s0 + $0xf0] sm:$0xf]
    %v82 = vld [vmem:[%s0 + $0xf4] sm:$0xf]
    %v83 = vld [vmem:[%s0 + $0xf8] sm:$0xf]
    %v84 = vld [vmem:[%s0 + $0xfc] sm:$0xf]
    %v85 = vunpack.c.l.bf16 %v21
    %v86 = vunpack.c.l.bf16 %v22
    %v87 = vunpack.c.l.bf16 %v23
    %v88 = vunpack.c.l.bf16 %v24
    %v89 = vunpack.c.l.bf16 %v25
    %v90 = vunpack.c.l.bf16 %v26
    %v91 = vunpack.c.l.bf16 %v27
    %v92 = vunpack.c.l.bf16 %v28
    %v93 = vunpack.c.l.bf16 %v29
    %v94 = vunpack.c.l.bf16 %v30
    %v95 = vunpack.c.l.bf16 %v31
    %v96 = vunpack.c.l.bf16 %v32
    %v97 = vunpack.c.l.bf16 %v33
    %v98 = vunpack.c.l.bf16 %v34
    %v99 = vunpack.c.l.bf16 %v35
    %v100 = vunpack.c.l.bf16 %v36
    %v101 = vunpack.c.l.bf16 %v37
    %v102 = vunpack.c.l.bf16 %v38
    %v103 = vunpack.c.l.bf16 %v39
    %v104 = vunpack.c.l.bf16 %v40
    %v105 = vunpack.c.l.bf16 %v41
    %v106 = vunpack.c.l.bf16 %v42
    %v107 = vunpack.c.l.bf16 %v43
    %v108 = vunpack.c.l.bf16 %v44
    %v109 = vunpack.c.l.bf16 %v45
    %v110 = vunpack.c.l.bf16 %v46
    %v111 = vunpack.c.l.bf16 %v47
    %v112 = vunpack.c.l.bf16 %v48
    %v113 = vunpack.c.l.bf16 %v49
    %v114 = vunpack.c.l.bf16 %v50
    %v115 = vunpack.c.l.bf16 %v51
    %v116 = vunpack.c.l.bf16 %v52
    %v117 = vunpack.c.l.bf16 %v53
    %v118 = vunpack.c.l.bf16 %v54
    %v119 = vunpack.c.l.bf16 %v55
    %v120 = vunpack.c.l.bf16 %v56
    %v121 = vunpack.c.l.bf16 %v57
    %v122 = vunpack.c.l.bf16 %v58
    %v123 = vunpack.c.l.bf16 %v59
    %v124 = vunpack.c.l.bf16 %v60
    %v125 = vunpack.c.l.bf16 %v61
    %v126 = vunpack.c.l.bf16 %v62
    %v127 = vunpack.c.l.bf16 %v63
    %v128 = vunpack.c.l.bf16 %v64
    %v129 = vunpack.c.l.bf16 %v65
    %v130 = vunpack.c.l.bf16 %v66
    %v131 = vunpack.c.l.bf16 %v67
    %v132 = vunpack.c.l.bf16 %v68
    %v133 = vunpack.c.l.bf16 %v69
    %v134 = vunpack.c.l.bf16 %v70
    %v135 = vunpack.c.l.bf16 %v71
    %v136 = vunpack.c.l.bf16 %v72
    %v137 = vunpack.c.l.bf16 %v73
    %v138 = vunpack.c.l.bf16 %v74
    %v139 = vunpack.c.l.bf16 %v75
    %v140 = vunpack.c.l.bf16 %v76
    %v141 = vunpack.c.l.bf16 %v77
    %v142 = vunpack.c.l.bf16 %v78
    %v143 = vunpack.c.l.bf16 %v79
    %v144 = vunpack.c.l.bf16 %v80
    %v145 = vunpack.c.l.bf16 %v81
    %v146 = vunpack.c.l.bf16 %v82
    %v147 = vunpack.c.l.bf16 %v83
    %v148 = vunpack.c.l.bf16 %v84
    %v149 = vadd.f32 %v85, %v86
    %v150 = vadd.f32 %v149, %v87
    %v151 = vadd.f32 %v150, %v88
    %v152 = vadd.f32 %v151, %v89
    %v153 = vadd.f32 %v152, %v90
    %v154 = vadd.f32 %v153, %v91
    %v155 = vadd.f32 %v154, %v92
    %v156 = vadd.f32 %v155, %v93
    %v157 = vadd.f32 %v156, %v94
    %v158 = vadd.f32 %v157, %v95
    %v159 = vadd.f32 %v158, %v96
    %v160 = vadd.f32 %v159, %v97
    %v161 = vadd.f32 %v160, %v98
    %v162 = vadd.f32 %v161, %v99
    %v163 = vadd.f32 %v162, %v100
    %v164 = vadd.f32 %v163, %v101
    %v165 = vadd.f32 %v164, %v102
    %v166 = vadd.f32 %v165, %v103
    %v167 = vadd.f32 %v166, %v104
    %v168 = vadd.f32 %v167, %v105
    %v169 = vadd.f32 %v168, %v106
    %v170 = vadd.f32 %v169, %v107
    %v171 = vadd.f32 %v170, %v108
    %v172 = vadd.f32 %v171, %v109
    %v173 = vadd.f32 %v172, %v110
    %v174 = vadd.f32 %v173, %v111
    %v175 = vadd.f32 %v174, %v112
    %v176 = vadd.f32 %v175, %v113
    %v177 = vadd.f32 %v176, %v114
    %v178 = vadd.f32 %v177, %v115
    %v179 = vadd.f32 %v178, %v116
    %v180 = vrot.slane %v179, 4
    %v181 = vadd.f32 %v179, %v180
    %v182 = vrot.slane %v181, 2
    %v183 = vadd.f32 %v181, %v182
    %v184 = vrot.slane %v183, 1
    %v185 = vadd.f32 %v183, %v184
    %v186 = vadd.f32 %v117, %v118
    %v187 = vadd.f32 %v186, %v119
    %v188 = vadd.f32 %v187, %v120
    %v189 = vadd.f32 %v188, %v121
    %v190 = vadd.f32 %v189, %v122
    %v191 = vadd.f32 %v190, %v123
    %v192 = vadd.f32 %v191, %v124
    %v193 = vadd.f32 %v192, %v125
    %v194 = vadd.f32 %v193, %v126
    %v195 = vadd.f32 %v194, %v127
    %v196 = vadd.f32 %v195, %v128
    %v197 = vadd.f32 %v196, %v129
    %v198 = vadd.f32 %v197, %v130
    %v199 = vadd.f32 %v198, %v131
    %v200 = vadd.f32 %v199, %v132
    %v201 = vadd.f32 %v200, %v133
    %v202 = vadd.f32 %v201, %v134
    %v203 = vadd.f32 %v202, %v135
    %v204 = vadd.f32 %v203, %v136
    %v205 = vadd.f32 %v204, %v137
    %v206 = vadd.f32 %v205, %v138
    %v207 = vadd.f32 %v206, %v139
    %v208 = vadd.f32 %v207, %v140
    %v209 = vadd.f32 %v208, %v141
    %v210 = vadd.f32 %v209, %v142
    %v211 = vadd.f32 %v210, %v143
    %v212 = vadd.f32 %v211, %v144
    %v213 = vadd.f32 %v212, %v145
    %v214 = vadd.f32 %v213, %v146
    %v215 = vadd.f32 %v214, %v147
    %v216 = vadd.f32 %v215, %v148
    %v217 = vrot.slane %v216, 4
    %v218 = vadd.f32 %v216, %v217
    %v219 = vrot.slane %v218, 2
    %v220 = vadd.f32 %v218, %v219
    %v221 = vrot.slane %v220, 1
    %v222 = vadd.f32 %v220, %v221
    %vm225 = vcmask 1041409
    %v226 = vsel %vm225, %v222, %v185
    %v228 = vadd.f32 %v20, %v226
    %229 = vst [vmem:[#allocation2] sm:$0x3] %v228
    // Predicated region
    $region18: #{eblite4_forward.5} parent=1 // pred_check
      %p230 = pneg %p15
    $region19: #{eblite4_forward.5} parent=1 // pred_check_branch
      %232 = sbr.rel (%p230) target = $region21
    $region20: #{eblite4_forward.5} parent=1 // pred_region
      %v233 = vld [vmem:[#allocation2] sm:$0x3]
      %v234 = vmul.f32 %v233, 0.00390625
      %v235 = vld [vmem:[%s1] sm:$0xff]
      %v236 = vld [vmem:[%s1 + $0x8] sm:$0xff]
      %v237 = vld [vmem:[%s1 + $0x10] sm:$0xff]
      %v238 = vld [vmem:[%s1 + $0x18] sm:$0xff]
      %v239 = vld [vmem:[%s1 + $0x20] sm:$0xff]
      %v240 = vld [vmem:[%s1 + $0x28] sm:$0xff]
      %v241 = vld [vmem:[%s1 + $0x30] sm:$0xff]
      %v242 = vld [vmem:[%s1 + $0x38] sm:$0xff]
      %v243 = vld [vmem:[%s1 + $0x40] sm:$0xff]
      %v244 = vld [vmem:[%s1 + $0x48] sm:$0xff]
      %v245 = vld [vmem:[%s1 + $0x50] sm:$0xff]
      %v246 = vld [vmem:[%s1 + $0x58] sm:$0xff]
      %v247 = vld [vmem:[%s1 + $0x60] sm:$0xff]
      %v248 = vld [vmem:[%s1 + $0x68] sm:$0xff]
      %v249 = vld [vmem:[%s1 + $0x70] sm:$0xff]
      %v250 = vld [vmem:[%s1 + $0x78] sm:$0xff]
      %v251 = vld [vmem:[%s2] sm:$0x1]
      %v253 = vperm.slane %v251, 0
      %255 = vmatpush.msra.mxu0 %v250
      %256 = vmatpush.msra.mxu0 %v249
      %257 = vmatpush.msra.mxu0 %v248
      %258 = vmatpush.msra.mxu0 %v247
      %259 = vmatpush.msra.mxu0 %v246
      %260 = vmatpush.msra.mxu0 %v245
      %261 = vmatpush.msra.mxu0 %v244
      %262 = vmatpush.msra.mxu0 %v243
      %263 = vmatpush.msra.mxu0 %v242
      %264 = vmatpush.msra.mxu0 %v241
      %265 = vmatpush.msra.mxu0 %v240
      %266 = vmatpush.msra.mxu0 %v239
      %267 = vmatpush.msra.mxu0 %v238
      %268 = vmatpush.msra.mxu0 %v237
      %269 = vmatpush.msra.mxu0 %v236
      %270 = vmatpush.msra.mxu0 %v235
      %271 = vmatmul.f32.gmra.mxu0 %v234
      %v272 = vpop.f32.mrf.mxu0
      %v273 = vadd.f32 %v253, %v272
      %274 = vdwg.mxu0
      %vm275 = vcmask 189440
      %276 = vst.msk [vmem:[#allocation3] sm:$0x3] %vm275, %v273
    $region21: #{eblite4_forward.5} parent=1 // pred_fallthru
      _
    // Predicated region
    $region22: #{eblite4_forward.5} parent=1 // pred_check
      _
    $region23: #{eblite4_forward.5} parent=1 // pred_check_branch
      %278 = sbr.rel (0) target = $region25
    $region24: #{eblite4_forward.5} parent=1 // pred_region
      %280 = vsyncadd [#allocation4], 0
      %s282 = sshll.u32 [#allocation3], 4
      %s283 = int_to_ptr.vmem [resolvable:$true] %s282
      %s284 = sshll.u32 %s3, 4
      %s285 = int_to_ptr.hbm [resolvable:$true] %s284
      %287 = dma.vmem_to_hbm [thread:$0]  %s283, 32, %s285, [#allocation4]
    $region25: #{eblite4_forward.5} parent=1 // pred_fallthru
      _
    // Predicated region
    $region26: #{eblite4_forward.5} parent=1 // pred_check
      _
    $region27: #{eblite4_forward.5} parent=1 // pred_check_branch
      %289 = sbr.rel (0) target = $region29
    $region28: #{eblite4_forward.5} parent=1 // pred_region
      %291 = dma.done [#allocation4], 32
    $region29: #{eblite4_forward.5} parent=1 // pred_fallthru
      _
    %292 = vsyncpa [#allocation4], 1

// kernel: eblite4_forward.4
$region0: #{eblite4_forward.4}
  #allocation0 [shape = 'u32[]', space=smem, size = 0x4, offset = 0x4, fixed_abs, tag = 'smem constant byte address 0x4 - core index']
  #allocation1 [shape = 'u32[72,128]{1,0:T(1,128)}', space=vmem, size = 0x9000, scoped, tag = 'internal scratch']
  #allocation2 [shape = 'bf16[10,24,128]{2,1,0:T(8,128)(2,1)}', space=vmem, size = 0xf000, scoped, tag = 'scratch operand']
  %s0 = inlined_call_operand.vmem [shape: bf16[2,16,16,32], index: 0, kind: input, shape index: {}]
  %s1 = inlined_call_operand.vmem [shape: bf16[32,128], index: 1, kind: input, shape index: {}]
  %s2 = inlined_call_operand.vmem [shape: f32[1,128], index: 2, kind: input, shape index: {}]
  %s3 = inlined_call_operand.vmem [shape: f32[9,128], index: 3, kind: input, shape index: {}]
  %s4 = inlined_call_operand.vmem [shape: f32[1,128], index: 4, kind: input, shape index: {}]
  %s5 = inlined_call_operand.vmem [shape: bf16[32,128], index: 5, kind: input, shape index: {}]
  %s6 = inlined_call_operand.vmem [shape: bf16[128,128], index: 6, kind: input, shape index: {}]
  %s7 = inlined_call_operand.vmem [shape: f32[1,128], index: 7, kind: input, shape index: {}]
  %s8 = inlined_call_operand.vmem [shape: bf16[2,16,16,128], index: 8, kind: output, shape index: {}]
  %s9 = sld [smem:[#allocation0]]
  $region65: #{eblite4_forward.4} parent=0
    _
  %s11 = ssub.s32 1, %s9
  %s12 = scalar_select 0, %s11, %s9
  loop: start=0, step=1, limit=6
  $region2: #{eblite4_forward.4} parent=0 // loop_pre_header
    _
  $region3: #{eblite4_forward.4} parent=0 // loop_header
    %s14 = sphi 0, %s18
    %p15 = scmp.ge.s32.totalorder %s14, 6
    %s21 = sphi 0, %s33
    %s22 = sphi 0, %s29
    %s23 = sphi 0, %s21
    %s24 = sphi 0, %s22
    %s25 = sphi 0, %s23
    %s26 = sphi 0, %s24
    %s36 = sphi 0, %s38
    %s39 = sphi 0, %s36
    %s40 = sphi 0, %s39
    %s56 = sphi 0, %s40
    %s60 = sphi 0, %s60
    %s62 = sphi 0, %s60
    %s63 = sphi 0, %s62
    %s77 = sphi 0, %s63
    %s81 = sphi 0, %s81
    %s83 = sphi 0, %s81
    %s84 = sphi 0, %s83
    %s98 = sphi 0, %s84
    %s102 = sphi 0, %s102
    %s104 = sphi 0, %s102
    %s105 = sphi 0, %s104
    %s119 = sphi 0, %s105
    %s123 = sphi 0, %s123
    %s125 = sphi 0, %s123
    %s126 = sphi 0, %s125
    %s140 = sphi 0, %s126
    %s144 = sphi 0, %s144
    %s146 = sphi 0, %s144
    %s147 = sphi 0, %s146
    %s161 = sphi 0, %s147
    %s165 = sphi 0, %s165
    %s167 = sphi 0, %s165
    %s168 = sphi 0, %s167
    %s182 = sphi 0, %s168
    %s186 = sphi 0, %s186
    %s188 = sphi 0, %s186
    %s189 = sphi 0, %s188
    %s203 = sphi 0, %s189
    %s211 = sphi 0, %s213
    %s214 = sphi 0, %s211
    %s215 = sphi 0, %s214
    %s231 = sphi 0, %s215
  $region4: #{eblite4_forward.4} parent=0 // loop_header_branch
    %17 = sbr.rel (%p15) target = $region8
  $region5: #{eblite4_forward.4} parent=0 // loop_body
    %s19 = ssub.s32 %s14, 1
    %s20 = ssub.s32 %s14, 2
    %s27 = sadd.s32 1, %s22
    %p28 = scmp.ge.s32.totalorder %s27, 2
    %s29 = scalar_select %p28, 0, %s27
    %s30 = sadd.s32 1, %s21
    %s31 = scalar_select %p28, %s30, %s21
    %p32 = scmp.ge.s32.totalorder %s31, 2
    %s33 = scalar_select %p32, 0, %s31
    %s34 = ssub.s32 %s21, %s33
    %p35 = scmp.eq.s32.totalorder %s34, 0
    %s37 = sadd.s32 %s36, 1
    %s38 = scalar_select %p35, %s36, %s37
    %p41 = pneg %p35
    %p42 = scmp.eq.s32.totalorder %s14, 3
    %p43 = por %p41, %p42
    %p44 = scmp.ne.s32.totalorder %s36, %s39
    %p45 = scmp.eq.s32.totalorder %s14, 0
    %p46 = por %p44, %p45
    %p47 = scmp.ne.s32.totalorder %s36, %s39
    %p48 = scmp.eq.s32.totalorder %s19, 3
    %p49 = por %p47, %p48
    %p50 = scmp.ne.s32.totalorder %s39, %s40
    %p51 = scmp.eq.s32.totalorder %s19, 0
    %p52 = por %p50, %p51
    %p53 = scmp.ne.s32.totalorder %s39, %s40
    %p54 = scmp.eq.s32.totalorder %s20, 3
    %p55 = por %p53, %p54
    %p57 = scmp.ne.s32.totalorder %s40, %s56
    %p58 = scmp.eq.s32.totalorder %s20, 0
    %p59 = por %p57, %p58
    %s61 = sadd.s32 %s60, 1
    %p64 = scmp.eq.s32.totalorder %s14, 3
    %p65 = scmp.ne.s32.totalorder %s60, %s62
    %p66 = scmp.eq.s32.totalorder %s14, 0
    %p67 = por %p65, %p66
    %p68 = scmp.ne.s32.totalorder %s60, %s62
    %p69 = scmp.eq.s32.totalorder %s19, 3
    %p70 = por %p68, %p69
    %p71 = scmp.ne.s32.totalorder %s62, %s63
    %p72 = scmp.eq.s32.totalorder %s19, 0
    %p73 = por %p71, %p72
    %p74 = scmp.ne.s32.totalorder %s62, %s63
    %p75 = scmp.eq.s32.totalorder %s20, 3
    %p76 = por %p74, %p75
    %p78 = scmp.ne.s32.totalorder %s63, %s77
    %p79 = scmp.eq.s32.totalorder %s20, 0
    %p80 = por %p78, %p79
    %s82 = sadd.s32 %s81, 1
    %p85 = scmp.eq.s32.totalorder %s14, 3
    %p86 = scmp.ne.s32.totalorder %s81, %s83
    %p87 = scmp.eq.s32.totalorder %s14, 0
    %p88 = por %p86, %p87
    %p89 = scmp.ne.s32.totalorder %s81, %s83
    %p90 = scmp.eq.s32.totalorder %s19, 3
    %p91 = por %p89, %p90
    %p92 = scmp.ne.s32.totalorder %s83, %s84
    %p93 = scmp.eq.s32.totalorder %s19, 0
    %p94 = por %p92, %p93
    %p95 = scmp.ne.s32.totalorder %s83, %s84
    %p96 = scmp.eq.s32.totalorder %s20, 3
    %p97 = por %p95, %p96
    %p99 = scmp.ne.s32.totalorder %s84, %s98
    %p100 = scmp.eq.s32.totalorder %s20, 0
    %p101 = por %p99, %p100
    %s103 = sadd.s32 %s102, 1
    %p106 = scmp.eq.s32.totalorder %s14, 3
    %p107 = scmp.ne.s32.totalorder %s102, %s104
    %p108 = scmp.eq.s32.totalorder %s14, 0
    %p109 = por %p107, %p108
    %p110 = scmp.ne.s32.totalorder %s102, %s104
    %p111 = scmp.eq.s32.totalorder %s19, 3
    %p112 = por %p110, %p111
    %p113 = scmp.ne.s32.totalorder %s104, %s105
    %p114 = scmp.eq.s32.totalorder %s19, 0
    %p115 = por %p113, %p114
    %p116 = scmp.ne.s32.totalorder %s104, %s105
    %p117 = scmp.eq.s32.totalorder %s20, 3
    %p118 = por %p116, %p117
    %p120 = scmp.ne.s32.totalorder %s105, %s119
    %p121 = scmp.eq.s32.totalorder %s20, 0
    %p122 = por %p120, %p121
    %s124 = sadd.s32 %s123, 1
    %p127 = scmp.eq.s32.totalorder %s14, 3
    %p128 = scmp.ne.s32.totalorder %s123, %s125
    %p129 = scmp.eq.s32.totalorder %s14, 0
    %p130 = por %p128, %p129
    %p131 = scmp.ne.s32.totalorder %s123, %s125
    %p132 = scmp.eq.s32.totalorder %s19, 3
    %p133 = por %p131, %p132
    %p134 = scmp.ne.s32.totalorder %s125, %s126
    %p135 = scmp.eq.s32.totalorder %s19, 0
    %p136 = por %p134, %p135
    %p137 = scmp.ne.s32.totalorder %s125, %s126
    %p138 = scmp.eq.s32.totalorder %s20, 3
    %p139 = por %p137, %p138
    %p141 = scmp.ne.s32.totalorder %s126, %s140
    %p142 = scmp.eq.s32.totalorder %s20, 0
    %p143 = por %p141, %p142
    %s145 = sadd.s32 %s144, 1
    %p148 = scmp.eq.s32.totalorder %s14, 3
    %p149 = scmp.ne.s32.totalorder %s144, %s146
    %p150 = scmp.eq.s32.totalorder %s14, 0
    %p151 = por %p149, %p150
    %p152 = scmp.ne.s32.totalorder %s144, %s146
    %p153 = scmp.eq.s32.totalorder %s19, 3
    %p154 = por %p152, %p153
    %p155 = scmp.ne.s32.totalorder %s146, %s147
    %p156 = scmp.eq.s32.totalorder %s19, 0
    %p157 = por %p155, %p156
    %p158 = scmp.ne.s32.totalorder %s146, %s147
    %p159 = scmp.eq.s32.totalorder %s20, 3
    %p160 = por %p158, %p159
    %p162 = scmp.ne.s32.totalorder %s147, %s161
    %p163 = scmp.eq.s32.totalorder %s20, 0
    %p164 = por %p162, %p163
    %s166 = sadd.s32 %s165, 1
    %p169 = scmp.eq.s32.totalorder %s14, 3
    %p170 = scmp.ne.s32.totalorder %s165, %s167
    %p171 = scmp.eq.s32.totalorder %s14, 0
    %p172 = por %p170, %p171
    %p173 = scmp.ne.s32.totalorder %s165, %s167
    %p174 = scmp.eq.s32.totalorder %s19, 3
    %p175 = por %p173, %p174
    %p176 = scmp.ne.s32.totalorder %s167, %s168
    %p177 = scmp.eq.s32.totalorder %s19, 0
    %p178 = por %p176, %p177
    %p179 = scmp.ne.s32.totalorder %s167, %s168
    %p180 = scmp.eq.s32.totalorder %s20, 3
    %p181 = por %p179, %p180
    %p183 = scmp.ne.s32.totalorder %s168, %s182
    %p184 = scmp.eq.s32.totalorder %s20, 0
    %p185 = por %p183, %p184
    %s187 = sadd.s32 %s186, 1
    %p190 = scmp.eq.s32.totalorder %s14, 3
    %p191 = scmp.ne.s32.totalorder %s186, %s188
    %p192 = scmp.eq.s32.totalorder %s14, 0
    %p193 = por %p191, %p192
    %p194 = scmp.ne.s32.totalorder %s186, %s188
    %p195 = scmp.eq.s32.totalorder %s19, 3
    %p196 = por %p194, %p195
    %p197 = scmp.ne.s32.totalorder %s188, %s189
    %p198 = scmp.eq.s32.totalorder %s19, 0
    %p199 = por %p197, %p198
    %p200 = scmp.ne.s32.totalorder %s188, %s189
    %p201 = scmp.eq.s32.totalorder %s20, 3
    %p202 = por %p200, %p201
    %p204 = scmp.ne.s32.totalorder %s189, %s203
    %p205 = scmp.eq.s32.totalorder %s20, 0
    %p206 = por %p204, %p205
    %s207 = ssub.s32 %s21, %s33
    %s208 = ssub.s32 %s22, %s29
    %s209 = sor.u32 %s207, %s208
    %p210 = scmp.eq.s32.totalorder %s209, 0
    %s212 = sadd.s32 %s211, 1
    %s213 = scalar_select %p210, %s211, %s212
    %p216 = pneg %p210
    %p217 = scmp.eq.s32.totalorder %s14, 3
    %p218 = por %p216, %p217
    %p219 = scmp.ne.s32.totalorder %s211, %s214
    %p220 = scmp.eq.s32.totalorder %s14, 0
    %p221 = por %p219, %p220
    %p222 = scmp.ne.s32.totalorder %s211, %s214
    %p223 = scmp.eq.s32.totalorder %s19, 3
    %p224 = por %p222, %p223
    %p225 = scmp.ne.s32.totalorder %s214, %s215
    %p226 = scmp.eq.s32.totalorder %s19, 0
    %p227 = por %p225, %p226
    %p228 = scmp.ne.s32.totalorder %s214, %s215
    %p229 = scmp.eq.s32.totalorder %s20, 3
    %p230 = por %p228, %p229
    %p232 = scmp.ne.s32.totalorder %s215, %s231
    %p233 = scmp.eq.s32.totalorder %s20, 0
    %p234 = por %p232, %p233
    %p235 = scmp.le.s32.totalorder 1, %s14
    %p236 = scmp.lt.s32.totalorder %s14, 5
    %p237 = pnand %p235, %p236
    %p238 = pneg %p237
    // Predicated region
    $region9: #{eblite4_forward.4} parent=5 // pred_check
      _
    $region10: #{eblite4_forward.4} parent=5 // pred_check_branch
      %240 = sbr.rel (%p237) target = $region12
    $region11: #{eblite4_forward.4} parent=5 // pred_region
      %s241 = ssub.s32 %s14, 1
      // Predicated region
      $region13: #{eblite4_forward.4} parent=11 // pred_check
        %p242 = pneg %p73
      $region14: #{eblite4_forward.4} parent=11 // pred_check_branch
        %244 = sbr.rel (%p242) target = $region16
      $region15: #{eblite4_forward.4} parent=11 // pred_region
        _
      $region16: #{eblite4_forward.4} parent=11 // pred_fallthru
        _
      // Predicated region
      $region17: #{eblite4_forward.4} parent=11 // pred_check
        %p245 = pneg %p94
      $region18: #{eblite4_forward.4} parent=11 // pred_check_branch
        %247 = sbr.rel (%p245) target = $region20
      $region19: #{eblite4_forward.4} parent=11 // pred_region
        _
      $region20: #{eblite4_forward.4} parent=11 // pred_fallthru
        _
      // Predicated region
      $region21: #{eblite4_forward.4} parent=11 // pred_check
        %p248 = pneg %p115
      $region22: #{eblite4_forward.4} parent=11 // pred_check_branch
        %250 = sbr.rel (%p248) target = $region24
      $region23: #{eblite4_forward.4} parent=11 // pred_region
        _
      $region24: #{eblite4_forward.4} parent=11 // pred_fallthru
        _
      // Predicated region
      $region25: #{eblite4_forward.4} parent=11 // pred_check
        %p251 = pneg %p136
      $region26: #{eblite4_forward.4} parent=11 // pred_check_branch
        %253 = sbr.rel (%p251) target = $region28
      $region27: #{eblite4_forward.4} parent=11 // pred_region
        _
      $region28: #{eblite4_forward.4} parent=11 // pred_fallthru
        _
      // Predicated region
      $region29: #{eblite4_forward.4} parent=11 // pred_check
        %p254 = pneg %p157
      $region30: #{eblite4_forward.4} parent=11 // pred_check_branch
        %256 = sbr.rel (%p254) target = $region32
      $region31: #{eblite4_forward.4} parent=11 // pred_region
        _
      $region32: #{eblite4_forward.4} parent=11 // pred_fallthru
        _
      // Predicated region
      $region33: #{eblite4_forward.4} parent=11 // pred_check
        %p257 = pneg %p178
      $region34: #{eblite4_forward.4} parent=11 // pred_check_branch
        %259 = sbr.rel (%p257) target = $region36
      $region35: #{eblite4_forward.4} parent=11 // pred_region
        _
      $region36: #{eblite4_forward.4} parent=11 // pred_fallthru
        _
      // Predicated region
      $region37: #{eblite4_forward.4} parent=11 // pred_check
        %p260 = pneg %p199
      $region38: #{eblite4_forward.4} parent=11 // pred_check_branch
        %262 = sbr.rel (%p260) target = $region40
      $region39: #{eblite4_forward.4} parent=11 // pred_region
        _
      $region40: #{eblite4_forward.4} parent=11 // pred_fallthru
        _
    $region12: #{eblite4_forward.4} parent=5 // pred_fallthru
      _
    %p263 = scmp.lt.s32.totalorder %s14, 4
    // Predicated region
    $region41: #{eblite4_forward.4} parent=5 // pred_check
      %p264 = pneg %p263
    $region42: #{eblite4_forward.4} parent=5 // pred_check_branch
      %266 = sbr.rel (%p264) target = $region44
    $region43: #{eblite4_forward.4} parent=5 // pred_region
      // Predicated region
      $region45: #{eblite4_forward.4} parent=43 // pred_check
        %p267 = pneg %p46
      $region46: #{eblite4_forward.4} parent=43 // pred_check_branch
        %269 = sbr.rel (%p267) target = $region48
      $region47: #{eblite4_forward.4} parent=43 // pred_region
        %p270 = scmp.lt.s32.totalorder %s21, 1
        %s271 = scalar_select %p270, %s21, 1
        %s272 = smul.addr %s271, 32
        %s273 = smul.addr %s272, 4
        %s274 = scalar_lea.vmem %s0, %s273
      $region48: #{eblite4_forward.4} parent=43 // pred_fallthru
        _
    $region44: #{eblite4_forward.4} parent=5 // pred_fallthru
      _
    %p275 = scmp.le.s32.totalorder 1, %s14
    %p276 = scmp.lt.s32.totalorder %s14, 5
    %p277 = pnand %p275, %p276
    %p278 = pneg %p277
    // Predicated region
    $region49: #{eblite4_forward.4} parent=5 // pred_check
      _
    $region50: #{eblite4_forward.4} parent=5 // pred_check_branch
      %280 = sbr.rel (%p277) target = $region52
    $region51: #{eblite4_forward.4} parent=5 // pred_region
      %s281 = ssub.s32 %s14, 1
      %p282 = scmp.lt.s32.totalorder %s23, 1
      %s283 = scalar_select %p282, %s23, 1
      %s284 = smul.addr %s283, 32
      %s285 = smul.addr %s284, 4
      %s286 = scalar_lea.vmem %s0, %s285
      %p287 = pneg %p52
      %p288 = pneg %p49
      %p289 = pneg %p73
      %p290 = pneg %p70
      %p291 = pneg %p94
      %p292 = pneg %p91
      %p293 = pneg %p115
      %p294 = pneg %p112
      %p295 = pneg %p136
      %p296 = pneg %p133
      %p297 = pneg %p157
      %p298 = pneg %p154
      %p299 = pneg %p178
      %p300 = pneg %p175
      %p301 = pneg %p199
      %p302 = pneg %p196
      %p303 = pneg %p227
      %p304 = pneg %p224
      %s305 = smul.u32 8, %s24
      %p306 = scmp.lt.s32.totalorder %s23, 1
      %s307 = scalar_select %p306, %s23, 1
      %p308 = scmp.lt.s32.totalorder %s305, 15
      %s309 = scalar_select %p308, %s305, 15
      %s310 = smul.addr %s309, 2
      %s311 = smul.addr %s307, 32
      %s312 = sadd.s32 %s310, %s311
      %s313 = smul.addr %s312, 4
      %s314 = scalar_lea.vmem %s8, %s313
      %p315 = scmp.lt.s32.totalorder %s23, 1
      %s316 = scalar_select %p315, %s23, 1
      %s317 = smul.addr %s316, 32
      %s318 = smul.addr %s317, 4
      %s319 = scalar_lea.vmem %s0, %s318
      %s320 = smul.u32 8, %s24
      %p321 = scmp.lt.s32.totalorder %s23, 1
      %s322 = scalar_select %p321, %s23, 1
      %p323 = scmp.lt.s32.totalorder %s320, 15
      %s324 = scalar_select %p323, %s320, 15
      %s325 = smul.addr %s324, 2
      %s326 = smul.addr %s322, 32
      %s327 = sadd.s32 %s325, %s326
      %s328 = smul.addr %s327, 4
      %s329 = scalar_lea.vmem %s8, %s328
      %s330 = smul.u32 8, %s24
      %s332 = smul.u32 %s24, 8
      %s333 = smul.u32 %s332, 2
      %s334 = smul.addr %s333, 4
      %s335 = scalar_lea.vmem %s319, %s334
      %v336 = vld [vmem:[%s335] sm:$0xf]
      %v337 = vld [vmem:[%s335 + $0x4] sm:$0xf]
      %v338 = vld [vmem:[%s335 + $0x8] sm:$0xf]
      %v339 = vld [vmem:[%s335 + $0xc] sm:$0xf]
      %v340 = vld [vmem:[%s335 + $0x10] sm:$0xf]
      %v341 = vld [vmem:[%s335 + $0x14] sm:$0xf]
      %v342 = vld [vmem:[%s335 + $0x18] sm:$0xf]
      %v343 = vld [vmem:[%s335 + $0x1c] sm:$0xf]
      %v344 = vld [vmem:[%s335 + $0x20] sm:$0xf]
      %v345 = vld [vmem:[%s335 + $0x24] sm:$0xf]
      %v346 = vld [vmem:[%s335 + $0x28] sm:$0xf]
      %v347 = vld [vmem:[%s335 + $0x2c] sm:$0xf]
      %v348 = vld [vmem:[%s335 + $0x30] sm:$0xf]
      %v349 = vld [vmem:[%s335 + $0x34] sm:$0xf]
      %v350 = vld [vmem:[%s335 + $0x38] sm:$0xf]
      %v351 = vld [vmem:[%s335 + $0x3c] sm:$0xf]
      %v352 = vld [vmem:[%s1] sm:$0xf]
      %v353 = vld [vmem:[%s1 + $0x4] sm:$0xf]
      %v354 = vld [vmem:[%s1 + $0x8] sm:$0xf]
      %v355 = vld [vmem:[%s1 + $0xc] sm:$0xf]
      %v356 = vld [vmem:[%s2] sm:$0x1]
      %v358 = vperm.slane %v356, 0
      %v376 = vunpack.c.l.b16 %v336
      %v377 = vunpack.c.l.b16 %v337
      %v378 = vunpack.c.l.b16 %v338
      %v379 = vunpack.c.l.b16 %v339
      %v380 = vunpack.c.l.b16 %v340
      %v381 = vunpack.c.l.b16 %v341
      %v382 = vunpack.c.l.b16 %v342
      %v383 = vunpack.c.l.b16 %v343
      %v384 = vunpack.c.l.b16 %v344
      %v385 = vunpack.c.l.b16 %v345
      %v386 = vunpack.c.l.b16 %v346
      %v387 = vunpack.c.l.b16 %v347
      %v388 = vunpack.c.l.b16 %v348
      %v389 = vunpack.c.l.b16 %v349
      %v390 = vunpack.c.l.b16 %v350
      %v391 = vunpack.c.l.b16 %v351
      %v392 = vpack.c.b16 %v377, %v376
      %v393 = vpack.c.b16 %v379, %v378
      %v394 = vpack.c.b16 %v381, %v380
      %v395 = vpack.c.b16 %v383, %v382
      %v396 = vpack.c.b16 %v385, %v384
      %v397 = vpack.c.b16 %v387, %v386
      %v398 = vpack.c.b16 %v389, %v388
      %v399 = vpack.c.b16 %v391, %v390
      %v404 = vunpack.c.l.b16 %v352
      %v405 = vunpack.c.l.b16 %v353
      %v406 = vunpack.c.l.b16 %v354
      %v407 = vunpack.c.l.b16 %v355
      %v408 = vpack.c.b16 %v405, %v404
      %v409 = vpack.c.b16 %v407, %v406
      %vm412 = vcmask 261120
      %v414 = vsel %vm412, %v392, 0
      %v417 = vsel %vm412, %v393, 0
      %v420 = vsel %vm412, %v394, 0
      %v423 = vsel %vm412, %v395, 0
      %v426 = vsel %vm412, %v396, 0
      %v429 = vsel %vm412, %v397, 0
      %v432 = vsel %vm412, %v398, 0
      %v435 = vsel %vm412, %v399, 0
      %437 = vmatpush.bf16.msra.mxu0 0
      %438 = vmatpush.bf16.msra.mxu0 0
      %439 = vmatpush.bf16.msra.mxu0 0
      %440 = vmatpush.bf16.msra.mxu0 0
      %441 = vmatpush.bf16.msra.mxu0 0
      %442 = vmatpush.bf16.msra.mxu0 0
      %443 = vmatpush.bf16.msra.mxu0 %v409
      %444 = vmatpush.bf16.msra.mxu0 %v408
      %445 = vmatmul.bf16.gmra.mxu0 %v414
      %v446 = vpop.f32.mrf.mxu0
      %v447 = vadd.f32 %v358, %v446
      %v448 = vpop.f32.mrf.mxu0
      %v449 = vadd.f32 %v358, %v448
      %450 = vmatmul.bf16.gmra.mxu0 %v417
      %v451 = vpop.f32.mrf.mxu0
      %v452 = vadd.f32 %v358, %v451
      %v453 = vpop.f32.mrf.mxu0
      %v454 = vadd.f32 %v358, %v453
      %455 = vmatmul.bf16.gmra.mxu0 %v420
      %v456 = vpop.f32.mrf.mxu0
      %v457 = vadd.f32 %v358, %v456
      %v458 = vpop.f32.mrf.mxu0
      %v459 = vadd.f32 %v358, %v458
      %460 = vmatmul.bf16.gmra.mxu0 %v423
      %v461 = vpop.f32.mrf.mxu0
      %v462 = vadd.f32 %v358, %v461
      %v463 = vpop.f32.mrf.mxu0
      %v464 = vadd.f32 %v358, %v463
      %465 = vmatmul.bf16.gmra.mxu0 %v426
      %v466 = vpop.f32.mrf.mxu0
      %v467 = vadd.f32 %v358, %v466
      %v468 = vpop.f32.mrf.mxu0
      %v469 = vadd.f32 %v358, %v468
      %470 = vmatmul.bf16.gmra.mxu0 %v429
      %v471 = vpop.f32.mrf.mxu0
      %v472 = vadd.f32 %v358, %v471
      %v473 = vpop.f32.mrf.mxu0
      %v474 = vadd.f32 %v358, %v473
      %475 = vmatmul.bf16.gmra.mxu0 %v432
      %v476 = vpop.f32.mrf.mxu0
      %v477 = vadd.f32 %v358, %v476
      %v478 = vpop.f32.mrf.mxu0
      %v479 = vadd.f32 %v358, %v478
      %480 = vmatmul.bf16.gmra.mxu0 %v435
      %v481 = vpop.f32.mrf.mxu0
      %v482 = vadd.f32 %v358, %v481
      %v483 = vpop.f32.mrf.mxu0
      %v484 = vadd.f32 %v358, %v483
      %485 = vdwg.mxu0
      %v486 = vmax.f32 %v447, 0.0
      %v487 = vmax.f32 %v449, 0.0
      %v488 = vmax.f32 %v452, 0.0
      %v489 = vmax.f32 %v454, 0.0
      %v490 = vmax.f32 %v457, 0.0
      %v491 = vmax.f32 %v459, 0.0
      %v492 = vmax.f32 %v462, 0.0
      %v493 = vmax.f32 %v464, 0.0
      %v494 = vmax.f32 %v467, 0.0
      %v495 = vmax.f32 %v469, 0.0
      %v496 = vmax.f32 %v472, 0.0
      %v497 = vmax.f32 %v474, 0.0
      %v498 = vmax.f32 %v477, 0.0
      %v499 = vmax.f32 %v479, 0.0
      %v500 = vmax.f32 %v482, 0.0
      %v501 = vmax.f32 %v484, 0.0
      %v502 = vmin.f32 %v486, 6.0
      %v503 = vmin.f32 %v487, 6.0
      %v504 = vmin.f32 %v488, 6.0
      %v505 = vmin.f32 %v489, 6.0
      %v506 = vmin.f32 %v490, 6.0
      %v507 = vmin.f32 %v491, 6.0
      %v508 = vmin.f32 %v492, 6.0
      %v509 = vmin.f32 %v493, 6.0
      %v510 = vmin.f32 %v494, 6.0
      %v511 = vmin.f32 %v495, 6.0
      %v512 = vmin.f32 %v496, 6.0
      %v513 = vmin.f32 %v497, 6.0
      %v514 = vmin.f32 %v498, 6.0
      %v515 = vmin.f32 %v499, 6.0
      %v516 = vmin.f32 %v500, 6.0
      %v517 = vmin.f32 %v501, 6.0
      %v518 = vpack.c.bf16 %v502, %v502
      %v519 = vpack.c.bf16 %v503, %v503
      %v520 = vpack.c.bf16 %v504, %v504
      %v521 = vpack.c.bf16 %v505, %v505
      %v522 = vpack.c.bf16 %v506, %v506
      %v523 = vpack.c.bf16 %v507, %v507
      %v524 = vpack.c.bf16 %v508, %v508
      %v525 = vpack.c.bf16 %v509, %v509
      %v526 = vpack.c.bf16 %v510, %v510
      %v527 = vpack.c.bf16 %v511, %v511
      %v528 = vpack.c.bf16 %v512, %v512
      %v529 = vpack.c.bf16 %v513, %v513
      %v530 = vpack.c.bf16 %v514, %v514
      %v531 = vpack.c.bf16 %v515, %v515
      %v532 = vpack.c.bf16 %v516, %v516
      %v533 = vpack.c.bf16 %v517, %v517
      %s534 = scalar_lea.vmem [#allocation2], 12
      %535 = vst [vmem:[%s534] sm:$0xf] %v518
      %536 = vst [vmem:[%s534 + $0x4] sm:$0xf] %v519
      %537 = vst [vmem:[%s534 + $0xc] sm:$0xf] %v520
      %538 = vst [vmem:[%s534 + $0x10] sm:$0xf] %v521
      %539 = vst [vmem:[%s534 + $0x18] sm:$0xf] %v522
      %540 = vst [vmem:[%s534 + $0x1c] sm:$0xf] %v523
      %541 = vst [vmem:[%s534 + $0x24] sm:$0xf] %v524
      %542 = vst [vmem:[%s534 + $0x28] sm:$0xf] %v525
      %543 = vst [vmem:[%s534 + $0x30] sm:$0xf] %v526
      %544 = vst [vmem:[%s534 + $0x34] sm:$0xf] %v527
      %545 = vst [vmem:[%s534 + $0x3c] sm:$0xf] %v528
      %546 = vst [vmem:[%s534 + $0x40] sm:$0xf] %v529
      %547 = vst [vmem:[%s534 + $0x48] sm:$0xf] %v530
      %548 = vst [vmem:[%s534 + $0x4c] sm:$0xf] %v531
      %549 = vst [vmem:[%s534 + $0x54] sm:$0xf] %v532
      %550 = vst [vmem:[%s534 + $0x58] sm:$0xf] %v533
      %s551 = ssub.s32 %s332, 1
      %p552 = scmp.gt.s32.totalorder %s551, 0
      %s553 = scalar_select %p552, %s551, 0
      %s554 = sadd.s32 %s332, 8
      %p555 = scmp.lt.s32.totalorder %s554, 15
      %s556 = scalar_select %p555, %s554, 15
      %p557 = scmp.gt.s32.totalorder %s24, 0
      %s558 = scalar_select %p557, 1.0, 0.0
      %p559 = scmp.lt.s32.totalorder %s24, 1
      %s560 = scalar_select %p559, 1.0, 0.0
      %s561 = smul.u32 %s553, 2
      %s562 = smul.addr %s561, 4
      %s563 = scalar_lea.vmem %s319, %s562
      %v564 = vld [vmem:[%s563] sm:$0xf]
      %v565 = vld [vmem:[%s563 + $0x4] sm:$0xf]
      %v566 = vld [vmem:[%s1] sm:$0xf]
      %v567 = vld [vmem:[%s1 + $0x4] sm:$0xf]
      %v568 = vld [vmem:[%s1 + $0x8] sm:$0xf]
      %v569 = vld [vmem:[%s1 + $0xc] sm:$0xf]
      %v570 = vld [vmem:[%s2] sm:$0x1]
      %v572 = vperm.slane %v570, 0
      %v576 = vunpack.c.l.b16 %v564
      %v577 = vunpack.c.l.b16 %v565
      %v578 = vpack.c.b16 %v577, %v576
      %v583 = vunpack.c.l.b16 %v566
      %v584 = vunpack.c.l.b16 %v567
      %v585 = vunpack.c.l.b16 %v568
      %v586 = vunpack.c.l.b16 %v569
      %v587 = vpack.c.b16 %v584, %v583
      %v588 = vpack.c.b16 %v586, %v585
      %v592 = vsel %vm412, %v578, 0
      %594 = vmatpush.bf16.msra.mxu0 0
      %595 = vmatpush.bf16.msra.mxu0 0
      %596 = vmatpush.bf16.msra.mxu0 0
      %597 = vmatpush.bf16.msra.mxu0 0
      %598 = vmatpush.bf16.msra.mxu0 0
      %599 = vmatpush.bf16.msra.mxu0 0
      %600 = vmatpush.bf16.msra.mxu0 %v588
      %601 = vmatpush.bf16.msra.mxu0 %v587
      %602 = vmatmul.bf16.gmra.mxu0 %v592
      %v603 = vpop.f32.mrf.mxu0
      %v604 = vadd.f32 %v572, %v603
      %v605 = vpop.f32.mrf.mxu0
      %v606 = vadd.f32 %v572, %v605
      %607 = vdwg.mxu0
      %v608 = vmax.f32 %v604, 0.0
      %v609 = vmax.f32 %v606, 0.0
      %v610 = vmin.f32 %v608, 6.0
      %v611 = vmin.f32 %v609, 6.0
      %v612 = vstv %s558
      %v613 = vmul.f32 %v610, %v612
      %v614 = vmul.f32 %v611, %v612
      %s615 = smul.u32 %s556, 2
      %s616 = smul.addr %s615, 4
      %s617 = scalar_lea.vmem %s319, %s616
      %v618 = vld [vmem:[%s617] sm:$0xf]
      %v619 = vld [vmem:[%s617 + $0x4] sm:$0xf]
      %v622 = vunpack.c.l.b16 %v618
      %v623 = vunpack.c.l.b16 %v619
      %v624 = vpack.c.b16 %v623, %v622
      %v626 = vsel %vm412, %v624, 0
      %628 = vmatpush.bf16.msra.mxu0 0
      %629 = vmatpush.bf16.msra.mxu0 0
      %630 = vmatpush.bf16.msra.mxu0 0
      %631 = vmatpush.bf16.msra.mxu0 0
      %632 = vmatpush.bf16.msra.mxu0 0
      %633 = vmatpush.bf16.msra.mxu0 0
      %634 = vmatpush.bf16.msra.mxu0 %v588
      %635 = vmatpush.bf16.msra.mxu0 %v587
      %636 = vmatmul.bf16.gmra.mxu0 %v626
      %v637 = vpop.f32.mrf.mxu0
      %v638 = vadd.f32 %v572, %v637
      %v639 = vpop.f32.mrf.mxu0
      %v640 = vadd.f32 %v572, %v639
      %641 = vdwg.mxu0
      %v642 = vmax.f32 %v638, 0.0
      %v643 = vmax.f32 %v640, 0.0
      %v644 = vmin.f32 %v642, 6.0
      %v645 = vmin.f32 %v643, 6.0
      %v646 = vstv %s560
      %v647 = vmul.f32 %v644, %v646
      %v648 = vmul.f32 %v645, %v646
      %v649 = vpack.c.bf16 %v613, %v613
      %v650 = vpack.c.bf16 %v614, %v614
      %651 = vst [vmem:[#allocation2] sm:$0xf] %v649
      %652 = vst [vmem:[#allocation2 + $0x4] sm:$0xf] %v650
      %v653 = vpack.c.bf16 %v647, %v647
      %v654 = vpack.c.bf16 %v648, %v648
      %s655 = scalar_lea.vmem [#allocation2], 108
      %656 = vst [vmem:[%s655] sm:$0xf] %v653
      %657 = vst [vmem:[%s655 + $0x4] sm:$0xf] %v654
      %658 = vst [vmem:[#allocation2 + $0x8] sm:$0xf] 0
      %659 = vst [vmem:[#allocation2 + $0x14] sm:$0xf] 0
      %660 = vst [vmem:[#allocation2 + $0x20] sm:$0xf] 0
      %661 = vst [vmem:[#allocation2 + $0x2c] sm:$0xf] 0
      %662 = vst [vmem:[#allocation2 + $0x38] sm:$0xf] 0
      %663 = vst [vmem:[#allocation2 + $0x44] sm:$0xf] 0
      %664 = vst [vmem:[#allocation2 + $0x50] sm:$0xf] 0
      %665 = vst [vmem:[#allocation2 + $0x5c] sm:$0xf] 0
      %666 = vst [vmem:[#allocation2 + $0x68] sm:$0xf] 0
      %667 = vst [vmem:[#allocation2 + $0x74] sm:$0xf] 0
      %v668 = vld [vmem:[%s3] sm:$0xff]
      %v669 = vld [vmem:[%s3 + $0x8] sm:$0x1]
      %v670 = vld [vmem:[#allocation2] sm:$0xf]
      %v671 = vld [vmem:[#allocation2 + $0x4] sm:$0xf]
      %v672 = vld [vmem:[#allocation2 + $0x8] sm:$0xf]
      %v673 = vld [vmem:[#allocation2 + $0xc] sm:$0xf]
      %v674 = vld [vmem:[#allocation2 + $0x10] sm:$0xf]
      %v675 = vld [vmem:[#allocation2 + $0x14] sm:$0xf]
      %v676 = vld [vmem:[#allocation2 + $0x18] sm:$0xf]
      %v677 = vld [vmem:[#allocation2 + $0x1c] sm:$0xf]
      %v678 = vld [vmem:[#allocation2 + $0x20] sm:$0xf]
      %v679 = vld [vmem:[#allocation2 + $0x24] sm:$0xf]
      %v680 = vld [vmem:[#allocation2 + $0x28] sm:$0xf]
      %v681 = vld [vmem:[#allocation2 + $0x2c] sm:$0xf]
      %v682 = vld [vmem:[#allocation2 + $0x30] sm:$0xf]
      %v683 = vld [vmem:[#allocation2 + $0x34] sm:$0xf]
      %v684 = vld [vmem:[#allocation2 + $0x38] sm:$0xf]
      %v685 = vld [vmem:[#allocation2 + $0x3c] sm:$0xf]
      %v686 = vld [vmem:[#allocation2 + $0x40] sm:$0xf]
      %v687 = vld [vmem:[#allocation2 + $0x44] sm:$0xf]
      %v688 = vld [vmem:[#allocation2 + $0x48] sm:$0xf]
      %v689 = vld [vmem:[#allocation2 + $0x4c] sm:$0xf]
      %v690 = vld [vmem:[#allocation2 + $0x50] sm:$0xf]
      %v691 = vld [vmem:[#allocation2 + $0x54] sm:$0xf]
      %v692 = vld [vmem:[#allocation2 + $0x58] sm:$0xf]
      %v693 = vld [vmem:[#allocation2 + $0x5c] sm:$0xf]
      %v694 = vunpack.c.l.bf16 %v670
      %v695 = vunpack.c.l.bf16 %v671
      %v696 = vunpack.c.l.bf16 %v672
      %v697 = vunpack.c.l.bf16 %v673
      %v698 = vunpack.c.l.bf16 %v674
      %v699 = vunpack.c.l.bf16 %v675
      %v700 = vunpack.c.l.bf16 %v676
      %v701 = vunpack.c.l.bf16 %v677
      %v702 = vunpack.c.l.bf16 %v678
      %v703 = vunpack.c.l.bf16 %v679
      %v704 = vunpack.c.l.bf16 %v680
      %v705 = vunpack.c.l.bf16 %v681
      %v706 = vunpack.c.l.bf16 %v682
      %v707 = vunpack.c.l.bf16 %v683
      %v708 = vunpack.c.l.bf16 %v684
      %v709 = vunpack.c.l.bf16 %v685
      %v710 = vunpack.c.l.bf16 %v686
      %v711 = vunpack.c.l.bf16 %v687
      %v712 = vunpack.c.l.bf16 %v688
      %v713 = vunpack.c.l.bf16 %v689
      %v714 = vunpack.c.l.bf16 %v690
      %v715 = vunpack.c.l.bf16 %v691
      %v716 = vunpack.c.l.bf16 %v692
      %v717 = vunpack.c.l.bf16 %v693
      %v718 = vperm.slane %v668, 1
      %v719 = vmul.f32 %v694, %v718
      %v720 = vmul.f32 %v695, %v718
      %v721 = vmul.f32 %v697, %v718
      %v722 = vmul.f32 %v698, %v718
      %v723 = vmul.f32 %v700, %v718
      %v724 = vmul.f32 %v701, %v718
      %v725 = vmul.f32 %v703, %v718
      %v726 = vmul.f32 %v704, %v718
      %v727 = vmul.f32 %v706, %v718
      %v728 = vmul.f32 %v707, %v718
      %v729 = vmul.f32 %v709, %v718
      %v730 = vmul.f32 %v710, %v718
      %v731 = vmul.f32 %v712, %v718
      %v732 = vmul.f32 %v713, %v718
      %v733 = vmul.f32 %v715, %v718
      %v734 = vmul.f32 %v716, %v718
      %v735 = vadd.f32 %v719, 0.0
      %v736 = vadd.f32 %v720, 0.0
      %v737 = vadd.f32 %v721, 0.0
      %v738 = vadd.f32 %v722, 0.0
      %v739 = vadd.f32 %v723, 0.0
      %v740 = vadd.f32 %v724, 0.0
      %v741 = vadd.f32 %v725, 0.0
      %v742 = vadd.f32 %v726, 0.0
      %v743 = vadd.f32 %v727, 0.0
      %v744 = vadd.f32 %v728, 0.0
      %v745 = vadd.f32 %v729, 0.0
      %v746 = vadd.f32 %v730, 0.0
      %v747 = vadd.f32 %v731, 0.0
      %v748 = vadd.f32 %v732, 0.0
      %v749 = vadd.f32 %v733, 0.0
      %v750 = vadd.f32 %v734, 0.0
      %v751 = vrot.slane %v694, 7
      %v752 = vrot.slane %v697, 7
      %v753 = vrot.slane %v700, 7
      %v754 = vrot.slane %v703, 7
      %v755 = vrot.slane %v706, 7
      %v756 = vrot.slane %v709, 7
      %v757 = vrot.slane %v712, 7
      %v758 = vrot.slane %v715, 7
      %v759 = vrot.slane %v695, 7
      %v760 = vrot.slane %v698, 7
      %v761 = vrot.slane %v701, 7
      %v762 = vrot.slane %v704, 7
      %v763 = vrot.slane %v707, 7
      %v764 = vrot.slane %v710, 7
      %v765 = vrot.slane %v713, 7
      %v766 = vrot.slane %v716, 7
      %v767 = vrot.slane %v696, 7
      %v768 = vrot.slane %v699, 7
      %v769 = vrot.slane %v702, 7
      %v770 = vrot.slane %v705, 7
      %v771 = vrot.slane %v708, 7
      %v772 = vrot.slane %v711, 7
      %v773 = vrot.slane %v714, 7
      %v774 = vrot.slane %v717, 7
      %v775 = vlaneseq
      %v776 = vshrl.u32 %v775, 7
      %vm777 = vcmp.lt.s32.totalorder %v776, 1
      %v778 = vsel %vm777, %v751, %v759
      %v779 = vsel %vm777, %v752, %v760
      %v780 = vsel %vm777, %v753, %v761
      %v781 = vsel %vm777, %v754, %v762
      %v782 = vsel %vm777, %v755, %v763
      %v783 = vsel %vm777, %v756, %v764
      %v784 = vsel %vm777, %v757, %v765
      %v785 = vsel %vm777, %v758, %v766
      %v786 = vsel %vm777, %v767, %v751
      %v787 = vsel %vm777, %v768, %v752
      %v788 = vsel %vm777, %v769, %v753
      %v789 = vsel %vm777, %v770, %v754
      %v790 = vsel %vm777, %v771, %v755
      %v791 = vsel %vm777, %v772, %v756
      %v792 = vsel %vm777, %v773, %v757
      %v793 = vsel %vm777, %v774, %v758
      %v794 = vperm.slane %v668, 0
      %v795 = vmul.f32 %v786, %v794
      %v796 = vmul.f32 %v778, %v794
      %v797 = vmul.f32 %v787, %v794
      %v798 = vmul.f32 %v779, %v794
      %v799 = vmul.f32 %v788, %v794
      %v800 = vmul.f32 %v780, %v794
      %v801 = vmul.f32 %v789, %v794
      %v802 = vmul.f32 %v781, %v794
      %v803 = vmul.f32 %v790, %v794
      %v804 = vmul.f32 %v782, %v794
      %v805 = vmul.f32 %v791, %v794
      %v806 = vmul.f32 %v783, %v794
      %v807 = vmul.f32 %v792, %v794
      %v808 = vmul.f32 %v784, %v794
      %v809 = vmul.f32 %v793, %v794
      %v810 = vmul.f32 %v785, %v794
      %v811 = vadd.f32 %v735, %v795
      %v812 = vadd.f32 %v736, %v796
      %v813 = vadd.f32 %v737, %v797
      %v814 = vadd.f32 %v738, %v798
      %v815 = vadd.f32 %v739, %v799
      %v816 = vadd.f32 %v740, %v800
      %v817 = vadd.f32 %v741, %v801
      %v818 = vadd.f32 %v742, %v802
      %v819 = vadd.f32 %v743, %v803
      %v820 = vadd.f32 %v744, %v804
      %v821 = vadd.f32 %v745, %v805
      %v822 = vadd.f32 %v746, %v806
      %v823 = vadd.f32 %v747, %v807
      %v824 = vadd.f32 %v748, %v808
      %v825 = vadd.f32 %v749, %v809
      %v826 = vadd.f32 %v750, %v810
      %v827 = vrot.slane %v694, 1
      %v828 = vrot.slane %v697, 1
      %v829 = vrot.slane %v700, 1
      %v830 = vrot.slane %v703, 1
      %v831 = vrot.slane %v706, 1
      %v832 = vrot.slane %v709, 1
      %v833 = vrot.slane %v712, 1
      %v834 = vrot.slane %v715, 1
      %v835 = vrot.slane %v695, 1
      %v836 = vrot.slane %v698, 1
      %v837 = vrot.slane %v701, 1
      %v838 = vrot.slane %v704, 1
      %v839 = vrot.slane %v707, 1
      %v840 = vrot.slane %v710, 1
      %v841 = vrot.slane %v713, 1
      %v842 = vrot.slane %v716, 1
      %v843 = vrot.slane %v696, 1
      %v844 = vrot.slane %v699, 1
      %v845 = vrot.slane %v702, 1
      %v846 = vrot.slane %v705, 1
      %v847 = vrot.slane %v708, 1
      %v848 = vrot.slane %v711, 1
      %v849 = vrot.slane %v714, 1
      %v850 = vrot.slane %v717, 1
      %vm851 = vcmp.lt.s32.totalorder %v776, 7
      %v852 = vsel %vm851, %v835, %v843
      %v853 = vsel %vm851, %v836, %v844
      %v854 = vsel %vm851, %v837, %v845
      %v855 = vsel %vm851, %v838, %v846
      %v856 = vsel %vm851, %v839, %v847
      %v857 = vsel %vm851, %v840, %v848
      %v858 = vsel %vm851, %v841, %v849
      %v859 = vsel %vm851, %v842, %v850
      %v860 = vsel %vm851, %v827, %v835
      %v861 = vsel %vm851, %v828, %v836
      %v862 = vsel %vm851, %v829, %v837
      %v863 = vsel %vm851, %v830, %v838
      %v864 = vsel %vm851, %v831, %v839
      %v865 = vsel %vm851, %v832, %v840
      %v866 = vsel %vm851, %v833, %v841
      %v867 = vsel %vm851, %v834, %v842
      %v868 = vperm.slane %v668, 2
      %v869 = vmul.f32 %v860, %v868
      %v870 = vmul.f32 %v852, %v868
      %v871 = vmul.f32 %v861, %v868
      %v872 = vmul.f32 %v853, %v868
      %v873 = vmul.f32 %v862, %v868
      %v874 = vmul.f32 %v854, %v868
      %v875 = vmul.f32 %v863, %v868
      %v876 = vmul.f32 %v855, %v868
      %v877 = vmul.f32 %v864, %v868
      %v878 = vmul.f32 %v856, %v868
      %v879 = vmul.f32 %v865, %v868
      %v880 = vmul.f32 %v857, %v868
      %v881 = vmul.f32 %v866, %v868
      %v882 = vmul.f32 %v858, %v868
      %v883 = vmul.f32 %v867, %v868
      %v884 = vmul.f32 %v859, %v868
      %v885 = vadd.f32 %v811, %v869
      %v886 = vadd.f32 %v812, %v870
      %v887 = vadd.f32 %v813, %v871
      %v888 = vadd.f32 %v814, %v872
      %v889 = vadd.f32 %v815, %v873
      %v890 = vadd.f32 %v816, %v874
      %v891 = vadd.f32 %v817, %v875
      %v892 = vadd.f32 %v818, %v876
      %v893 = vadd.f32 %v819, %v877
      %v894 = vadd.f32 %v820, %v878
      %v895 = vadd.f32 %v821, %v879
      %v896 = vadd.f32 %v822, %v880
      %v897 = vadd.f32 %v823, %v881
      %v898 = vadd.f32 %v824, %v882
      %v899 = vadd.f32 %v825, %v883
      %v900 = vadd.f32 %v826, %v884
      %v901 = vld [vmem:[%s534] sm:$0xf]
      %v902 = vld [vmem:[%s534 + $0x4] sm:$0xf]
      %v903 = vld [vmem:[%s534 + $0x8] sm:$0xf]
      %v904 = vld [vmem:[%s534 + $0xc] sm:$0xf]
      %v905 = vld [vmem:[%s534 + $0x10] sm:$0xf]
      %v906 = vld [vmem:[%s534 + $0x14] sm:$0xf]
      %v907 = vld [vmem:[%s534 + $0x18] sm:$0xf]
      %v908 = vld [vmem:[%s534 + $0x1c] sm:$0xf]
      %v909 = vld [vmem:[%s534 + $0x20] sm:$0xf]
      %v910 = vld [vmem:[%s534 + $0x24] sm:$0xf]
      %v911 = vld [vmem:[%s534 + $0x28] sm:$0xf]
      %v912 = vld [vmem:[%s534 + $0x2c] sm:$0xf]
      %v913 = vld [vmem:[%s534 + $0x30] sm:$0xf]
      %v914 = vld [vmem:[%s534 + $0x34] sm:$0xf]
      %v915 = vld [vmem:[%s534 + $0x38] sm:$0xf]
      %v916 = vld [vmem:[%s534 + $0x3c] sm:$0xf]
      %v917 = vld [vmem:[%s534 + $0x40] sm:$0xf]
      %v918 = vld [vmem:[%s534 + $0x44] sm:$0xf]
      %v919 = vld [vmem:[%s534 + $0x48] sm:$0xf]
      %v920 = vld [vmem:[%s534 + $0x4c] sm:$0xf]
      %v921 = vld [vmem:[%s534 + $0x50] sm:$0xf]
      %v922 = vld [vmem:[%s534 + $0x54] sm:$0xf]
      %v923 = vld [vmem:[%s534 + $0x58] sm:$0xf]
      %v924 = vld [vmem:[%s534 + $0x5c] sm:$0xf]
      %v925 = vunpack.c.l.bf16 %v901
      %v926 = vunpack.c.l.bf16 %v902
      %v927 = vunpack.c.l.bf16 %v903
      %v928 = vunpack.c.l.bf16 %v904
      %v929 = vunpack.c.l.bf16 %v905
      %v930 = vunpack.c.l.bf16 %v906
      %v931 = vunpack.c.l.bf16 %v907
      %v932 = vunpack.c.l.bf16 %v908
      %v933 = vunpack.c.l.bf16 %v909
      %v934 = vunpack.c.l.bf16 %v910
      %v935 = vunpack.c.l.bf16 %v911
      %v936 = vunpack.c.l.bf16 %v912
      %v937 = vunpack.c.l.bf16 %v913
      %v938 = vunpack.c.l.bf16 %v914
      %v939 = vunpack.c.l.bf16 %v915
      %v940 = vunpack.c.l.bf16 %v916
      %v941 = vunpack.c.l.bf16 %v917
      %v942 = vunpack.c.l.bf16 %v918
      %v943 = vunpack.c.l.bf16 %v919
      %v944 = vunpack.c.l.bf16 %v920
      %v945 = vunpack.c.l.bf16 %v921
      %v946 = vunpack.c.l.bf16 %v922
      %v947 = vunpack.c.l.bf16 %v923
      %v948 = vunpack.c.l.bf16 %v924
      %v949 = vperm.slane %v668, 4
      %v950 = vmul.f32 %v925, %v949
      %v951 = vmul.f32 %v926, %v949
      %v952 = vmul.f32 %v928, %v949
      %v953 = vmul.f32 %v929, %v949
      %v954 = vmul.f32 %v931, %v949
      %v955 = vmul.f32 %v932, %v949
      %v956 = vmul.f32 %v934, %v949
      %v957 = vmul.f32 %v935, %v949
      %v958 = vmul.f32 %v937, %v949
      %v959 = vmul.f32 %v938, %v949
      %v960 = vmul.f32 %v940, %v949
      %v961 = vmul.f32 %v941, %v949
      %v962 = vmul.f32 %v943, %v949
      %v963 = vmul.f32 %v944, %v949
      %v964 = vmul.f32 %v946, %v949
      %v965 = vmul.f32 %v947, %v949
      %v966 = vadd.f32 %v885, %v950
      %v967 = vadd.f32 %v886, %v951
      %v968 = vadd.f32 %v887, %v952
      %v969 = vadd.f32 %v888, %v953
      %v970 = vadd.f32 %v889, %v954
      %v971 = vadd.f32 %v890, %v955
      %v972 = vadd.f32 %v891, %v956
      %v973 = vadd.f32 %v892, %v957
      %v974 = vadd.f32 %v893, %v958
      %v975 = vadd.f32 %v894, %v959
      %v976 = vadd.f32 %v895, %v960
      %v977 = vadd.f32 %v896, %v961
      %v978 = vadd.f32 %v897, %v962
      %v979 = vadd.f32 %v898, %v963
      %v980 = vadd.f32 %v899, %v964
      %v981 = vadd.f32 %v900, %v965
      %v982 = vrot.slane %v925, 7
      %v983 = vrot.slane %v928, 7
      %v984 = vrot.slane %v931, 7
      %v985 = vrot.slane %v934, 7
      %v986 = vrot.slane %v937, 7
      %v987 = vrot.slane %v940, 7
      %v988 = vrot.slane %v943, 7
      %v989 = vrot.slane %v946, 7
      %v990 = vrot.slane %v926, 7
      %v991 = vrot.slane %v929, 7
      %v992 = vrot.slane %v932, 7
      %v993 = vrot.slane %v935, 7
      %v994 = vrot.slane %v938, 7
      %v995 = vrot.slane %v941, 7
      %v996 = vrot.slane %v944, 7
      %v997 = vrot.slane %v947, 7
      %v998 = vrot.slane %v927, 7
      %v999 = vrot.slane %v930, 7
      %v1000 = vrot.slane %v933, 7
      %v1001 = vrot.slane %v936, 7
      %v1002 = vrot.slane %v939, 7
      %v1003 = vrot.slane %v942, 7
      %v1004 = vrot.slane %v945, 7
      %v1005 = vrot.slane %v948, 7
      %v1006 = vsel %vm777, %v982, %v990
      %v1007 = vsel %vm777, %v983, %v991
      %v1008 = vsel %vm777, %v984, %v992
      %v1009 = vsel %vm777, %v985, %v993
      %v1010 = vsel %vm777, %v986, %v994
      %v1011 = vsel %vm777, %v987, %v995
      %v1012 = vsel %vm777, %v988, %v996
      %v1013 = vsel %vm777, %v989, %v997
      %v1014 = vsel %vm777, %v998, %v982
      %v1015 = vsel %vm777, %v999, %v983
      %v1016 = vsel %vm777, %v1000, %v984
      %v1017 = vsel %vm777, %v1001, %v985
      %v1018 = vsel %vm777, %v1002, %v986
      %v1019 = vsel %vm777, %v1003, %v987
      %v1020 = vsel %vm777, %v1004, %v988
      %v1021 = vsel %vm777, %v1005, %v989
      %v1022 = vperm.slane %v668, 3
      %v1023 = vmul.f32 %v1014, %v1022
      %v1024 = vmul.f32 %v1006, %v1022
      %v1025 = vmul.f32 %v1015, %v1022
      %v1026 = vmul.f32 %v1007, %v1022
      %v1027 = vmul.f32 %v1016, %v1022
      %v1028 = vmul.f32 %v1008, %v1022
      %v1029 = vmul.f32 %v1017, %v1022
      %v1030 = vmul.f32 %v1009, %v1022
      %v1031 = vmul.f32 %v1018, %v1022
      %v1032 = vmul.f32 %v1010, %v1022
      %v1033 = vmul.f32 %v1019, %v1022
      %v1034 = vmul.f32 %v1011, %v1022
      %v1035 = vmul.f32 %v1020, %v1022
      %v1036 = vmul.f32 %v1012, %v1022
      %v1037 = vmul.f32 %v1021, %v1022
      %v1038 = vmul.f32 %v1013, %v1022
      %v1039 = vadd.f32 %v966, %v1023
      %v1040 = vadd.f32 %v967, %v1024
      %v1041 = vadd.f32 %v968, %v1025
      %v1042 = vadd.f32 %v969, %v1026
      %v1043 = vadd.f32 %v970, %v1027
      %v1044 = vadd.f32 %v971, %v1028
      %v1045 = vadd.f32 %v972, %v1029
      %v1046 = vadd.f32 %v973, %v1030
      %v1047 = vadd.f32 %v974, %v1031
      %v1048 = vadd.f32 %v975, %v1032
      %v1049 = vadd.f32 %v976, %v1033
      %v1050 = vadd.f32 %v977, %v1034
      %v1051 = vadd.f32 %v978, %v1035
      %v1052 = vadd.f32 %v979, %v1036
      %v1053 = vadd.f32 %v980, %v1037
      %v1054 = vadd.f32 %v981, %v1038
      %v1055 = vrot.slane %v925, 1
      %v1056 = vrot.slane %v928, 1
      %v1057 = vrot.slane %v931, 1
      %v1058 = vrot.slane %v934, 1
      %v1059 = vrot.slane %v937, 1
      %v1060 = vrot.slane %v940, 1
      %v1061 = vrot.slane %v943, 1
      %v1062 = vrot.slane %v946, 1
      %v1063 = vrot.slane %v926, 1
      %v1064 = vrot.slane %v929, 1
      %v1065 = vrot.slane %v932, 1
      %v1066 = vrot.slane %v935, 1
      %v1067 = vrot.slane %v938, 1
      %v1068 = vrot.slane %v941, 1
      %v1069 = vrot.slane %v944, 1
      %v1070 = vrot.slane %v947, 1
      %v1071 = vrot.slane %v927, 1
      %v1072 = vrot.slane %v930, 1
      %v1073 = vrot.slane %v933, 1
      %v1074 = vrot.slane %v936, 1
      %v1075 = vrot.slane %v939, 1
      %v1076 = vrot.slane %v942, 1
      %v1077 = vrot.slane %v945, 1
      %v1078 = vrot.slane %v948, 1
      %v1079 = vsel %vm851, %v1063, %v1071
      %v1080 = vsel %vm851, %v1064, %v1072
      %v1081 = vsel %vm851, %v1065, %v1073
      %v1082 = vsel %vm851, %v1066, %v1074
      %v1083 = vsel %vm851, %v1067, %v1075
      %v1084 = vsel %vm851, %v1068, %v1076
      %v1085 = vsel %vm851, %v1069, %v1077
      %v1086 = vsel %vm851, %v1070, %v1078
      %v1087 = vsel %vm851, %v1055, %v1063
      %v1088 = vsel %vm851, %v1056, %v1064
      %v1089 = vsel %vm851, %v1057, %v1065
      %v1090 = vsel %vm851, %v1058, %v1066
      %v1091 = vsel %vm851, %v1059, %v1067
      %v1092 = vsel %vm851, %v1060, %v1068
      %v1093 = vsel %vm851, %v1061, %v1069
      %v1094 = vsel %vm851, %v1062, %v1070
      %v1095 = vperm.slane %v668, 5
      %v1096 = vmul.f32 %v1087, %v1095
      %v1097 = vmul.f32 %v1079, %v1095
      %v1098 = vmul.f32 %v1088, %v1095
      %v1099 = vmul.f32 %v1080, %v1095
      %v1100 = vmul.f32 %v1089, %v1095
      %v1101 = vmul.f32 %v1081, %v1095
      %v1102 = vmul.f32 %v1090, %v1095
      %v1103 = vmul.f32 %v1082, %v1095
      %v1104 = vmul.f32 %v1091, %v1095
      %v1105 = vmul.f32 %v1083, %v1095
      %v1106 = vmul.f32 %v1092, %v1095
      %v1107 = vmul.f32 %v1084, %v1095
      %v1108 = vmul.f32 %v1093, %v1095
      %v1109 = vmul.f32 %v1085, %v1095
      %v1110 = vmul.f32 %v1094, %v1095
      %v1111 = vmul.f32 %v1086, %v1095
      %v1112 = vadd.f32 %v1039, %v1096
      %v1113 = vadd.f32 %v1040, %v1097
      %v1114 = vadd.f32 %v1041, %v1098
      %v1115 = vadd.f32 %v1042, %v1099
      %v1116 = vadd.f32 %v1043, %v1100
      %v1117 = vadd.f32 %v1044, %v1101
      %v1118 = vadd.f32 %v1045, %v1102
      %v1119 = vadd.f32 %v1046, %v1103
      %v1120 = vadd.f32 %v1047, %v1104
      %v1121 = vadd.f32 %v1048, %v1105
      %v1122 = vadd.f32 %v1049, %v1106
      %v1123 = vadd.f32 %v1050, %v1107
      %v1124 = vadd.f32 %v1051, %v1108
      %v1125 = vadd.f32 %v1052, %v1109
      %v1126 = vadd.f32 %v1053, %v1110
      %v1127 = vadd.f32 %v1054, %v1111
      %s1128 = scalar_lea.vmem [#allocation2], 24
      %v1129 = vld [vmem:[%s1128] sm:$0xf]
      %v1130 = vld [vmem:[%s1128 + $0x4] sm:$0xf]
      %v1131 = vld [vmem:[%s1128 + $0x8] sm:$0xf]
      %v1132 = vld [vmem:[%s1128 + $0xc] sm:$0xf]
      %v1133 = vld [vmem:[%s1128 + $0x10] sm:$0xf]
      %v1134 = vld [vmem:[%s1128 + $0x14] sm:$0xf]
      %v1135 = vld [vmem:[%s1128 + $0x18] sm:$0xf]
      %v1136 = vld [vmem:[%s1128 + $0x1c] sm:$0xf]
      %v1137 = vld [vmem:[%s1128 + $0x20] sm:$0xf]
      %v1138 = vld [vmem:[%s1128 + $0x24] sm:$0xf]
      %v1139 = vld [vmem:[%s1128 + $0x28] sm:$0xf]
      %v1140 = vld [vmem:[%s1128 + $0x2c] sm:$0xf]
      %v1141 = vld [vmem:[%s1128 + $0x30] sm:$0xf]
      %v1142 = vld [vmem:[%s1128 + $0x34] sm:$0xf]
      %v1143 = vld [vmem:[%s1128 + $0x38] sm:$0xf]
      %v1144 = vld [vmem:[%s1128 + $0x3c] sm:$0xf]
      %v1145 = vld [vmem:[%s1128 + $0x40] sm:$0xf]
      %v1146 = vld [vmem:[%s1128 + $0x44] sm:$0xf]
      %v1147 = vld [vmem:[%s1128 + $0x48] sm:$0xf]
      %v1148 = vld [vmem:[%s1128 + $0x4c] sm:$0xf]
      %v1149 = vld [vmem:[%s1128 + $0x50] sm:$0xf]
      %v1150 = vld [vmem:[%s1128 + $0x54] sm:$0xf]
      %v1151 = vld [vmem:[%s1128 + $0x58] sm:$0xf]
      %v1152 = vld [vmem:[%s1128 + $0x5c] sm:$0xf]
      %v1153 = vunpack.c.l.bf16 %v1129
      %v1154 = vunpack.c.l.bf16 %v1130
      %v1155 = vunpack.c.l.bf16 %v1131
      %v1156 = vunpack.c.l.bf16 %v1132
      %v1157 = vunpack.c.l.bf16 %v1133
      %v1158 = vunpack.c.l.bf16 %v1134
      %v1159 = vunpack.c.l.bf16 %v1135
      %v1160 = vunpack.c.l.bf16 %v1136
      %v1161 = vunpack.c.l.bf16 %v1137
      %v1162 = vunpack.c.l.bf16 %v1138
      %v1163 = vunpack.c.l.bf16 %v1139
      %v1164 = vunpack.c.l.bf16 %v1140
      %v1165 = vunpack.c.l.bf16 %v1141
      %v1166 = vunpack.c.l.bf16 %v1142
      %v1167 = vunpack.c.l.bf16 %v1143
      %v1168 = vunpack.c.l.bf16 %v1144
      %v1169 = vunpack.c.l.bf16 %v1145
      %v1170 = vunpack.c.l.bf16 %v1146
      %v1171 = vunpack.c.l.bf16 %v1147
      %v1172 = vunpack.c.l.bf16 %v1148
      %v1173 = vunpack.c.l.bf16 %v1149
      %v1174 = vunpack.c.l.bf16 %v1150
      %v1175 = vunpack.c.l.bf16 %v1151
      %v1176 = vunpack.c.l.bf16 %v1152
      %v1177 = vperm.slane %v668, 7
      %v1178 = vmul.f32 %v1153, %v1177
      %v1179 = vmul.f32 %v1154, %v1177
      %v1180 = vmul.f32 %v1156, %v1177
      %v1181 = vmul.f32 %v1157, %v1177
      %v1182 = vmul.f32 %v1159, %v1177
      %v1183 = vmul.f32 %v1160, %v1177
      %v1184 = vmul.f32 %v1162, %v1177
      %v1185 = vmul.f32 %v1163, %v1177
      %v1186 = vmul.f32 %v1165, %v1177
      %v1187 = vmul.f32 %v1166, %v1177
      %v1188 = vmul.f32 %v1168, %v1177
      %v1189 = vmul.f32 %v1169, %v1177
      %v1190 = vmul.f32 %v1171, %v1177
      %v1191 = vmul.f32 %v1172, %v1177
      %v1192 = vmul.f32 %v1174, %v1177
      %v1193 = vmul.f32 %v1175, %v1177
      %v1194 = vadd.f32 %v1112, %v1178
      %v1195 = vadd.f32 %v1113, %v1179
      %v1196 = vadd.f32 %v1114, %v1180
      %v1197 = vadd.f32 %v1115, %v1181
      %v1198 = vadd.f32 %v1116, %v1182
      %v1199 = vadd.f32 %v1117, %v1183
      %v1200 = vadd.f32 %v1118, %v1184
      %v1201 = vadd.f32 %v1119, %v1185
      %v1202 = vadd.f32 %v1120, %v1186
      %v1203 = vadd.f32 %v1121, %v1187
      %v1204 = vadd.f32 %v1122, %v1188
      %v1205 = vadd.f32 %v1123, %v1189
      %v1206 = vadd.f32 %v1124, %v1190
      %v1207 = vadd.f32 %v1125, %v1191
      %v1208 = vadd.f32 %v1126, %v1192
      %v1209 = vadd.f32 %v1127, %v1193
      %v1210 = vrot.slane %v1153, 7
      %v1211 = vrot.slane %v1156, 7
      %v1212 = vrot.slane %v1159, 7
      %v1213 = vrot.slane %v1162, 7
      %v1214 = vrot.slane %v1165, 7
      %v1215 = vrot.slane %v1168, 7
      %v1216 = vrot.slane %v1171, 7
      %v1217 = vrot.slane %v1174, 7
      %v1218 = vrot.slane %v1154, 7
      %v1219 = vrot.slane %v1157, 7
      %v1220 = vrot.slane %v1160, 7
      %v1221 = vrot.slane %v1163, 7
      %v1222 = vrot.slane %v1166, 7
      %v1223 = vrot.slane %v1169, 7
      %v1224 = vrot.slane %v1172, 7
      %v1225 = vrot.slane %v1175, 7
      %v1226 = vrot.slane %v1155, 7
      %v1227 = vrot.slane %v1158, 7
      %v1228 = vrot.slane %v1161, 7
      %v1229 = vrot.slane %v1164, 7
      %v1230 = vrot.slane %v1167, 7
      %v1231 = vrot.slane %v1170, 7
      %v1232 = vrot.slane %v1173, 7
      %v1233 = vrot.slane %v1176, 7
      %v1234 = vsel %vm777, %v1210, %v1218
      %v1235 = vsel %vm777, %v1211, %v1219
      %v1236 = vsel %vm777, %v1212, %v1220
      %v1237 = vsel %vm777, %v1213, %v1221
      %v1238 = vsel %vm777, %v1214, %v1222
      %v1239 = vsel %vm777, %v1215, %v1223
      %v1240 = vsel %vm777, %v1216, %v1224
      %v1241 = vsel %vm777, %v1217, %v1225
      %v1242 = vsel %vm777, %v1226, %v1210
      %v1243 = vsel %vm777, %v1227, %v1211
      %v1244 = vsel %vm777, %v1228, %v1212
      %v1245 = vsel %vm777, %v1229, %v1213
      %v1246 = vsel %vm777, %v1230, %v1214
      %v1247 = vsel %vm777, %v1231, %v1215
      %v1248 = vsel %vm777, %v1232, %v1216
      %v1249 = vsel %vm777, %v1233, %v1217
      %v1250 = vperm.slane %v668, 6
      %v1251 = vmul.f32 %v1242, %v1250
      %v1252 = vmul.f32 %v1234, %v1250
      %v1253 = vmul.f32 %v1243, %v1250
      %v1254 = vmul.f32 %v1235, %v1250
      %v1255 = vmul.f32 %v1244, %v1250
      %v1256 = vmul.f32 %v1236, %v1250
      %v1257 = vmul.f32 %v1245, %v1250
      %v1258 = vmul.f32 %v1237, %v1250
      %v1259 = vmul.f32 %v1246, %v1250
      %v1260 = vmul.f32 %v1238, %v1250
      %v1261 = vmul.f32 %v1247, %v1250
      %v1262 = vmul.f32 %v1239, %v1250
      %v1263 = vmul.f32 %v1248, %v1250
      %v1264 = vmul.f32 %v1240, %v1250
      %v1265 = vmul.f32 %v1249, %v1250
      %v1266 = vmul.f32 %v1241, %v1250
      %v1267 = vadd.f32 %v1194, %v1251
      %v1268 = vadd.f32 %v1195, %v1252
      %v1269 = vadd.f32 %v1196, %v1253
      %v1270 = vadd.f32 %v1197, %v1254
      %v1271 = vadd.f32 %v1198, %v1255
      %v1272 = vadd.f32 %v1199, %v1256
      %v1273 = vadd.f32 %v1200, %v1257
      %v1274 = vadd.f32 %v1201, %v1258
      %v1275 = vadd.f32 %v1202, %v1259
      %v1276 = vadd.f32 %v1203, %v1260
      %v1277 = vadd.f32 %v1204, %v1261
      %v1278 = vadd.f32 %v1205, %v1262
      %v1279 = vadd.f32 %v1206, %v1263
      %v1280 = vadd.f32 %v1207, %v1264
      %v1281 = vadd.f32 %v1208, %v1265
      %v1282 = vadd.f32 %v1209, %v1266
      %v1283 = vrot.slane %v1153, 1
      %v1284 = vrot.slane %v1156, 1
      %v1285 = vrot.slane %v1159, 1
      %v1286 = vrot.slane %v1162, 1
      %v1287 = vrot.slane %v1165, 1
      %v1288 = vrot.slane %v1168, 1
      %v1289 = vrot.slane %v1171, 1
      %v1290 = vrot.slane %v1174, 1
      %v1291 = vrot.slane %v1154, 1
      %v1292 = vrot.slane %v1157, 1
      %v1293 = vrot.slane %v1160, 1
      %v1294 = vrot.slane %v1163, 1
      %v1295 = vrot.slane %v1166, 1
      %v1296 = vrot.slane %v1169, 1
      %v1297 = vrot.slane %v1172, 1
      %v1298 = vrot.slane %v1175, 1
      %v1299 = vrot.slane %v1155, 1
      %v1300 = vrot.slane %v1158, 1
      %v1301 = vrot.slane %v1161, 1
      %v1302 = vrot.slane %v1164, 1
      %v1303 = vrot.slane %v1167, 1
      %v1304 = vrot.slane %v1170, 1
      %v1305 = vrot.slane %v1173, 1
      %v1306 = vrot.slane %v1176, 1
      %v1307 = vsel %vm851, %v1291, %v1299
      %v1308 = vsel %vm851, %v1292, %v1300
      %v1309 = vsel %vm851, %v1293, %v1301
      %v1310 = vsel %vm851, %v1294, %v1302
      %v1311 = vsel %vm851, %v1295, %v1303
      %v1312 = vsel %vm851, %v1296, %v1304
      %v1313 = vsel %vm851, %v1297, %v1305
      %v1314 = vsel %vm851, %v1298, %v1306
      %v1315 = vsel %vm851, %v1283, %v1291
      %v1316 = vsel %vm851, %v1284, %v1292
      %v1317 = vsel %vm851, %v1285, %v1293
      %v1318 = vsel %vm851, %v1286, %v1294
      %v1319 = vsel %vm851, %v1287, %v1295
      %v1320 = vsel %vm851, %v1288, %v1296
      %v1321 = vsel %vm851, %v1289, %v1297
      %v1322 = vsel %vm851, %v1290, %v1298
      %v1323 = vperm.slane %v669, 0
      %v1324 = vmul.f32 %v1315, %v1323
      %v1325 = vmul.f32 %v1307, %v1323
      %v1326 = vmul.f32 %v1316, %v1323
      %v1327 = vmul.f32 %v1308, %v1323
      %v1328 = vmul.f32 %v1317, %v1323
      %v1329 = vmul.f32 %v1309, %v1323
      %v1330 = vmul.f32 %v1318, %v1323
      %v1331 = vmul.f32 %v1310, %v1323
      %v1332 = vmul.f32 %v1319, %v1323
      %v1333 = vmul.f32 %v1311, %v1323
      %v1334 = vmul.f32 %v1320, %v1323
      %v1335 = vmul.f32 %v1312, %v1323
      %v1336 = vmul.f32 %v1321, %v1323
      %v1337 = vmul.f32 %v1313, %v1323
      %v1338 = vmul.f32 %v1322, %v1323
      %v1339 = vmul.f32 %v1314, %v1323
      %v1340 = vadd.f32 %v1267, %v1324
      %v1341 = vadd.f32 %v1268, %v1325
      %v1342 = vadd.f32 %v1269, %v1326
      %v1343 = vadd.f32 %v1270, %v1327
      %v1344 = vadd.f32 %v1271, %v1328
      %v1345 = vadd.f32 %v1272, %v1329
      %v1346 = vadd.f32 %v1273, %v1330
      %v1347 = vadd.f32 %v1274, %v1331
      %v1348 = vadd.f32 %v1275, %v1332
      %v1349 = vadd.f32 %v1276, %v1333
      %v1350 = vadd.f32 %v1277, %v1334
      %v1351 = vadd.f32 %v1278, %v1335
      %v1352 = vadd.f32 %v1279, %v1336
      %v1353 = vadd.f32 %v1280, %v1337
      %v1354 = vadd.f32 %v1281, %v1338
      %v1355 = vadd.f32 %v1282, %v1339
      %v1356 = vld [vmem:[%s4] sm:$0x1]
      %v1358 = vperm.slane %v1356, 0
      %v1360 = vadd.f32 %v1340, %v1358
      %v1361 = vadd.f32 %v1341, %v1358
      %v1362 = vadd.f32 %v1342, %v1358
      %v1363 = vadd.f32 %v1343, %v1358
      %v1364 = vadd.f32 %v1344, %v1358
      %v1365 = vadd.f32 %v1345, %v1358
      %v1366 = vadd.f32 %v1346, %v1358
      %v1367 = vadd.f32 %v1347, %v1358
      %v1368 = vadd.f32 %v1348, %v1358
      %v1369 = vadd.f32 %v1349, %v1358
      %v1370 = vadd.f32 %v1350, %v1358
      %v1371 = vadd.f32 %v1351, %v1358
      %v1372 = vadd.f32 %v1352, %v1358
      %v1373 = vadd.f32 %v1353, %v1358
      %v1374 = vadd.f32 %v1354, %v1358
      %v1375 = vadd.f32 %v1355, %v1358
      %v1376 = vmax.f32 %v1360, 0.0
      %v1377 = vmax.f32 %v1361, 0.0
      %v1378 = vmax.f32 %v1362, 0.0
      %v1379 = vmax.f32 %v1363, 0.0
      %v1380 = vmax.f32 %v1364, 0.0
      %v1381 = vmax.f32 %v1365, 0.0
      %v1382 = vmax.f32 %v1366, 0.0
      %v1383 = vmax.f32 %v1367, 0.0
      %v1384 = vmax.f32 %v1368, 0.0
      %v1385 = vmax.f32 %v1369, 0.0
      %v1386 = vmax.f32 %v1370, 0.0
      %v1387 = vmax.f32 %v1371, 0.0
      %v1388 = vmax.f32 %v1372, 0.0
      %v1389 = vmax.f32 %v1373, 0.0
      %v1390 = vmax.f32 %v1374, 0.0
      %v1391 = vmax.f32 %v1375, 0.0
      %v1392 = vmin.f32 %v1376, 6.0
      %v1393 = vmin.f32 %v1377, 6.0
      %v1394 = vmin.f32 %v1378, 6.0
      %v1395 = vmin.f32 %v1379, 6.0
      %v1396 = vmin.f32 %v1380, 6.0
      %v1397 = vmin.f32 %v1381, 6.0
      %v1398 = vmin.f32 %v1382, 6.0
      %v1399 = vmin.f32 %v1383, 6.0
      %v1400 = vmin.f32 %v1384, 6.0
      %v1401 = vmin.f32 %v1385, 6.0
      %v1402 = vmin.f32 %v1386, 6.0
      %v1403 = vmin.f32 %v1387, 6.0
      %v1404 = vmin.f32 %v1388, 6.0
      %v1405 = vmin.f32 %v1389, 6.0
      %v1406 = vmin.f32 %v1390, 6.0
      %v1407 = vmin.f32 %v1391, 6.0
      %v1408 = vpack.c.bf16 %v1393, %v1392
      %v1409 = vpack.c.bf16 %v1395, %v1394
      %v1410 = vpack.c.bf16 %v1397, %v1396
      %v1411 = vpack.c.bf16 %v1399, %v1398
      %v1412 = vpack.c.bf16 %v1401, %v1400
      %v1413 = vpack.c.bf16 %v1403, %v1402
      %v1414 = vpack.c.bf16 %v1405, %v1404
      %v1415 = vpack.c.bf16 %v1407, %v1406
      %v1416 = vld [vmem:[%s6] sm:$0xf]
      %v1417 = vld [vmem:[%s6 + $0x4] sm:$0xf]
      %v1418 = vld [vmem:[%s6 + $0x8] sm:$0xf]
      %v1419 = vld [vmem:[%s6 + $0xc] sm:$0xf]
      %v1420 = vld [vmem:[%s6 + $0x10] sm:$0xf]
      %v1421 = vld [vmem:[%s6 + $0x14] sm:$0xf]
      %v1422 = vld [vmem:[%s6 + $0x18] sm:$0xf]
      %v1423 = vld [vmem:[%s6 + $0x1c] sm:$0xf]
      %v1424 = vld [vmem:[%s6 + $0x20] sm:$0xf]
      %v1425 = vld [vmem:[%s6 + $0x24] sm:$0xf]
      %v1426 = vld [vmem:[%s6 + $0x28] sm:$0xf]
      %v1427 = vld [vmem:[%s6 + $0x2c] sm:$0xf]
      %v1428 = vld [vmem:[%s6 + $0x30] sm:$0xf]
      %v1429 = vld [vmem:[%s6 + $0x34] sm:$0xf]
      %v1430 = vld [vmem:[%s6 + $0x38] sm:$0xf]
      %v1431 = vld [vmem:[%s6 + $0x3c] sm:$0xf]
      %v1432 = vld [vmem:[%s5] sm:$0xf]
      %v1433 = vld [vmem:[%s5 + $0x4] sm:$0xf]
      %v1434 = vld [vmem:[%s5 + $0x8] sm:$0xf]
      %v1435 = vld [vmem:[%s5 + $0xc] sm:$0xf]
      %v1440 = vunpack.c.l.b16 %v1432
      %v1441 = vunpack.c.l.b16 %v1433
      %v1442 = vunpack.c.l.b16 %v1434
      %v1443 = vunpack.c.l.b16 %v1435
      %v1444 = vpack.c.b16 %v1441, %v1440
      %v1445 = vpack.c.b16 %v1443, %v1442
      %1448 = vmatpush.bf16.msra.mxu0 0
      %1449 = vmatpush.bf16.msra.mxu0 0
      %1450 = vmatpush.bf16.msra.mxu0 0
      %1451 = vmatpush.bf16.msra.mxu0 0
      %1452 = vmatpush.bf16.msra.mxu0 0
      %1453 = vmatpush.bf16.msra.mxu0 0
      %1454 = vmatpush.bf16.msra.mxu0 %v1445
      %1455 = vmatpush.bf16.msra.mxu0 %v1444
      %1456 = vmatmul.bf16.gmra.mxu0 %v414
      %v1457 = vpop.f32.mrf.mxu0
      %v1458 = vadd.f32 0.0, %v1457
      %v1459 = vpop.f32.mrf.mxu0
      %v1460 = vadd.f32 0.0, %v1459
      %1461 = vmatmul.bf16.gmra.mxu0 %v417
      %v1462 = vpop.f32.mrf.mxu0
      %v1463 = vadd.f32 0.0, %v1462
      %v1464 = vpop.f32.mrf.mxu0
      %v1465 = vadd.f32 0.0, %v1464
      %1466 = vmatmul.bf16.gmra.mxu0 %v420
      %v1467 = vpop.f32.mrf.mxu0
      %v1468 = vadd.f32 0.0, %v1467
      %v1469 = vpop.f32.mrf.mxu0
      %v1470 = vadd.f32 0.0, %v1469
      %1471 = vmatmul.bf16.gmra.mxu0 %v423
      %v1472 = vpop.f32.mrf.mxu0
      %v1473 = vadd.f32 0.0, %v1472
      %v1474 = vpop.f32.mrf.mxu0
      %v1475 = vadd.f32 0.0, %v1474
      %1476 = vmatmul.bf16.gmra.mxu0 %v426
      %v1477 = vpop.f32.mrf.mxu0
      %v1478 = vadd.f32 0.0, %v1477
      %v1479 = vpop.f32.mrf.mxu0
      %v1480 = vadd.f32 0.0, %v1479
      %1481 = vmatmul.bf16.gmra.mxu0 %v429
      %v1482 = vpop.f32.mrf.mxu0
      %v1483 = vadd.f32 0.0, %v1482
      %v1484 = vpop.f32.mrf.mxu0
      %v1485 = vadd.f32 0.0, %v1484
      %1486 = vmatmul.bf16.gmra.mxu0 %v432
      %v1487 = vpop.f32.mrf.mxu0
      %v1488 = vadd.f32 0.0, %v1487
      %v1489 = vpop.f32.mrf.mxu0
      %v1490 = vadd.f32 0.0, %v1489
      %1491 = vmatmul.bf16.gmra.mxu0 %v435
      %v1492 = vpop.f32.mrf.mxu0
      %v1493 = vadd.f32 0.0, %v1492
      %v1494 = vpop.f32.mrf.mxu0
      %v1495 = vadd.f32 0.0, %v1494
      %1496 = vdwg.mxu0
      %v1513 = vunpack.c.l.b16 %v1416
      %v1514 = vunpack.c.l.b16 %v1417
      %v1515 = vunpack.c.l.b16 %v1418
      %v1516 = vunpack.c.l.b16 %v1419
      %v1517 = vunpack.c.l.b16 %v1420
      %v1518 = vunpack.c.l.b16 %v1421
      %v1519 = vunpack.c.l.b16 %v1422
      %v1520 = vunpack.c.l.b16 %v1423
      %v1521 = vunpack.c.l.b16 %v1424
      %v1522 = vunpack.c.l.b16 %v1425
      %v1523 = vunpack.c.l.b16 %v1426
      %v1524 = vunpack.c.l.b16 %v1427
      %v1525 = vunpack.c.l.b16 %v1428
      %v1526 = vunpack.c.l.b16 %v1429
      %v1527 = vunpack.c.l.b16 %v1430
      %v1528 = vunpack.c.l.b16 %v1431
      %v1529 = vpack.c.b16 %v1514, %v1513
      %v1530 = vpack.c.b16 %v1516, %v1515
      %v1531 = vpack.c.b16 %v1518, %v1517
      %v1532 = vpack.c.b16 %v1520, %v1519
      %v1533 = vpack.c.b16 %v1522, %v1521
      %v1534 = vpack.c.b16 %v1524, %v1523
      %v1535 = vpack.c.b16 %v1526, %v1525
      %v1536 = vpack.c.b16 %v1528, %v1527
      %1545 = vmatpush.bf16.msra.mxu0 %v1536
      %1546 = vmatpush.bf16.msra.mxu0 %v1535
      %1547 = vmatpush.bf16.msra.mxu0 %v1534
      %1548 = vmatpush.bf16.msra.mxu0 %v1533
      %1549 = vmatpush.bf16.msra.mxu0 %v1532
      %1550 = vmatpush.bf16.msra.mxu0 %v1531
      %1551 = vmatpush.bf16.msra.mxu0 %v1530
      %1552 = vmatpush.bf16.msra.mxu0 %v1529
      %1553 = vmatmul.bf16.gmra.mxu0 %v1408
      %v1554 = vpop.f32.mrf.mxu0
      %v1555 = vadd.f32 %v1458, %v1554
      %v1556 = vpop.f32.mrf.mxu0
      %v1557 = vadd.f32 %v1460, %v1556
      %1558 = vmatmul.bf16.gmra.mxu0 %v1409
      %v1559 = vpop.f32.mrf.mxu0
      %v1560 = vadd.f32 %v1463, %v1559
      %v1561 = vpop.f32.mrf.mxu0
      %v1562 = vadd.f32 %v1465, %v1561
      %1563 = vmatmul.bf16.gmra.mxu0 %v1410
      %v1564 = vpop.f32.mrf.mxu0
      %v1565 = vadd.f32 %v1468, %v1564
      %v1566 = vpop.f32.mrf.mxu0
      %v1567 = vadd.f32 %v1470, %v1566
      %1568 = vmatmul.bf16.gmra.mxu0 %v1411
      %v1569 = vpop.f32.mrf.mxu0
      %v1570 = vadd.f32 %v1473, %v1569
      %v1571 = vpop.f32.mrf.mxu0
      %v1572 = vadd.f32 %v1475, %v1571
      %1573 = vmatmul.bf16.gmra.mxu0 %v1412
      %v1574 = vpop.f32.mrf.mxu0
      %v1575 = vadd.f32 %v1478, %v1574
      %v1576 = vpop.f32.mrf.mxu0
      %v1577 = vadd.f32 %v1480, %v1576
      %1578 = vmatmul.bf16.gmra.mxu0 %v1413
      %v1579 = vpop.f32.mrf.mxu0
      %v1580 = vadd.f32 %v1483, %v1579
      %v1581 = vpop.f32.mrf.mxu0
      %v1582 = vadd.f32 %v1485, %v1581
      %1583 = vmatmul.bf16.gmra.mxu0 %v1414
      %v1584 = vpop.f32.mrf.mxu0
      %v1585 = vadd.f32 %v1488, %v1584
      %v1586 = vpop.f32.mrf.mxu0
      %v1587 = vadd.f32 %v1490, %v1586
      %1588 = vmatmul.bf16.gmra.mxu0 %v1415
      %v1589 = vpop.f32.mrf.mxu0
      %v1590 = vadd.f32 %v1493, %v1589
      %v1591 = vpop.f32.mrf.mxu0
      %v1592 = vadd.f32 %v1495, %v1591
      %1593 = vdwg.mxu0
      %v1594 = vld [vmem:[%s7] sm:$0x1]
      %v1596 = vperm.slane %v1594, 0
      %v1598 = vadd.f32 %v1555, %v1596
      %v1599 = vadd.f32 %v1557, %v1596
      %v1600 = vadd.f32 %v1560, %v1596
      %v1601 = vadd.f32 %v1562, %v1596
      %v1602 = vadd.f32 %v1565, %v1596
      %v1603 = vadd.f32 %v1567, %v1596
      %v1604 = vadd.f32 %v1570, %v1596
      %v1605 = vadd.f32 %v1572, %v1596
      %v1606 = vadd.f32 %v1575, %v1596
      %v1607 = vadd.f32 %v1577, %v1596
      %v1608 = vadd.f32 %v1580, %v1596
      %v1609 = vadd.f32 %v1582, %v1596
      %v1610 = vadd.f32 %v1585, %v1596
      %v1611 = vadd.f32 %v1587, %v1596
      %v1612 = vadd.f32 %v1590, %v1596
      %v1613 = vadd.f32 %v1592, %v1596
      %v1614 = vmax.f32 %v1598, 0.0
      %v1615 = vmax.f32 %v1599, 0.0
      %v1616 = vmax.f32 %v1600, 0.0
      %v1617 = vmax.f32 %v1601, 0.0
      %v1618 = vmax.f32 %v1602, 0.0
      %v1619 = vmax.f32 %v1603, 0.0
      %v1620 = vmax.f32 %v1604, 0.0
      %v1621 = vmax.f32 %v1605, 0.0
      %v1622 = vmax.f32 %v1606, 0.0
      %v1623 = vmax.f32 %v1607, 0.0
      %v1624 = vmax.f32 %v1608, 0.0
      %v1625 = vmax.f32 %v1609, 0.0
      %v1626 = vmax.f32 %v1610, 0.0
      %v1627 = vmax.f32 %v1611, 0.0
      %v1628 = vmax.f32 %v1612, 0.0
      %v1629 = vmax.f32 %v1613, 0.0
      %v1630 = vmin.f32 %v1614, 6.0
      %v1631 = vmin.f32 %v1615, 6.0
      %v1632 = vmin.f32 %v1616, 6.0
      %v1633 = vmin.f32 %v1617, 6.0
      %v1634 = vmin.f32 %v1618, 6.0
      %v1635 = vmin.f32 %v1619, 6.0
      %v1636 = vmin.f32 %v1620, 6.0
      %v1637 = vmin.f32 %v1621, 6.0
      %v1638 = vmin.f32 %v1622, 6.0
      %v1639 = vmin.f32 %v1623, 6.0
      %v1640 = vmin.f32 %v1624, 6.0
      %v1641 = vmin.f32 %v1625, 6.0
      %v1642 = vmin.f32 %v1626, 6.0
      %v1643 = vmin.f32 %v1627, 6.0
      %v1644 = vmin.f32 %v1628, 6.0
      %v1645 = vmin.f32 %v1629, 6.0
      %v1646 = vpack.c.bf16 %v1630, %v1630
      %v1647 = vpack.c.bf16 %v1631, %v1631
      %v1648 = vpack.c.bf16 %v1632, %v1632
      %v1649 = vpack.c.bf16 %v1633, %v1633
      %v1650 = vpack.c.bf16 %v1634, %v1634
      %v1651 = vpack.c.bf16 %v1635, %v1635
      %v1652 = vpack.c.bf16 %v1636, %v1636
      %v1653 = vpack.c.bf16 %v1637, %v1637
      %v1654 = vpack.c.bf16 %v1638, %v1638
      %v1655 = vpack.c.bf16 %v1639, %v1639
      %v1656 = vpack.c.bf16 %v1640, %v1640
      %v1657 = vpack.c.bf16 %v1641, %v1641
      %v1658 = vpack.c.bf16 %v1642, %v1642
      %v1659 = vpack.c.bf16 %v1643, %v1643
      %v1660 = vpack.c.bf16 %v1644, %v1644
      %v1661 = vpack.c.bf16 %v1645, %v1645
      %1662 = vst [vmem:[%s329] sm:$0xf] %v1646
      %1663 = vst [vmem:[%s329 + $0x4] sm:$0xf] %v1647
      %1664 = vst [vmem:[%s329 + $0x8] sm:$0xf] %v1648
      %1665 = vst [vmem:[%s329 + $0xc] sm:$0xf] %v1649
      %1666 = vst [vmem:[%s329 + $0x10] sm:$0xf] %v1650
      %1667 = vst [vmem:[%s329 + $0x14] sm:$0xf] %v1651
      %1668 = vst [vmem:[%s329 + $0x18] sm:$0xf] %v1652
      %1669 = vst [vmem:[%s329 + $0x1c] sm:$0xf] %v1653
      %1670 = vst [vmem:[%s329 + $0x20] sm:$0xf] %v1654
      %1671 = vst [vmem:[%s329 + $0x24] sm:$0xf] %v1655
      %1672 = vst [vmem:[%s329 + $0x28] sm:$0xf] %v1656
      %1673 = vst [vmem:[%s329 + $0x2c] sm:$0xf] %v1657
      %1674 = vst [vmem:[%s329 + $0x30] sm:$0xf] %v1658
      %1675 = vst [vmem:[%s329 + $0x34] sm:$0xf] %v1659
      %1676 = vst [vmem:[%s329 + $0x38] sm:$0xf] %v1660
      %1677 = vst [vmem:[%s329 + $0x3c] sm:$0xf] %v1661
      %s1678 = smul.u32 8, %s24
      %p1679 = scmp.lt.s32.totalorder %s23, 1
      %s1680 = scalar_select %p1679, %s23, 1
      %p1681 = scmp.lt.s32.totalorder %s1678, 15
      %s1682 = scalar_select %p1681, %s1678, 15
      %s1683 = smul.addr %s1682, 2
      %s1684 = smul.addr %s1680, 32
      %s1685 = sadd.s32 %s1683, %s1684
      %s1686 = smul.addr %s1685, 4
      %s1687 = scalar_lea.vmem %s8, %s1686
      // Predicated region
      $region53: #{eblite4_forward.4} parent=51 // pred_check
        %p1688 = pneg %p224
      $region54: #{eblite4_forward.4} parent=51 // pred_check_branch
        %1690 = sbr.rel (%p1688) target = $region56
      $region55: #{eblite4_forward.4} parent=51 // pred_region
        %s1691 = smul.u32 8, %s24
      $region56: #{eblite4_forward.4} parent=51 // pred_fallthru
        _
    $region52: #{eblite4_forward.4} parent=5 // pred_fallthru
      _
    %p1692 = scmp.le.s32.totalorder 2, %s14
    // Predicated region
    $region57: #{eblite4_forward.4} parent=5 // pred_check
      %p1693 = pneg %p1692
    $region58: #{eblite4_forward.4} parent=5 // pred_check_branch
      %1695 = sbr.rel (%p1693) target = $region60
    $region59: #{eblite4_forward.4} parent=5 // pred_region
      %s1696 = ssub.s32 %s14, 2
      // Predicated region
      $region61: #{eblite4_forward.4} parent=59 // pred_check
        %p1697 = pneg %p230
      $region62: #{eblite4_forward.4} parent=59 // pred_check_branch
        %1699 = sbr.rel (%p1697) target = $region64
      $region63: #{eblite4_forward.4} parent=59 // pred_region
        %s1700 = smul.u32 8, %s26
        %p1701 = scmp.lt.s32.totalorder %s25, 1
        %s1702 = scalar_select %p1701, %s25, 1
        %p1703 = scmp.lt.s32.totalorder %s1700, 15
        %s1704 = scalar_select %p1703, %s1700, 15
        %s1705 = smul.addr %s1704, 2
        %s1706 = smul.addr %s1702, 32
        %s1707 = sadd.s32 %s1705, %s1706
        %s1708 = smul.addr %s1707, 4
        %s1709 = scalar_lea.vmem %s8, %s1708
      $region64: #{eblite4_forward.4} parent=59 // pred_fallthru
        _
    $region60: #{eblite4_forward.4} parent=5 // pred_fallthru
      _
  $region6: #{eblite4_forward.4} parent=0 // loop_footer
    %s18 = sadd.s32 1, %s14
  $region7: #{eblite4_forward.4} parent=0 // loop_footer_branch
    %13 = sbr.rel target = $region3
  $region8: #{eblite4_forward.4} parent=0 // loop_exit
    _

// kernel: eblite4_forward.3
$region0: #{eblite4_forward.3}
  #allocation0 [shape = 'u32[]', space=smem, size = 0x4, offset = 0x4, fixed_abs, tag = 'smem constant byte address 0x4 - core index']
  #allocation1 [shape = 'u32[72,128]{1,0:T(1,128)}', space=vmem, size = 0x9000, scoped, tag = 'internal scratch']
  %s0 = inlined_call_operand.vmem [shape: bf16[512,32], index: 0, kind: input, shape index: {}]
  %s1 = inlined_call_operand.vmem [shape: bf16[32,32], index: 1, kind: input, shape index: {}]
  %s2 = inlined_call_operand.vmem [shape: f32[1,32], index: 2, kind: input, shape index: {}]
  %s3 = inlined_call_operand.vmem [shape: bf16[512,32], index: 3, kind: output, shape index: {}]
  %s4 = sld [smem:[#allocation0]]
  $region22: #{eblite4_forward.3} parent=0
    _
  %s6 = ssub.s32 1, %s4
  %s7 = scalar_select 0, %s6, %s4
  // Predicated region
  $region2: #{eblite4_forward.3} parent=0 // pred_check
    _
  $region3: #{eblite4_forward.3} parent=0 // pred_check_branch
    %9 = sbr.rel (0) target = $region5
  $region4: #{eblite4_forward.3} parent=0 // pred_region
    _
  $region5: #{eblite4_forward.3} parent=0 // pred_fallthru
    _
  // Predicated region
  $region6: #{eblite4_forward.3} parent=0 // pred_check
    _
  $region7: #{eblite4_forward.3} parent=0 // pred_check_branch
    %11 = sbr.rel (0) target = $region9
  $region8: #{eblite4_forward.3} parent=0 // pred_region
    _
  $region9: #{eblite4_forward.3} parent=0 // pred_fallthru
    _
  // Predicated region
  $region10: #{eblite4_forward.3} parent=0 // pred_check
    _
  $region11: #{eblite4_forward.3} parent=0 // pred_check_branch
    %13 = sbr.rel (0) target = $region13
  $region12: #{eblite4_forward.3} parent=0 // pred_region
    _
  $region13: #{eblite4_forward.3} parent=0 // pred_fallthru
    _
  %v15 = vld [vmem:[%s0] sm:$0xf]
  %v16 = vld [vmem:[%s0 + $0x4] sm:$0xf]
  %v17 = vld [vmem:[%s0 + $0x8] sm:$0xf]
  %v18 = vld [vmem:[%s0 + $0xc] sm:$0xf]
  %v19 = vld [vmem:[%s0 + $0x10] sm:$0xf]
  %v20 = vld [vmem:[%s0 + $0x14] sm:$0xf]
  %v21 = vld [vmem:[%s0 + $0x18] sm:$0xf]
  %v22 = vld [vmem:[%s0 + $0x1c] sm:$0xf]
  %v23 = vld [vmem:[%s0 + $0x20] sm:$0xf]
  %v24 = vld [vmem:[%s0 + $0x24] sm:$0xf]
  %v25 = vld [vmem:[%s0 + $0x28] sm:$0xf]
  %v26 = vld [vmem:[%s0 + $0x2c] sm:$0xf]
  %v27 = vld [vmem:[%s0 + $0x30] sm:$0xf]
  %v28 = vld [vmem:[%s0 + $0x34] sm:$0xf]
  %v29 = vld [vmem:[%s0 + $0x38] sm:$0xf]
  %v30 = vld [vmem:[%s0 + $0x3c] sm:$0xf]
  %v31 = vld [vmem:[%s0 + $0x40] sm:$0xf]
  %v32 = vld [vmem:[%s0 + $0x44] sm:$0xf]
  %v33 = vld [vmem:[%s0 + $0x48] sm:$0xf]
  %v34 = vld [vmem:[%s0 + $0x4c] sm:$0xf]
  %v35 = vld [vmem:[%s0 + $0x50] sm:$0xf]
  %v36 = vld [vmem:[%s0 + $0x54] sm:$0xf]
  %v37 = vld [vmem:[%s0 + $0x58] sm:$0xf]
  %v38 = vld [vmem:[%s0 + $0x5c] sm:$0xf]
  %v39 = vld [vmem:[%s0 + $0x60] sm:$0xf]
  %v40 = vld [vmem:[%s0 + $0x64] sm:$0xf]
  %v41 = vld [vmem:[%s0 + $0x68] sm:$0xf]
  %v42 = vld [vmem:[%s0 + $0x6c] sm:$0xf]
  %v43 = vld [vmem:[%s0 + $0x70] sm:$0xf]
  %v44 = vld [vmem:[%s0 + $0x74] sm:$0xf]
  %v45 = vld [vmem:[%s0 + $0x78] sm:$0xf]
  %v46 = vld [vmem:[%s0 + $0x7c] sm:$0xf]
  %v47 = vld [vmem:[%s0 + $0x80] sm:$0xf]
  %v48 = vld [vmem:[%s0 + $0x84] sm:$0xf]
  %v49 = vld [vmem:[%s0 + $0x88] sm:$0xf]
  %v50 = vld [vmem:[%s0 + $0x8c] sm:$0xf]
  %v51 = vld [vmem:[%s0 + $0x90] sm:$0xf]
  %v52 = vld [vmem:[%s0 + $0x94] sm:$0xf]
  %v53 = vld [vmem:[%s0 + $0x98] sm:$0xf]
  %v54 = vld [vmem:[%s0 + $0x9c] sm:$0xf]
  %v55 = vld [vmem:[%s0 + $0xa0] sm:$0xf]
  %v56 = vld [vmem:[%s0 + $0xa4] sm:$0xf]
  %v57 = vld [vmem:[%s0 + $0xa8] sm:$0xf]
  %v58 = vld [vmem:[%s0 + $0xac] sm:$0xf]
  %v59 = vld [vmem:[%s0 + $0xb0] sm:$0xf]
  %v60 = vld [vmem:[%s0 + $0xb4] sm:$0xf]
  %v61 = vld [vmem:[%s0 + $0xb8] sm:$0xf]
  %v62 = vld [vmem:[%s0 + $0xbc] sm:$0xf]
  %v63 = vld [vmem:[%s0 + $0xc0] sm:$0xf]
  %v64 = vld [vmem:[%s0 + $0xc4] sm:$0xf]
  %v65 = vld [vmem:[%s0 + $0xc8] sm:$0xf]
  %v66 = vld [vmem:[%s0 + $0xcc] sm:$0xf]
  %v67 = vld [vmem:[%s0 + $0xd0] sm:$0xf]
  %v68 = vld [vmem:[%s0 + $0xd4] sm:$0xf]
  %v69 = vld [vmem:[%s0 + $0xd8] sm:$0xf]
  %v70 = vld [vmem:[%s0 + $0xdc] sm:$0xf]
  %v71 = vld [vmem:[%s0 + $0xe0] sm:$0xf]
  %v72 = vld [vmem:[%s0 + $0xe4] sm:$0xf]
  %v73 = vld [vmem:[%s0 + $0xe8] sm:$0xf]
  %v74 = vld [vmem:[%s0 + $0xec] sm:$0xf]
  %v75 = vld [vmem:[%s0 + $0xf0] sm:$0xf]
  %v76 = vld [vmem:[%s0 + $0xf4] sm:$0xf]
  %v77 = vld [vmem:[%s0 + $0xf8] sm:$0xf]
  %v78 = vld [vmem:[%s0 + $0xfc] sm:$0xf]
  %v79 = vld [vmem:[%s1] sm:$0xf]
  %v80 = vld [vmem:[%s1 + $0x4] sm:$0xf]
  %v81 = vld [vmem:[%s1 + $0x8] sm:$0xf]
  %v82 = vld [vmem:[%s1 + $0xc] sm:$0xf]
  %v83 = vld [vmem:[%s2] sm:$0x1]
  %v85 = vperm.slane %v83, 0
  %v151 = vunpack.c.l.b16 %v15
  %v152 = vunpack.c.l.b16 %v16
  %v153 = vunpack.c.l.b16 %v17
  %v154 = vunpack.c.l.b16 %v18
  %v155 = vunpack.c.l.b16 %v19
  %v156 = vunpack.c.l.b16 %v20
  %v157 = vunpack.c.l.b16 %v21
  %v158 = vunpack.c.l.b16 %v22
  %v159 = vunpack.c.l.b16 %v23
  %v160 = vunpack.c.l.b16 %v24
  %v161 = vunpack.c.l.b16 %v25
  %v162 = vunpack.c.l.b16 %v26
  %v163 = vunpack.c.l.b16 %v27
  %v164 = vunpack.c.l.b16 %v28
  %v165 = vunpack.c.l.b16 %v29
  %v166 = vunpack.c.l.b16 %v30
  %v167 = vunpack.c.l.b16 %v31
  %v168 = vunpack.c.l.b16 %v32
  %v169 = vunpack.c.l.b16 %v33
  %v170 = vunpack.c.l.b16 %v34
  %v171 = vunpack.c.l.b16 %v35
  %v172 = vunpack.c.l.b16 %v36
  %v173 = vunpack.c.l.b16 %v37
  %v174 = vunpack.c.l.b16 %v38
  %v175 = vunpack.c.l.b16 %v39
  %v176 = vunpack.c.l.b16 %v40
  %v177 = vunpack.c.l.b16 %v41
  %v178 = vunpack.c.l.b16 %v42
  %v179 = vunpack.c.l.b16 %v43
  %v180 = vunpack.c.l.b16 %v44
  %v181 = vunpack.c.l.b16 %v45
  %v182 = vunpack.c.l.b16 %v46
  %v183 = vunpack.c.l.b16 %v47
  %v184 = vunpack.c.l.b16 %v48
  %v185 = vunpack.c.l.b16 %v49
  %v186 = vunpack.c.l.b16 %v50
  %v187 = vunpack.c.l.b16 %v51
  %v188 = vunpack.c.l.b16 %v52
  %v189 = vunpack.c.l.b16 %v53
  %v190 = vunpack.c.l.b16 %v54
  %v191 = vunpack.c.l.b16 %v55
  %v192 = vunpack.c.l.b16 %v56
  %v193 = vunpack.c.l.b16 %v57
  %v194 = vunpack.c.l.b16 %v58
  %v195 = vunpack.c.l.b16 %v59
  %v196 = vunpack.c.l.b16 %v60
  %v197 = vunpack.c.l.b16 %v61
  %v198 = vunpack.c.l.b16 %v62
  %v199 = vunpack.c.l.b16 %v63
  %v200 = vunpack.c.l.b16 %v64
  %v201 = vunpack.c.l.b16 %v65
  %v202 = vunpack.c.l.b16 %v66
  %v203 = vunpack.c.l.b16 %v67
  %v204 = vunpack.c.l.b16 %v68
  %v205 = vunpack.c.l.b16 %v69
  %v206 = vunpack.c.l.b16 %v70
  %v207 = vunpack.c.l.b16 %v71
  %v208 = vunpack.c.l.b16 %v72
  %v209 = vunpack.c.l.b16 %v73
  %v210 = vunpack.c.l.b16 %v74
  %v211 = vunpack.c.l.b16 %v75
  %v212 = vunpack.c.l.b16 %v76
  %v213 = vunpack.c.l.b16 %v77
  %v214 = vunpack.c.l.b16 %v78
  %v215 = vpack.c.b16 %v152, %v151
  %v216 = vpack.c.b16 %v154, %v153
  %v217 = vpack.c.b16 %v156, %v155
  %v218 = vpack.c.b16 %v158, %v157
  %v219 = vpack.c.b16 %v160, %v159
  %v220 = vpack.c.b16 %v162, %v161
  %v221 = vpack.c.b16 %v164, %v163
  %v222 = vpack.c.b16 %v166, %v165
  %v223 = vpack.c.b16 %v168, %v167
  %v224 = vpack.c.b16 %v170, %v169
  %v225 = vpack.c.b16 %v172, %v171
  %v226 = vpack.c.b16 %v174, %v173
  %v227 = vpack.c.b16 %v176, %v175
  %v228 = vpack.c.b16 %v178, %v177
  %v229 = vpack.c.b16 %v180, %v179
  %v230 = vpack.c.b16 %v182, %v181
  %v231 = vpack.c.b16 %v184, %v183
  %v232 = vpack.c.b16 %v186, %v185
  %v233 = vpack.c.b16 %v188, %v187
  %v234 = vpack.c.b16 %v190, %v189
  %v235 = vpack.c.b16 %v192, %v191
  %v236 = vpack.c.b16 %v194, %v193
  %v237 = vpack.c.b16 %v196, %v195
  %v238 = vpack.c.b16 %v198, %v197
  %v239 = vpack.c.b16 %v200, %v199
  %v240 = vpack.c.b16 %v202, %v201
  %v241 = vpack.c.b16 %v204, %v203
  %v242 = vpack.c.b16 %v206, %v205
  %v243 = vpack.c.b16 %v208, %v207
  %v244 = vpack.c.b16 %v210, %v209
  %v245 = vpack.c.b16 %v212, %v211
  %v246 = vpack.c.b16 %v214, %v213
  %v251 = vunpack.c.l.b16 %v79
  %v252 = vunpack.c.l.b16 %v80
  %v253 = vunpack.c.l.b16 %v81
  %v254 = vunpack.c.l.b16 %v82
  %v255 = vpack.c.b16 %v252, %v251
  %v256 = vpack.c.b16 %v254, %v253
  %vm259 = vcmask 261120
  %v261 = vsel %vm259, %v215, 0
  %v264 = vsel %vm259, %v216, 0
  %v267 = vsel %vm259, %v217, 0
  %v270 = vsel %vm259, %v218, 0
  %v273 = vsel %vm259, %v219, 0
  %v276 = vsel %vm259, %v220, 0
  %v279 = vsel %vm259, %v221, 0
  %v282 = vsel %vm259, %v222, 0
  %v285 = vsel %vm259, %v223, 0
  %v288 = vsel %vm259, %v224, 0
  %v291 = vsel %vm259, %v225, 0
  %v294 = vsel %vm259, %v226, 0
  %v297 = vsel %vm259, %v227, 0
  %v300 = vsel %vm259, %v228, 0
  %v303 = vsel %vm259, %v229, 0
  %v306 = vsel %vm259, %v230, 0
  %v309 = vsel %vm259, %v231, 0
  %v312 = vsel %vm259, %v232, 0
  %v315 = vsel %vm259, %v233, 0
  %v318 = vsel %vm259, %v234, 0
  %v321 = vsel %vm259, %v235, 0
  %v324 = vsel %vm259, %v236, 0
  %v327 = vsel %vm259, %v237, 0
  %v330 = vsel %vm259, %v238, 0
  %v333 = vsel %vm259, %v239, 0
  %v336 = vsel %vm259, %v240, 0
  %v339 = vsel %vm259, %v241, 0
  %v342 = vsel %vm259, %v242, 0
  %v345 = vsel %vm259, %v243, 0
  %v348 = vsel %vm259, %v244, 0
  %v351 = vsel %vm259, %v245, 0
  %v354 = vsel %vm259, %v246, 0
  %356 = vmatpush.bf16.msra.mxu0 0
  %357 = vmatpush.bf16.msra.mxu0 0
  %358 = vmatpush.bf16.msra.mxu0 0
  %359 = vmatpush.bf16.msra.mxu0 0
  %360 = vmatpush.bf16.msra.mxu0 0
  %361 = vmatpush.bf16.msra.mxu0 0
  %362 = vmatpush.bf16.msra.mxu0 %v256
  %363 = vmatpush.bf16.msra.mxu0 %v255
  %364 = vmatmul.bf16.gmra.mxu0 %v261
  %v365 = vpop.f32.mrf.mxu0
  %v366 = vadd.f32 %v85, %v365
  %v367 = vpop.f32.mrf.mxu0
  %v368 = vadd.f32 %v85, %v367
  %369 = vmatmul.bf16.gmra.mxu0 %v264
  %v370 = vpop.f32.mrf.mxu0
  %v371 = vadd.f32 %v85, %v370
  %v372 = vpop.f32.mrf.mxu0
  %v373 = vadd.f32 %v85, %v372
  %374 = vmatmul.bf16.gmra.mxu0 %v267
  %v375 = vpop.f32.mrf.mxu0
  %v376 = vadd.f32 %v85, %v375
  %v377 = vpop.f32.mrf.mxu0
  %v378 = vadd.f32 %v85, %v377
  %379 = vmatmul.bf16.gmra.mxu0 %v270
  %v380 = vpop.f32.mrf.mxu0
  %v381 = vadd.f32 %v85, %v380
  %v382 = vpop.f32.mrf.mxu0
  %v383 = vadd.f32 %v85, %v382
  %384 = vmatmul.bf16.gmra.mxu0 %v273
  %v385 = vpop.f32.mrf.mxu0
  %v386 = vadd.f32 %v85, %v385
  %v387 = vpop.f32.mrf.mxu0
  %v388 = vadd.f32 %v85, %v387
  %389 = vmatmul.bf16.gmra.mxu0 %v276
  %v390 = vpop.f32.mrf.mxu0
  %v391 = vadd.f32 %v85, %v390
  %v392 = vpop.f32.mrf.mxu0
  %v393 = vadd.f32 %v85, %v392
  %394 = vmatmul.bf16.gmra.mxu0 %v279
  %v395 = vpop.f32.mrf.mxu0
  %v396 = vadd.f32 %v85, %v395
  %v397 = vpop.f32.mrf.mxu0
  %v398 = vadd.f32 %v85, %v397
  %399 = vmatmul.bf16.gmra.mxu0 %v282
  %v400 = vpop.f32.mrf.mxu0
  %v401 = vadd.f32 %v85, %v400
  %v402 = vpop.f32.mrf.mxu0
  %v403 = vadd.f32 %v85, %v402
  %404 = vmatmul.bf16.gmra.mxu0 %v285
  %v405 = vpop.f32.mrf.mxu0
  %v406 = vadd.f32 %v85, %v405
  %v407 = vpop.f32.mrf.mxu0
  %v408 = vadd.f32 %v85, %v407
  %409 = vmatmul.bf16.gmra.mxu0 %v288
  %v410 = vpop.f32.mrf.mxu0
  %v411 = vadd.f32 %v85, %v410
  %v412 = vpop.f32.mrf.mxu0
  %v413 = vadd.f32 %v85, %v412
  %414 = vmatmul.bf16.gmra.mxu0 %v291
  %v415 = vpop.f32.mrf.mxu0
  %v416 = vadd.f32 %v85, %v415
  %v417 = vpop.f32.mrf.mxu0
  %v418 = vadd.f32 %v85, %v417
  %419 = vmatmul.bf16.gmra.mxu0 %v294
  %v420 = vpop.f32.mrf.mxu0
  %v421 = vadd.f32 %v85, %v420
  %v422 = vpop.f32.mrf.mxu0
  %v423 = vadd.f32 %v85, %v422
  %424 = vmatmul.bf16.gmra.mxu0 %v297
  %v425 = vpop.f32.mrf.mxu0
  %v426 = vadd.f32 %v85, %v425
  %v427 = vpop.f32.mrf.mxu0
  %v428 = vadd.f32 %v85, %v427
  %429 = vmatmul.bf16.gmra.mxu0 %v300
  %v430 = vpop.f32.mrf.mxu0
  %v431 = vadd.f32 %v85, %v430
  %v432 = vpop.f32.mrf.mxu0
  %v433 = vadd.f32 %v85, %v432
  %434 = vmatmul.bf16.gmra.mxu0 %v303
  %v435 = vpop.f32.mrf.mxu0
  %v436 = vadd.f32 %v85, %v435
  %v437 = vpop.f32.mrf.mxu0
  %v438 = vadd.f32 %v85, %v437
  %439 = vmatmul.bf16.gmra.mxu0 %v306
  %v440 = vpop.f32.mrf.mxu0
  %v441 = vadd.f32 %v85, %v440
  %v442 = vpop.f32.mrf.mxu0
  %v443 = vadd.f32 %v85, %v442
  %444 = vmatmul.bf16.gmra.mxu0 %v309
  %v445 = vpop.f32.mrf.mxu0
  %v446 = vadd.f32 %v85, %v445
  %v447 = vpop.f32.mrf.mxu0
  %v448 = vadd.f32 %v85, %v447
  %449 = vmatmul.bf16.gmra.mxu0 %v312
  %v450 = vpop.f32.mrf.mxu0
  %v451 = vadd.f32 %v85, %v450
  %v452 = vpop.f32.mrf.mxu0
  %v453 = vadd.f32 %v85, %v452
  %454 = vmatmul.bf16.gmra.mxu0 %v315
  %v455 = vpop.f32.mrf.mxu0
  %v456 = vadd.f32 %v85, %v455
  %v457 = vpop.f32.mrf.mxu0
  %v458 = vadd.f32 %v85, %v457
  %459 = vmatmul.bf16.gmra.mxu0 %v318
  %v460 = vpop.f32.mrf.mxu0
  %v461 = vadd.f32 %v85, %v460
  %v462 = vpop.f32.mrf.mxu0
  %v463 = vadd.f32 %v85, %v462
  %464 = vmatmul.bf16.gmra.mxu0 %v321
  %v465 = vpop.f32.mrf.mxu0
  %v466 = vadd.f32 %v85, %v465
  %v467 = vpop.f32.mrf.mxu0
  %v468 = vadd.f32 %v85, %v467
  %469 = vmatmul.bf16.gmra.mxu0 %v324
  %v470 = vpop.f32.mrf.mxu0
  %v471 = vadd.f32 %v85, %v470
  %v472 = vpop.f32.mrf.mxu0
  %v473 = vadd.f32 %v85, %v472
  %474 = vmatmul.bf16.gmra.mxu0 %v327
  %v475 = vpop.f32.mrf.mxu0
  %v476 = vadd.f32 %v85, %v475
  %v477 = vpop.f32.mrf.mxu0
  %v478 = vadd.f32 %v85, %v477
  %479 = vmatmul.bf16.gmra.mxu0 %v330
  %v480 = vpop.f32.mrf.mxu0
  %v481 = vadd.f32 %v85, %v480
  %v482 = vpop.f32.mrf.mxu0
  %v483 = vadd.f32 %v85, %v482
  %484 = vmatmul.bf16.gmra.mxu0 %v333
  %v485 = vpop.f32.mrf.mxu0
  %v486 = vadd.f32 %v85, %v485
  %v487 = vpop.f32.mrf.mxu0
  %v488 = vadd.f32 %v85, %v487
  %489 = vmatmul.bf16.gmra.mxu0 %v336
  %v490 = vpop.f32.mrf.mxu0
  %v491 = vadd.f32 %v85, %v490
  %v492 = vpop.f32.mrf.mxu0
  %v493 = vadd.f32 %v85, %v492
  %494 = vmatmul.bf16.gmra.mxu0 %v339
  %v495 = vpop.f32.mrf.mxu0
  %v496 = vadd.f32 %v85, %v495
  %v497 = vpop.f32.mrf.mxu0
  %v498 = vadd.f32 %v85, %v497
  %499 = vmatmul.bf16.gmra.mxu0 %v342
  %v500 = vpop.f32.mrf.mxu0
  %v501 = vadd.f32 %v85, %v500
  %v502 = vpop.f32.mrf.mxu0
  %v503 = vadd.f32 %v85, %v502
  %504 = vmatmul.bf16.gmra.mxu0 %v345
  %v505 = vpop.f32.mrf.mxu0
  %v506 = vadd.f32 %v85, %v505
  %v507 = vpop.f32.mrf.mxu0
  %v508 = vadd.f32 %v85, %v507
  %509 = vmatmul.bf16.gmra.mxu0 %v348
  %v510 = vpop.f32.mrf.mxu0
  %v511 = vadd.f32 %v85, %v510
  %v512 = vpop.f32.mrf.mxu0
  %v513 = vadd.f32 %v85, %v512
  %514 = vmatmul.bf16.gmra.mxu0 %v351
  %v515 = vpop.f32.mrf.mxu0
  %v516 = vadd.f32 %v85, %v515
  %v517 = vpop.f32.mrf.mxu0
  %v518 = vadd.f32 %v85, %v517
  %519 = vmatmul.bf16.gmra.mxu0 %v354
  %v520 = vpop.f32.mrf.mxu0
  %v521 = vadd.f32 %v85, %v520
  %v522 = vpop.f32.mrf.mxu0
  %v523 = vadd.f32 %v85, %v522
  %524 = vdwg.mxu0
  %v525 = vmax.f32 %v366, 0.0
  %v526 = vmax.f32 %v368, 0.0
  %v527 = vmax.f32 %v371, 0.0
  %v528 = vmax.f32 %v373, 0.0
  %v529 = vmax.f32 %v376, 0.0
  %v530 = vmax.f32 %v378, 0.0
  %v531 = vmax.f32 %v381, 0.0
  %v532 = vmax.f32 %v383, 0.0
  %v533 = vmax.f32 %v386, 0.0
  %v534 = vmax.f32 %v388, 0.0
  %v535 = vmax.f32 %v391, 0.0
  %v536 = vmax.f32 %v393, 0.0
  %v537 = vmax.f32 %v396, 0.0
  %v538 = vmax.f32 %v398, 0.0
  %v539 = vmax.f32 %v401, 0.0
  %v540 = vmax.f32 %v403, 0.0
  %v541 = vmax.f32 %v406, 0.0
  %v542 = vmax.f32 %v408, 0.0
  %v543 = vmax.f32 %v411, 0.0
  %v544 = vmax.f32 %v413, 0.0
  %v545 = vmax.f32 %v416, 0.0
  %v546 = vmax.f32 %v418, 0.0
  %v547 = vmax.f32 %v421, 0.0
  %v548 = vmax.f32 %v423, 0.0
  %v549 = vmax.f32 %v426, 0.0
  %v550 = vmax.f32 %v428, 0.0
  %v551 = vmax.f32 %v431, 0.0
  %v552 = vmax.f32 %v433, 0.0
  %v553 = vmax.f32 %v436, 0.0
  %v554 = vmax.f32 %v438, 0.0
  %v555 = vmax.f32 %v441, 0.0
  %v556 = vmax.f32 %v443, 0.0
  %v557 = vmax.f32 %v446, 0.0
  %v558 = vmax.f32 %v448, 0.0
  %v559 = vmax.f32 %v451, 0.0
  %v560 = vmax.f32 %v453, 0.0
  %v561 = vmax.f32 %v456, 0.0
  %v562 = vmax.f32 %v458, 0.0
  %v563 = vmax.f32 %v461, 0.0
  %v564 = vmax.f32 %v463, 0.0
  %v565 = vmax.f32 %v466, 0.0
  %v566 = vmax.f32 %v468, 0.0
  %v567 = vmax.f32 %v471, 0.0
  %v568 = vmax.f32 %v473, 0.0
  %v569 = vmax.f32 %v476, 0.0
  %v570 = vmax.f32 %v478, 0.0
  %v571 = vmax.f32 %v481, 0.0
  %v572 = vmax.f32 %v483, 0.0
  %v573 = vmax.f32 %v486, 0.0
  %v574 = vmax.f32 %v488, 0.0
  %v575 = vmax.f32 %v491, 0.0
  %v576 = vmax.f32 %v493, 0.0
  %v577 = vmax.f32 %v496, 0.0
  %v578 = vmax.f32 %v498, 0.0
  %v579 = vmax.f32 %v501, 0.0
  %v580 = vmax.f32 %v503, 0.0
  %v581 = vmax.f32 %v506, 0.0
  %v582 = vmax.f32 %v508, 0.0
  %v583 = vmax.f32 %v511, 0.0
  %v584 = vmax.f32 %v513, 0.0
  %v585 = vmax.f32 %v516, 0.0
  %v586 = vmax.f32 %v518, 0.0
  %v587 = vmax.f32 %v521, 0.0
  %v588 = vmax.f32 %v523, 0.0
  %v589 = vmin.f32 %v525, 6.0
  %v590 = vmin.f32 %v526, 6.0
  %v591 = vmin.f32 %v527, 6.0
  %v592 = vmin.f32 %v528, 6.0
  %v593 = vmin.f32 %v529, 6.0
  %v594 = vmin.f32 %v530, 6.0
  %v595 = vmin.f32 %v531, 6.0
  %v596 = vmin.f32 %v532, 6.0
  %v597 = vmin.f32 %v533, 6.0
  %v598 = vmin.f32 %v534, 6.0
  %v599 = vmin.f32 %v535, 6.0
  %v600 = vmin.f32 %v536, 6.0
  %v601 = vmin.f32 %v537, 6.0
  %v602 = vmin.f32 %v538, 6.0
  %v603 = vmin.f32 %v539, 6.0
  %v604 = vmin.f32 %v540, 6.0
  %v605 = vmin.f32 %v541, 6.0
  %v606 = vmin.f32 %v542, 6.0
  %v607 = vmin.f32 %v543, 6.0
  %v608 = vmin.f32 %v544, 6.0
  %v609 = vmin.f32 %v545, 6.0
  %v610 = vmin.f32 %v546, 6.0
  %v611 = vmin.f32 %v547, 6.0
  %v612 = vmin.f32 %v548, 6.0
  %v613 = vmin.f32 %v549, 6.0
  %v614 = vmin.f32 %v550, 6.0
  %v615 = vmin.f32 %v551, 6.0
  %v616 = vmin.f32 %v552, 6.0
  %v617 = vmin.f32 %v553, 6.0
  %v618 = vmin.f32 %v554, 6.0
  %v619 = vmin.f32 %v555, 6.0
  %v620 = vmin.f32 %v556, 6.0
  %v621 = vmin.f32 %v557, 6.0
  %v622 = vmin.f32 %v558, 6.0
  %v623 = vmin.f32 %v559, 6.0
  %v624 = vmin.f32 %v560, 6.0
  %v625 = vmin.f32 %v561, 6.0
  %v626 = vmin.f32 %v562, 6.0
  %v627 = vmin.f32 %v563, 6.0
  %v628 = vmin.f32 %v564, 6.0
  %v629 = vmin.f32 %v565, 6.0
  %v630 = vmin.f32 %v566, 6.0
  %v631 = vmin.f32 %v567, 6.0
  %v632 = vmin.f32 %v568, 6.0
  %v633 = vmin.f32 %v569, 6.0
  %v634 = vmin.f32 %v570, 6.0
  %v635 = vmin.f32 %v571, 6.0
  %v636 = vmin.f32 %v572, 6.0
  %v637 = vmin.f32 %v573, 6.0
  %v638 = vmin.f32 %v574, 6.0
  %v639 = vmin.f32 %v575, 6.0
  %v640 = vmin.f32 %v576, 6.0
  %v641 = vmin.f32 %v577, 6.0
  %v642 = vmin.f32 %v578, 6.0
  %v643 = vmin.f32 %v579, 6.0
  %v644 = vmin.f32 %v580, 6.0
  %v645 = vmin.f32 %v581, 6.0
  %v646 = vmin.f32 %v582, 6.0
  %v647 = vmin.f32 %v583, 6.0
  %v648 = vmin.f32 %v584, 6.0
  %v649 = vmin.f32 %v585, 6.0
  %v650 = vmin.f32 %v586, 6.0
  %v651 = vmin.f32 %v587, 6.0
  %v652 = vmin.f32 %v588, 6.0
  %v653 = vpack.c.bf16 %v589, %v589
  %v654 = vpack.c.bf16 %v590, %v590
  %v655 = vpack.c.bf16 %v591, %v591
  %v656 = vpack.c.bf16 %v592, %v592
  %v657 = vpack.c.bf16 %v593, %v593
  %v658 = vpack.c.bf16 %v594, %v594
  %v659 = vpack.c.bf16 %v595, %v595
  %v660 = vpack.c.bf16 %v596, %v596
  %v661 = vpack.c.bf16 %v597, %v597
  %v662 = vpack.c.bf16 %v598, %v598
  %v663 = vpack.c.bf16 %v599, %v599
  %v664 = vpack.c.bf16 %v600, %v600
  %v665 = vpack.c.bf16 %v601, %v601
  %v666 = vpack.c.bf16 %v602, %v602
  %v667 = vpack.c.bf16 %v603, %v603
  %v668 = vpack.c.bf16 %v604, %v604
  %v669 = vpack.c.bf16 %v605, %v605
  %v670 = vpack.c.bf16 %v606, %v606
  %v671 = vpack.c.bf16 %v607, %v607
  %v672 = vpack.c.bf16 %v608, %v608
  %v673 = vpack.c.bf16 %v609, %v609
  %v674 = vpack.c.bf16 %v610, %v610
  %v675 = vpack.c.bf16 %v611, %v611
  %v676 = vpack.c.bf16 %v612, %v612
  %v677 = vpack.c.bf16 %v613, %v613
  %v678 = vpack.c.bf16 %v614, %v614
  %v679 = vpack.c.bf16 %v615, %v615
  %v680 = vpack.c.bf16 %v616, %v616
  %v681 = vpack.c.bf16 %v617, %v617
  %v682 = vpack.c.bf16 %v618, %v618
  %v683 = vpack.c.bf16 %v619, %v619
  %v684 = vpack.c.bf16 %v620, %v620
  %v685 = vpack.c.bf16 %v621, %v621
  %v686 = vpack.c.bf16 %v622, %v622
  %v687 = vpack.c.bf16 %v623, %v623
  %v688 = vpack.c.bf16 %v624, %v624
  %v689 = vpack.c.bf16 %v625, %v625
  %v690 = vpack.c.bf16 %v626, %v626
  %v691 = vpack.c.bf16 %v627, %v627
  %v692 = vpack.c.bf16 %v628, %v628
  %v693 = vpack.c.bf16 %v629, %v629
  %v694 = vpack.c.bf16 %v630, %v630
  %v695 = vpack.c.bf16 %v631, %v631
  %v696 = vpack.c.bf16 %v632, %v632
  %v697 = vpack.c.bf16 %v633, %v633
  %v698 = vpack.c.bf16 %v634, %v634
  %v699 = vpack.c.bf16 %v635, %v635
  %v700 = vpack.c.bf16 %v636, %v636
  %v701 = vpack.c.bf16 %v637, %v637
  %v702 = vpack.c.bf16 %v638, %v638
  %v703 = vpack.c.bf16 %v639, %v639
  %v704 = vpack.c.bf16 %v640, %v640
  %v705 = vpack.c.bf16 %v641, %v641
  %v706 = vpack.c.bf16 %v642, %v642
  %v707 = vpack.c.bf16 %v643, %v643
  %v708 = vpack.c.bf16 %v644, %v644
  %v709 = vpack.c.bf16 %v645, %v645
  %v710 = vpack.c.bf16 %v646, %v646
  %v711 = vpack.c.bf16 %v647, %v647
  %v712 = vpack.c.bf16 %v648, %v648
  %v713 = vpack.c.bf16 %v649, %v649
  %v714 = vpack.c.bf16 %v650, %v650
  %v715 = vpack.c.bf16 %v651, %v651
  %v716 = vpack.c.bf16 %v652, %v652
  %vm717 = vcmask 257024
  %718 = vst.msk [vmem:[%s3] sm:$0xf] %vm717, %v653
  %719 = vst.msk [vmem:[%s3 + $0x4] sm:$0xf] %vm717, %v654
  %720 = vst.msk [vmem:[%s3 + $0x8] sm:$0xf] %vm717, %v655
  %721 = vst.msk [vmem:[%s3 + $0xc] sm:$0xf] %vm717, %v656
  %722 = vst.msk [vmem:[%s3 + $0x10] sm:$0xf] %vm717, %v657
  %723 = vst.msk [vmem:[%s3 + $0x14] sm:$0xf] %vm717, %v658
  %724 = vst.msk [vmem:[%s3 + $0x18] sm:$0xf] %vm717, %v659
  %725 = vst.msk [vmem:[%s3 + $0x1c] sm:$0xf] %vm717, %v660
  %726 = vst.msk [vmem:[%s3 + $0x20] sm:$0xf] %vm717, %v661
  %727 = vst.msk [vmem:[%s3 + $0x24] sm:$0xf] %vm717, %v662
  %728 = vst.msk [vmem:[%s3 + $0x28] sm:$0xf] %vm717, %v663
  %729 = vst.msk [vmem:[%s3 + $0x2c] sm:$0xf] %vm717, %v664
  %730 = vst.msk [vmem:[%s3 + $0x30] sm:$0xf] %vm717, %v665
  %731 = vst.msk [vmem:[%s3 + $0x34] sm:$0xf] %vm717, %v666
  %732 = vst.msk [vmem:[%s3 + $0x38] sm:$0xf] %vm717, %v667
  %733 = vst.msk [vmem:[%s3 + $0x3c] sm:$0xf] %vm717, %v668
  %734 = vst.msk [vmem:[%s3 + $0x40] sm:$0xf] %vm717, %v669
  %735 = vst.msk [vmem:[%s3 + $0x44] sm:$0xf] %vm717, %v670
  %736 = vst.msk [vmem:[%s3 + $0x48] sm:$0xf] %vm717, %v671
  %737 = vst.msk [vmem:[%s3 + $0x4c] sm:$0xf] %vm717, %v672
  %738 = vst.msk [vmem:[%s3 + $0x50] sm:$0xf] %vm717, %v673
  %739 = vst.msk [vmem:[%s3 + $0x54] sm:$0xf] %vm717, %v674
  %740 = vst.msk [vmem:[%s3 + $0x58] sm:$0xf] %vm717, %v675
  %741 = vst.msk [vmem:[%s3 + $0x5c] sm:$0xf] %vm717, %v676
  %742 = vst.msk [vmem:[%s3 + $0x60] sm:$0xf] %vm717, %v677
  %743 = vst.msk [vmem:[%s3 + $0x64] sm:$0xf] %vm717, %v678
  %744 = vst.msk [vmem:[%s3 + $0x68] sm:$0xf] %vm717, %v679
  %745 = vst.msk [vmem:[%s3 + $0x6c] sm:$0xf] %vm717, %v680
  %746 = vst.msk [vmem:[%s3 + $0x70] sm:$0xf] %vm717, %v681
  %747 = vst.msk [vmem:[%s3 + $0x74] sm:$0xf] %vm717, %v682
  %748 = vst.msk [vmem:[%s3 + $0x78] sm:$0xf] %vm717, %v683
  %749 = vst.msk [vmem:[%s3 + $0x7c] sm:$0xf] %vm717, %v684
  %750 = vst.msk [vmem:[%s3 + $0x80] sm:$0xf] %vm717, %v685
  %751 = vst.msk [vmem:[%s3 + $0x84] sm:$0xf] %vm717, %v686
  %752 = vst.msk [vmem:[%s3 + $0x88] sm:$0xf] %vm717, %v687
  %753 = vst.msk [vmem:[%s3 + $0x8c] sm:$0xf] %vm717, %v688
  %754 = vst.msk [vmem:[%s3 + $0x90] sm:$0xf] %vm717, %v689
  %755 = vst.msk [vmem:[%s3 + $0x94] sm:$0xf] %vm717, %v690
  %756 = vst.msk [vmem:[%s3 + $0x98] sm:$0xf] %vm717, %v691
  %757 = vst.msk [vmem:[%s3 + $0x9c] sm:$0xf] %vm717, %v692
  %758 = vst.msk [vmem:[%s3 + $0xa0] sm:$0xf] %vm717, %v693
  %759 = vst.msk [vmem:[%s3 + $0xa4] sm:$0xf] %vm717, %v694
  %760 = vst.msk [vmem:[%s3 + $0xa8] sm:$0xf] %vm717, %v695
  %761 = vst.msk [vmem:[%s3 + $0xac] sm:$0xf] %vm717, %v696
  %762 = vst.msk [vmem:[%s3 + $0xb0] sm:$0xf] %vm717, %v697
  %763 = vst.msk [vmem:[%s3 + $0xb4] sm:$0xf] %vm717, %v698
  %764 = vst.msk [vmem:[%s3 + $0xb8] sm:$0xf] %vm717, %v699
  %765 = vst.msk [vmem:[%s3 + $0xbc] sm:$0xf] %vm717, %v700
  %766 = vst.msk [vmem:[%s3 + $0xc0] sm:$0xf] %vm717, %v701
  %767 = vst.msk [vmem:[%s3 + $0xc4] sm:$0xf] %vm717, %v702
  %768 = vst.msk [vmem:[%s3 + $0xc8] sm:$0xf] %vm717, %v703
  %769 = vst.msk [vmem:[%s3 + $0xcc] sm:$0xf] %vm717, %v704
  %770 = vst.msk [vmem:[%s3 + $0xd0] sm:$0xf] %vm717, %v705
  %771 = vst.msk [vmem:[%s3 + $0xd4] sm:$0xf] %vm717, %v706
  %772 = vst.msk [vmem:[%s3 + $0xd8] sm:$0xf] %vm717, %v707
  %773 = vst.msk [vmem:[%s3 + $0xdc] sm:$0xf] %vm717, %v708
  %774 = vst.msk [vmem:[%s3 + $0xe0] sm:$0xf] %vm717, %v709
  %775 = vst.msk [vmem:[%s3 + $0xe4] sm:$0xf] %vm717, %v710
  %776 = vst.msk [vmem:[%s3 + $0xe8] sm:$0xf] %vm717, %v711
  %777 = vst.msk [vmem:[%s3 + $0xec] sm:$0xf] %vm717, %v712
  %778 = vst.msk [vmem:[%s3 + $0xf0] sm:$0xf] %vm717, %v713
  %779 = vst.msk [vmem:[%s3 + $0xf4] sm:$0xf] %vm717, %v714
  %780 = vst.msk [vmem:[%s3 + $0xf8] sm:$0xf] %vm717, %v715
  %781 = vst.msk [vmem:[%s3 + $0xfc] sm:$0xf] %vm717, %v716
  // Predicated region
  $region14: #{eblite4_forward.3} parent=0 // pred_check
    _
  $region15: #{eblite4_forward.3} parent=0 // pred_check_branch
    %783 = sbr.rel (0) target = $region17
  $region16: #{eblite4_forward.3} parent=0 // pred_region
    _
  $region17: #{eblite4_forward.3} parent=0 // pred_fallthru
    _
  // Predicated region
  $region18: #{eblite4_forward.3} parent=0 // pred_check
    _
  $region19: #{eblite4_forward.3} parent=0 // pred_check_branch
    %785 = sbr.rel (0) target = $region21
  $region20: #{eblite4_forward.3} parent=0 // pred_region
    _
  $region21: #{eblite4_forward.3} parent=0 // pred_fallthru
    _

</llo_original>
